<compile_context>
chip_gen: v7x
topology: tpu7x:2x2x1
jax: 0.10.0
libtpu: 0.0.40
codegen_flags: <defaults>
</compile_context>

<pallas_src>
import functools

import jax
import jax.numpy as jnp
from jax.experimental import pallas as pl
from jax.experimental.pallas import tpu as pltpu

GS = 128       # lane stride of each GRU gate slot (vreg-aligned gate slices)
BP = 8         # padded batch rows (f32 sublane tile)
CP = 8         # padded input-channel rows for the encoder W_ih slab region
HEAD_W = 32    # lane width of the packed head/latent slab
RES_W = 8      # lane width of the padded linear2 (result) block
VMEM = pl.BlockSpec(memory_space=pltpu.MemorySpace.VMEM)


def _rup8(n):
    return (n + 7) // 8 * 8


def _head_offsets(He, Hd, Z):
    """Row offsets of each region inside the packed head slab (static ints)."""
    regions = (("mu_f", _rup8(He)), ("mu_b", _rup8(He)),
               ("var_f", _rup8(He)), ("var_b", _rup8(He)),
               ("dz", _rup8(Z)), ("w1", _rup8(Hd)),
               ("w2", _rup8(32)), ("bias", 8))
    offs, r = {}, 0
    for name, rows in regions:
        offs[name] = r
        r += rows
    offs["total"] = r
    return offs


# ----------------------------------------------------------------------------
# Fused VCD forward kernel (single pallas_call, no grid, no scratch)
# ----------------------------------------------------------------------------
def _vcd_kernel(x_ref, eps_ref, enc_f_ref, enc_b_ref, dec_ref, head_ref,
                out_ref, *, T, He, Hd, Z, train):
    x = x_ref[...]                                           # (T*BP, CP)

    def gru_scan(x_in, slab_ref, d_pad, H, reverse):
        """Single-layer GRU over T steps, h0 = 0.  x_in: (T*BP, d_in)."""
        d_in = x_in.shape[1]
        wih = slab_ref[0:d_in, :]                            # (d_in, 3*GS)
        whh = slab_ref[d_pad:d_pad + H, :]                   # (H, 3*GS)
        boff = d_pad + _rup8(H)
        bias_blk = slab_ref[boff:boff + 8, :]                # (8, 3*GS)
        b_gi = bias_blk[0:1, :]                              # b_ih (+ b_hh for r,z)
        # Hoisted (1,H) -> (BP,H) broadcast of the n-gate hidden bias.
        bhn = jnp.broadcast_to(bias_blk[1:2, 2 * GS:2 * GS + H], (BP, H))

        # Hoisted input->hidden matmul for all gates and all time steps:
        # one big MXU op off the serial recurrence.
        gi = jnp.dot(x_in, wih, preferred_element_type=jnp.float32) + b_gi

        outs = [None] * T
        steps = range(T - 1, -1, -1) if reverse else range(T)
        h = None
        for idx, t in enumerate(steps):       # fully unrolled: T small & static
            lo = t * BP
            gi_r = gi[lo:lo + BP, 0:H]
            gi_z = gi[lo:lo + BP, GS:GS + H]
            gi_n = gi[lo:lo + BP, 2 * GS:2 * GS + H]
            if idx == 0:
                # Peeled first step: h == 0, so every h @ W_hh term vanishes.
                r = jax.nn.sigmoid(gi_r)
                zg = jax.nn.sigmoid(gi_z)
                n = jnp.tanh(gi_n + r * bhn)
                h = n - zg * n
            else:
                # One fused matmul per step; gate slots are 128-lane aligned.
                gh = jnp.dot(h, whh, preferred_element_type=jnp.float32)
                r = jax.nn.sigmoid(gi_r + gh[:, 0:H])
                zg = jax.nn.sigmoid(gi_z + gh[:, GS:GS + H])
                n = jnp.tanh(gi_n + r * (gh[:, 2 * GS:2 * GS + H] + bhn))
                h = zg * (h - n) + n          # == (1 - z) * n + z * h
            outs[t] = h
        return jnp.concatenate(outs, axis=0)  # (T*BP, H), time-major

    # --- bidirectional encoder (backward direction reversed in-kernel) ------
    en_f = gru_scan(x, enc_f_ref, CP, He, reverse=False)
    en_b = gru_scan(x, enc_b_ref, CP, He, reverse=True)

    # --- latent path ---------------------------------------------------------
    o = _head_offsets(He, Hd, Z)
    bias = head_ref[o["bias"]:o["bias"] + 8, :]              # (8, HEAD_W)
    wmu_f = head_ref[o["mu_f"]:o["mu_f"] + He, 0:Z]
    wmu_b = head_ref[o["mu_b"]:o["mu_b"] + He, 0:Z]
    wvar_f = head_ref[o["var_f"]:o["var_f"] + He, 0:Z]
    wvar_b = head_ref[o["var_b"]:o["var_b"] + He, 0:Z]
    wdz = head_ref[o["dz"]:o["dz"] + Z, 0:Hd]
    w1 = head_ref[o["w1"]:o["w1"] + Hd, :]                   # (Hd, 32)
    w2 = head_ref[o["w2"]:o["w2"] + 32, 0:RES_W]             # result in col 0

    # en_out = [en_f | en_b] handled as a row-split matmul; separate mu/logvar
    # heads avoid intra-vreg lane slicing of a fused [mu|logvar] result.
    mu = (jnp.dot(en_f, wmu_f, preferred_element_type=jnp.float32)
          + jnp.dot(en_b, wmu_b, preferred_element_type=jnp.float32)
          + bias[0:1, 0:Z])
    logvar = (jnp.dot(en_f, wvar_f, preferred_element_type=jnp.float32)
              + jnp.dot(en_b, wvar_b, preferred_element_type=jnp.float32)
              + bias[1:2, 0:Z])

    if train:
        z = eps_ref[...] * jnp.exp(0.5 * logvar) + mu        # reparameterize
    else:
        z = mu                                               # reparameterize_test

    dein = (jnp.dot(z, wdz, preferred_element_type=jnp.float32)
            + bias[2:3, 0:Hd])                               # (N, Hd)

    # --- decoder GRU + head: linear1 -> relu -> linear2 ----------------------
    de_out = gru_scan(dein, dec_ref, _rup8(Hd), Hd, reverse=False)
    h1 = jnp.maximum(
        jnp.dot(de_out, w1, preferred_element_type=jnp.float32) + bias[3:4, :],
        0.0)                                                 # (N, 32)
    res = (jnp.dot(h1, w2, preferred_element_type=jnp.float32)
           + bias[4:5, 0:RES_W])                             # (N, 8), res in col 0

    # Single merged output slab: [mu | logvar | res-block].
    out_ref[...] = jnp.concatenate([mu, logvar, res], axis=1)   # (N, 2Z + 8)


# ----------------------------------------------------------------------------
# Parameter construction (deterministic, PyTorch-default-style uniform init)
# GRU weights per-gate: w_ih (3, D, H), w_hh (3, H, H); gate order (r, z, n).
# ----------------------------------------------------------------------------
def init_params(key, in_channels, z_dim, enc_hidden, dec_hidden):
    keys = iter(jax.random.split(key, 64))

    def u(shape, scale):
        return jax.random.uniform(next(keys), shape, jnp.float32, -scale, scale)

    def gru_params(d_in, h):
        s = 1.0 / (h ** 0.5)
        return {"w_ih": u((3, d_in, h), s), "w_hh": u((3, h, h), s),
                "b_ih": u((3, 1, h), s), "b_hh": u((3, 1, h), s)}

    def linear_params(d_in, d_out):
        s = 1.0 / (d_in ** 0.5)
        return u((d_in, d_out), s), u((1, d_out), s)

    p = {}
    p["enc_fwd"] = gru_params(in_channels, enc_hidden)
    p["enc_bwd"] = gru_params(in_channels, enc_hidden)
    p["dec"] = gru_params(dec_hidden, dec_hidden)
    p["w_mu"], p["b_mu"] = linear_params(2 * enc_hidden, z_dim)
    p["w_var"], p["b_var"] = linear_params(2 * enc_hidden, z_dim)
    p["w_dz"], p["b_dz"] = linear_params(z_dim, dec_hidden)
    p["w1"], p["b1"] = linear_params(dec_hidden, 32)
    p["w2"], p["b2"] = linear_params(32, 1)
    return p


# ----------------------------------------------------------------------------
# One-time parameter packing into 4 DMA-friendly slabs (done OUTSIDE the
# jitted forward, so there is zero per-call layout glue for the weights).
# ----------------------------------------------------------------------------
def pack_params(params, in_channels):
    f32 = jnp.float32
    He = params["enc_fwd"]["w_hh"].shape[-1]
    Hd = params["dec"]["w_hh"].shape[-1]
    Z = params["w_mu"].shape[-1]
    assert HEAD_W >= max(Z, Hd, 32, RES_W)

    def pack_gru(g, d_pad):
        D, H = g["w_ih"].shape[1], g["w_ih"].shape[2]
        wih = jnp.zeros((d_pad, 3 * GS), f32)
        whh = jnp.zeros((_rup8(H), 3 * GS), f32)
        bias = jnp.zeros((8, 3 * GS), f32)
        for gidx in range(3):
            sl = slice(gidx * GS, gidx * GS + H)
            wih = wih.at[:D, sl].set(g["w_ih"][gidx])
            whh = whh.at[:H, sl].set(g["w_hh"][gidx])
            b = g["b_ih"][gidx, 0]
            if gidx < 2:                  # fold hidden bias into gi for r, z
                b = b + g["b_hh"][gidx, 0]
            bias = bias.at[0, sl].set(b)
        # n-gate hidden bias stays separate (scaled by r each step).
        bias = bias.at[1, 2 * GS:2 * GS + H].set(g["b_hh"][2, 0])
        return jnp.concatenate([wih, whh, bias], axis=0)

    def blk(w, rows):
        b = jnp.zeros((rows, HEAD_W), f32)
        return b.at[:w.shape[0], :w.shape[1]].set(w)

    bias = jnp.zeros((8, HEAD_W), f32)
    bias = bias.at[0, :Z].set(params["b_mu"][0])
    bias = bias.at[1, :Z].set(params["b_var"][0])
    bias = bias.at[2, :Hd].set(params["b_dz"][0])
    bias = bias.at[3, :32].set(params["b1"][0])
    bias = bias.at[4, :1].set(params["b2"][0])
    head = jnp.concatenate([
        blk(params["w_mu"][:He], _rup8(He)),    # mu_f
        blk(params["w_mu"][He:], _rup8(He)),    # mu_b
        blk(params["w_var"][:He], _rup8(He)),   # var_f
        blk(params["w_var"][He:], _rup8(He)),   # var_b
        blk(params["w_dz"], _rup8(Z)),          # dz
        blk(params["w1"], _rup8(Hd)),           # w1
        blk(params["w2"], _rup8(32)),           # w2 (padded to RES_W cols)
        bias,
    ], axis=0)

    packed = {"enc_f": pack_gru(params["enc_fwd"], CP),
              "enc_b": pack_gru(params["enc_bwd"], CP),
              "dec": pack_gru(params["dec"], _rup8(Hd)),
              "head": head}
    dims = {"in_channels": in_channels, "He": He, "Hd": Hd, "Z": Z}
    return packed, dims


def _vcd_pallas_call(packed, x2d, eps, *, T, He, Hd, Z, train):
    N = T * BP
    kernel = functools.partial(_vcd_kernel, T=T, He=He, Hd=Hd, Z=Z, train=train)
    return pl.pallas_call(
        kernel,
        out_shape=jax.ShapeDtypeStruct((N, 2 * Z + RES_W), jnp.float32),
        in_specs=[VMEM] * 6,
        out_specs=VMEM,
    )(x2d, eps, packed["enc_f"], packed["enc_b"], packed["dec"], packed["head"])


# ----------------------------------------------------------------------------
# Full VCD forward (wrapper: minimal layout glue only)
# ----------------------------------------------------------------------------
def vcd_forward(packed, x_bct, *, dims, train=True, key=None):
    # x_bct: (B, in_channels, T) -- same layout the PyTorch module receives.
    B, C, T = x_bct.shape
    He, Hd, Z = dims["He"], dims["Hd"], dims["Z"]

    # Time-major, batch padded to the f32 sublane tile (BP=8) so every
    # per-step row slice in the kernel is tile aligned; channels padded to CP.
    x_t = jnp.transpose(x_bct.astype(jnp.float32), (2, 0, 1))        # (T, B, C)
    x_p = jnp.zeros((T, BP, CP), jnp.float32).at[:, :B, :C].set(x_t)
    x2d = x_p.reshape(T * BP, CP)

    if train:
        assert key is not None
        eps = jax.random.normal(key, (T * BP, Z), dtype=jnp.float32)
    else:
        eps = jnp.zeros((T * BP, Z), jnp.float32)   # unused: z = mu exactly

    out = _vcd_pallas_call(packed, x2d, eps, T=T, He=He, Hd=Hd, Z=Z, train=train)

    out = out.reshape(T, BP, 2 * Z + RES_W)[:, :B]   # strip batch padding
    out = jnp.transpose(out, (1, 0, 2))              # (B, T, 2Z+8)
    z_mu = out[..., 0:Z]
    z_var = out[..., Z:2 * Z]
    result = out[..., 2 * Z:2 * Z + 1]
    return result, z_mu, z_var


if __name__ == "__main__":
    # Small, module-consistent shapes:
    #   batch=2, in_channels=4, seq_len=8, encoder_hidden=16,
    #   decoder_hidden=16, z_dim=8, p=0.1 (dropout identity)
    B, C, T = 2, 4, 8
    Z_DIM, ENC_H, DEC_H = 8, 16, 16

    root = jax.random.PRNGKey(0)
    k_param, k_x, k_eps = jax.random.split(root, 3)

    params = init_params(k_param, C, Z_DIM, ENC_H, DEC_H)
    packed, dims = pack_params(params, C)            # once, outside jit
    x = jax.random.normal(k_x, (B, C, T), dtype=jnp.float32)

    fwd = jax.jit(functools.partial(vcd_forward, dims=dims, train=True))
    result, z_mu, z_var = fwd(packed, x, key=k_eps)
    jax.block_until_ready((result, z_mu, z_var))

    assert result.shape == (B, T, 1)
    assert z_mu.shape == (B, T, Z_DIM)
    assert z_var.shape == (B, T, Z_DIM)
    print("KERNEL_OK")
</pallas_src>

<mosaic_0001>
module attributes {stable_mosaic.version = 11 : i64} {
  func.func @_vcd_kernel(%arg0: memref<64x8xf32, #tpu.memory_space<vmem>>, %arg1: memref<64x8xf32, #tpu.memory_space<vmem>>, %arg2: memref<32x384xf32, #tpu.memory_space<vmem>>, %arg3: memref<32x384xf32, #tpu.memory_space<vmem>>, %arg4: memref<40x384xf32, #tpu.memory_space<vmem>>, %arg5: memref<128x32xf32, #tpu.memory_space<vmem>>, %arg6: memref<64x24xf32, #tpu.memory_space<vmem>>) attributes {dimension_semantics = [], scalar_prefetch = 0 : i64, scratch_operands = 0 : i64, tpu.core_type = #tpu.core_type<tc>} {
    %c0 = arith.constant 0 : index
    %c0_0 = arith.constant 0 : index
    %0 = vector.load %arg0[%c0, %c0_0] : memref<64x8xf32, #tpu.memory_space<vmem>>, vector<64x8xf32>
    %c0_1 = arith.constant 0 : index
    %c0_2 = arith.constant 0 : index
    %1 = vector.load %arg2[%c0_1, %c0_2] : memref<32x384xf32, #tpu.memory_space<vmem>>, vector<8x384xf32>
    %c8 = arith.constant 8 : index
    %c0_3 = arith.constant 0 : index
    %2 = vector.load %arg2[%c8, %c0_3] : memref<32x384xf32, #tpu.memory_space<vmem>>, vector<16x384xf32>
    %c24 = arith.constant 24 : index
    %c0_4 = arith.constant 0 : index
    %3 = vector.load %arg2[%c24, %c0_4] : memref<32x384xf32, #tpu.memory_space<vmem>>, vector<8x384xf32>
    %4 = vector.extract_strided_slice %3 {offsets = [0, 0], sizes = [1, 384], strides = [1, 1]} : vector<8x384xf32> to vector<1x384xf32>
    %5 = vector.extract_strided_slice %3 {offsets = [1, 256], sizes = [1, 16], strides = [1, 1]} : vector<8x384xf32> to vector<1x16xf32>
    %6 = vector.shape_cast %5 : vector<1x16xf32> to vector<1x16xf32>
    %7 = vector.broadcast %6 : vector<1x16xf32> to vector<8x16xf32>
    %cst = arith.constant dense<0.000000e+00> : vector<64x384xf32>
    %8 = tpu.matmul %0, %1, %cst {dimension_numbers = #tpu.dot_dimension_numbers<[1], [0], [0], [1], [0, 0, 1, 1], [], []>} : vector<64x8xf32>, vector<8x384xf32>, vector<64x384xf32> -> vector<64x384xf32>
    %9 = vector.broadcast %4 : vector<1x384xf32> to vector<64x384xf32>
    %10 = arith.addf %8, %9 : vector<64x384xf32>
    %11 = vector.extract_strided_slice %10 {offsets = [0, 0], sizes = [8, 16], strides = [1, 1]} : vector<64x384xf32> to vector<8x16xf32>
    %12 = vector.extract_strided_slice %10 {offsets = [0, 128], sizes = [8, 16], strides = [1, 1]} : vector<64x384xf32> to vector<8x16xf32>
    %13 = vector.extract_strided_slice %10 {offsets = [0, 256], sizes = [8, 16], strides = [1, 1]} : vector<64x384xf32> to vector<8x16xf32>
    %14 = arith.negf %11 : vector<8x16xf32>
    %15 = math.exp %14 : vector<8x16xf32>
    %cst_5 = arith.constant 1.000000e+00 : f32
    %16 = vector.broadcast %cst_5 : f32 to vector<8x16xf32>
    %17 = arith.addf %16, %15 : vector<8x16xf32>
    %18 = arith.divf %16, %17 : vector<8x16xf32>
    %19 = arith.negf %12 : vector<8x16xf32>
    %20 = math.exp %19 : vector<8x16xf32>
    %cst_6 = arith.constant 1.000000e+00 : f32
    %21 = vector.broadcast %cst_6 : f32 to vector<8x16xf32>
    %22 = arith.addf %21, %20 : vector<8x16xf32>
    %23 = arith.divf %21, %22 : vector<8x16xf32>
    %24 = arith.mulf %18, %7 : vector<8x16xf32>
    %25 = arith.addf %13, %24 : vector<8x16xf32>
    %26 = math.tanh %25 : vector<8x16xf32>
    %27 = arith.mulf %23, %26 : vector<8x16xf32>
    %28 = arith.subf %26, %27 : vector<8x16xf32>
    %29 = vector.extract_strided_slice %10 {offsets = [8, 0], sizes = [8, 16], strides = [1, 1]} : vector<64x384xf32> to vector<8x16xf32>
    %30 = vector.extract_strided_slice %10 {offsets = [8, 128], sizes = [8, 16], strides = [1, 1]} : vector<64x384xf32> to vector<8x16xf32>
    %31 = vector.extract_strided_slice %10 {offsets = [8, 256], sizes = [8, 16], strides = [1, 1]} : vector<64x384xf32> to vector<8x16xf32>
    %cst_7 = arith.constant dense<0.000000e+00> : vector<8x384xf32>
    %32 = tpu.matmul %28, %2, %cst_7 {dimension_numbers = #tpu.dot_dimension_numbers<[1], [0], [0], [1], [0, 0, 1, 1], [], []>} : vector<8x16xf32>, vector<16x384xf32>, vector<8x384xf32> -> vector<8x384xf32>
    %33 = vector.extract_strided_slice %32 {offsets = [0, 0], sizes = [8, 16], strides = [1, 1]} : vector<8x384xf32> to vector<8x16xf32>
    %34 = arith.addf %29, %33 : vector<8x16xf32>
    %35 = arith.negf %34 : vector<8x16xf32>
    %36 = math.exp %35 : vector<8x16xf32>
    %cst_8 = arith.constant 1.000000e+00 : f32
    %37 = vector.broadcast %cst_8 : f32 to vector<8x16xf32>
    %38 = arith.addf %37, %36 : vector<8x16xf32>
    %39 = arith.divf %37, %38 : vector<8x16xf32>
    %40 = vector.extract_strided_slice %32 {offsets = [0, 128], sizes = [8, 16], strides = [1, 1]} : vector<8x384xf32> to vector<8x16xf32>
    %41 = arith.addf %30, %40 : vector<8x16xf32>
    %42 = arith.negf %41 : vector<8x16xf32>
    %43 = math.exp %42 : vector<8x16xf32>
    %cst_9 = arith.constant 1.000000e+00 : f32
    %44 = vector.broadcast %cst_9 : f32 to vector<8x16xf32>
    %45 = arith.addf %44, %43 : vector<8x16xf32>
    %46 = arith.divf %44, %45 : vector<8x16xf32>
    %47 = vector.extract_strided_slice %32 {offsets = [0, 256], sizes = [8, 16], strides = [1, 1]} : vector<8x384xf32> to vector<8x16xf32>
    %48 = arith.addf %47, %7 : vector<8x16xf32>
    %49 = arith.mulf %39, %48 : vector<8x16xf32>
    %50 = arith.addf %31, %49 : vector<8x16xf32>
    %51 = math.tanh %50 : vector<8x16xf32>
    %52 = arith.subf %28, %51 : vector<8x16xf32>
    %53 = arith.mulf %46, %52 : vector<8x16xf32>
    %54 = arith.addf %53, %51 : vector<8x16xf32>
    %55 = vector.extract_strided_slice %10 {offsets = [16, 0], sizes = [8, 16], strides = [1, 1]} : vector<64x384xf32> to vector<8x16xf32>
    %56 = vector.extract_strided_slice %10 {offsets = [16, 128], sizes = [8, 16], strides = [1, 1]} : vector<64x384xf32> to vector<8x16xf32>
    %57 = vector.extract_strided_slice %10 {offsets = [16, 256], sizes = [8, 16], strides = [1, 1]} : vector<64x384xf32> to vector<8x16xf32>
    %cst_10 = arith.constant dense<0.000000e+00> : vector<8x384xf32>
    %58 = tpu.matmul %54, %2, %cst_10 {dimension_numbers = #tpu.dot_dimension_numbers<[1], [0], [0], [1], [0, 0, 1, 1], [], []>} : vector<8x16xf32>, vector<16x384xf32>, vector<8x384xf32> -> vector<8x384xf32>
    %59 = vector.extract_strided_slice %58 {offsets = [0, 0], sizes = [8, 16], strides = [1, 1]} : vector<8x384xf32> to vector<8x16xf32>
    %60 = arith.addf %55, %59 : vector<8x16xf32>
    %61 = arith.negf %60 : vector<8x16xf32>
    %62 = math.exp %61 : vector<8x16xf32>
    %cst_11 = arith.constant 1.000000e+00 : f32
    %63 = vector.broadcast %cst_11 : f32 to vector<8x16xf32>
    %64 = arith.addf %63, %62 : vector<8x16xf32>
    %65 = arith.divf %63, %64 : vector<8x16xf32>
    %66 = vector.extract_strided_slice %58 {offsets = [0, 128], sizes = [8, 16], strides = [1, 1]} : vector<8x384xf32> to vector<8x16xf32>
    %67 = arith.addf %56, %66 : vector<8x16xf32>
    %68 = arith.negf %67 : vector<8x16xf32>
    %69 = math.exp %68 : vector<8x16xf32>
    %cst_12 = arith.constant 1.000000e+00 : f32
    %70 = vector.broadcast %cst_12 : f32 to vector<8x16xf32>
    %71 = arith.addf %70, %69 : vector<8x16xf32>
    %72 = arith.divf %70, %71 : vector<8x16xf32>
    %73 = vector.extract_strided_slice %58 {offsets = [0, 256], sizes = [8, 16], strides = [1, 1]} : vector<8x384xf32> to vector<8x16xf32>
    %74 = arith.addf %73, %7 : vector<8x16xf32>
    %75 = arith.mulf %65, %74 : vector<8x16xf32>
    %76 = arith.addf %57, %75 : vector<8x16xf32>
    %77 = math.tanh %76 : vector<8x16xf32>
    %78 = arith.subf %54, %77 : vector<8x16xf32>
    %79 = arith.mulf %72, %78 : vector<8x16xf32>
    %80 = arith.addf %79, %77 : vector<8x16xf32>
    %81 = vector.extract_strided_slice %10 {offsets = [24, 0], sizes = [8, 16], strides = [1, 1]} : vector<64x384xf32> to vector<8x16xf32>
    %82 = vector.extract_strided_slice %10 {offsets = [24, 128], sizes = [8, 16], strides = [1, 1]} : vector<64x384xf32> to vector<8x16xf32>
    %83 = vector.extract_strided_slice %10 {offsets = [24, 256], sizes = [8, 16], strides = [1, 1]} : vector<64x384xf32> to vector<8x16xf32>
    %cst_13 = arith.constant dense<0.000000e+00> : vector<8x384xf32>
    %84 = tpu.matmul %80, %2, %cst_13 {dimension_numbers = #tpu.dot_dimension_numbers<[1], [0], [0], [1], [0, 0, 1, 1], [], []>} : vector<8x16xf32>, vector<16x384xf32>, vector<8x384xf32> -> vector<8x384xf32>
    %85 = vector.extract_strided_slice %84 {offsets = [0, 0], sizes = [8, 16], strides = [1, 1]} : vector<8x384xf32> to vector<8x16xf32>
    %86 = arith.addf %81, %85 : vector<8x16xf32>
    %87 = arith.negf %86 : vector<8x16xf32>
    %88 = math.exp %87 : vector<8x16xf32>
    %cst_14 = arith.constant 1.000000e+00 : f32
    %89 = vector.broadcast %cst_14 : f32 to vector<8x16xf32>
    %90 = arith.addf %89, %88 : vector<8x16xf32>
    %91 = arith.divf %89, %90 : vector<8x16xf32>
    %92 = vector.extract_strided_slice %84 {offsets = [0, 128], sizes = [8, 16], strides = [1, 1]} : vector<8x384xf32> to vector<8x16xf32>
    %93 = arith.addf %82, %92 : vector<8x16xf32>
    %94 = arith.negf %93 : vector<8x16xf32>
    %95 = math.exp %94 : vector<8x16xf32>
    %cst_15 = arith.constant 1.000000e+00 : f32
    %96 = vector.broadcast %cst_15 : f32 to vector<8x16xf32>
    %97 = arith.addf %96, %95 : vector<8x16xf32>
    %98 = arith.divf %96, %97 : vector<8x16xf32>
    %99 = vector.extract_strided_slice %84 {offsets = [0, 256], sizes = [8, 16], strides = [1, 1]} : vector<8x384xf32> to vector<8x16xf32>
    %100 = arith.addf %99, %7 : vector<8x16xf32>
    %101 = arith.mulf %91, %100 : vector<8x16xf32>
    %102 = arith.addf %83, %101 : vector<8x16xf32>
    %103 = math.tanh %102 : vector<8x16xf32>
    %104 = arith.subf %80, %103 : vector<8x16xf32>
    %105 = arith.mulf %98, %104 : vector<8x16xf32>
    %106 = arith.addf %105, %103 : vector<8x16xf32>
    %107 = vector.extract_strided_slice %10 {offsets = [32, 0], sizes = [8, 16], strides = [1, 1]} : vector<64x384xf32> to vector<8x16xf32>
    %108 = vector.extract_strided_slice %10 {offsets = [32, 128], sizes = [8, 16], strides = [1, 1]} : vector<64x384xf32> to vector<8x16xf32>
    %109 = vector.extract_strided_slice %10 {offsets = [32, 256], sizes = [8, 16], strides = [1, 1]} : vector<64x384xf32> to vector<8x16xf32>
    %cst_16 = arith.constant dense<0.000000e+00> : vector<8x384xf32>
    %110 = tpu.matmul %106, %2, %cst_16 {dimension_numbers = #tpu.dot_dimension_numbers<[1], [0], [0], [1], [0, 0, 1, 1], [], []>} : vector<8x16xf32>, vector<16x384xf32>, vector<8x384xf32> -> vector<8x384xf32>
    %111 = vector.extract_strided_slice %110 {offsets = [0, 0], sizes = [8, 16], strides = [1, 1]} : vector<8x384xf32> to vector<8x16xf32>
    %112 = arith.addf %107, %111 : vector<8x16xf32>
    %113 = arith.negf %112 : vector<8x16xf32>
    %114 = math.exp %113 : vector<8x16xf32>
    %cst_17 = arith.constant 1.000000e+00 : f32
    %115 = vector.broadcast %cst_17 : f32 to vector<8x16xf32>
    %116 = arith.addf %115, %114 : vector<8x16xf32>
    %117 = arith.divf %115, %116 : vector<8x16xf32>
    %118 = vector.extract_strided_slice %110 {offsets = [0, 128], sizes = [8, 16], strides = [1, 1]} : vector<8x384xf32> to vector<8x16xf32>
    %119 = arith.addf %108, %118 : vector<8x16xf32>
    %120 = arith.negf %119 : vector<8x16xf32>
    %121 = math.exp %120 : vector<8x16xf32>
    %cst_18 = arith.constant 1.000000e+00 : f32
    %122 = vector.broadcast %cst_18 : f32 to vector<8x16xf32>
    %123 = arith.addf %122, %121 : vector<8x16xf32>
    %124 = arith.divf %122, %123 : vector<8x16xf32>
    %125 = vector.extract_strided_slice %110 {offsets = [0, 256], sizes = [8, 16], strides = [1, 1]} : vector<8x384xf32> to vector<8x16xf32>
    %126 = arith.addf %125, %7 : vector<8x16xf32>
    %127 = arith.mulf %117, %126 : vector<8x16xf32>
    %128 = arith.addf %109, %127 : vector<8x16xf32>
    %129 = math.tanh %128 : vector<8x16xf32>
    %130 = arith.subf %106, %129 : vector<8x16xf32>
    %131 = arith.mulf %124, %130 : vector<8x16xf32>
    %132 = arith.addf %131, %129 : vector<8x16xf32>
    %133 = vector.extract_strided_slice %10 {offsets = [40, 0], sizes = [8, 16], strides = [1, 1]} : vector<64x384xf32> to vector<8x16xf32>
    %134 = vector.extract_strided_slice %10 {offsets = [40, 128], sizes = [8, 16], strides = [1, 1]} : vector<64x384xf32> to vector<8x16xf32>
    %135 = vector.extract_strided_slice %10 {offsets = [40, 256], sizes = [8, 16], strides = [1, 1]} : vector<64x384xf32> to vector<8x16xf32>
    %cst_19 = arith.constant dense<0.000000e+00> : vector<8x384xf32>
    %136 = tpu.matmul %132, %2, %cst_19 {dimension_numbers = #tpu.dot_dimension_numbers<[1], [0], [0], [1], [0, 0, 1, 1], [], []>} : vector<8x16xf32>, vector<16x384xf32>, vector<8x384xf32> -> vector<8x384xf32>
    %137 = vector.extract_strided_slice %136 {offsets = [0, 0], sizes = [8, 16], strides = [1, 1]} : vector<8x384xf32> to vector<8x16xf32>
    %138 = arith.addf %133, %137 : vector<8x16xf32>
    %139 = arith.negf %138 : vector<8x16xf32>
    %140 = math.exp %139 : vector<8x16xf32>
    %cst_20 = arith.constant 1.000000e+00 : f32
    %141 = vector.broadcast %cst_20 : f32 to vector<8x16xf32>
    %142 = arith.addf %141, %140 : vector<8x16xf32>
    %143 = arith.divf %141, %142 : vector<8x16xf32>
    %144 = vector.extract_strided_slice %136 {offsets = [0, 128], sizes = [8, 16], strides = [1, 1]} : vector<8x384xf32> to vector<8x16xf32>
    %145 = arith.addf %134, %144 : vector<8x16xf32>
    %146 = arith.negf %145 : vector<8x16xf32>
    %147 = math.exp %146 : vector<8x16xf32>
    %cst_21 = arith.constant 1.000000e+00 : f32
    %148 = vector.broadcast %cst_21 : f32 to vector<8x16xf32>
    %149 = arith.addf %148, %147 : vector<8x16xf32>
    %150 = arith.divf %148, %149 : vector<8x16xf32>
    %151 = vector.extract_strided_slice %136 {offsets = [0, 256], sizes = [8, 16], strides = [1, 1]} : vector<8x384xf32> to vector<8x16xf32>
    %152 = arith.addf %151, %7 : vector<8x16xf32>
    %153 = arith.mulf %143, %152 : vector<8x16xf32>
    %154 = arith.addf %135, %153 : vector<8x16xf32>
    %155 = math.tanh %154 : vector<8x16xf32>
    %156 = arith.subf %132, %155 : vector<8x16xf32>
    %157 = arith.mulf %150, %156 : vector<8x16xf32>
    %158 = arith.addf %157, %155 : vector<8x16xf32>
    %159 = vector.extract_strided_slice %10 {offsets = [48, 0], sizes = [8, 16], strides = [1, 1]} : vector<64x384xf32> to vector<8x16xf32>
    %160 = vector.extract_strided_slice %10 {offsets = [48, 128], sizes = [8, 16], strides = [1, 1]} : vector<64x384xf32> to vector<8x16xf32>
    %161 = vector.extract_strided_slice %10 {offsets = [48, 256], sizes = [8, 16], strides = [1, 1]} : vector<64x384xf32> to vector<8x16xf32>
    %cst_22 = arith.constant dense<0.000000e+00> : vector<8x384xf32>
    %162 = tpu.matmul %158, %2, %cst_22 {dimension_numbers = #tpu.dot_dimension_numbers<[1], [0], [0], [1], [0, 0, 1, 1], [], []>} : vector<8x16xf32>, vector<16x384xf32>, vector<8x384xf32> -> vector<8x384xf32>
    %163 = vector.extract_strided_slice %162 {offsets = [0, 0], sizes = [8, 16], strides = [1, 1]} : vector<8x384xf32> to vector<8x16xf32>
    %164 = arith.addf %159, %163 : vector<8x16xf32>
    %165 = arith.negf %164 : vector<8x16xf32>
    %166 = math.exp %165 : vector<8x16xf32>
    %cst_23 = arith.constant 1.000000e+00 : f32
    %167 = vector.broadcast %cst_23 : f32 to vector<8x16xf32>
    %168 = arith.addf %167, %166 : vector<8x16xf32>
    %169 = arith.divf %167, %168 : vector<8x16xf32>
    %170 = vector.extract_strided_slice %162 {offsets = [0, 128], sizes = [8, 16], strides = [1, 1]} : vector<8x384xf32> to vector<8x16xf32>
    %171 = arith.addf %160, %170 : vector<8x16xf32>
    %172 = arith.negf %171 : vector<8x16xf32>
    %173 = math.exp %172 : vector<8x16xf32>
    %cst_24 = arith.constant 1.000000e+00 : f32
    %174 = vector.broadcast %cst_24 : f32 to vector<8x16xf32>
    %175 = arith.addf %174, %173 : vector<8x16xf32>
    %176 = arith.divf %174, %175 : vector<8x16xf32>
    %177 = vector.extract_strided_slice %162 {offsets = [0, 256], sizes = [8, 16], strides = [1, 1]} : vector<8x384xf32> to vector<8x16xf32>
    %178 = arith.addf %177, %7 : vector<8x16xf32>
    %179 = arith.mulf %169, %178 : vector<8x16xf32>
    %180 = arith.addf %161, %179 : vector<8x16xf32>
    %181 = math.tanh %180 : vector<8x16xf32>
    %182 = arith.subf %158, %181 : vector<8x16xf32>
    %183 = arith.mulf %176, %182 : vector<8x16xf32>
    %184 = arith.addf %183, %181 : vector<8x16xf32>
    %185 = vector.extract_strided_slice %10 {offsets = [56, 0], sizes = [8, 16], strides = [1, 1]} : vector<64x384xf32> to vector<8x16xf32>
    %186 = vector.extract_strided_slice %10 {offsets = [56, 128], sizes = [8, 16], strides = [1, 1]} : vector<64x384xf32> to vector<8x16xf32>
    %187 = vector.extract_strided_slice %10 {offsets = [56, 256], sizes = [8, 16], strides = [1, 1]} : vector<64x384xf32> to vector<8x16xf32>
    %cst_25 = arith.constant dense<0.000000e+00> : vector<8x384xf32>
    %188 = tpu.matmul %184, %2, %cst_25 {dimension_numbers = #tpu.dot_dimension_numbers<[1], [0], [0], [1], [0, 0, 1, 1], [], []>} : vector<8x16xf32>, vector<16x384xf32>, vector<8x384xf32> -> vector<8x384xf32>
    %189 = vector.extract_strided_slice %188 {offsets = [0, 0], sizes = [8, 16], strides = [1, 1]} : vector<8x384xf32> to vector<8x16xf32>
    %190 = arith.addf %185, %189 : vector<8x16xf32>
    %191 = arith.negf %190 : vector<8x16xf32>
    %192 = math.exp %191 : vector<8x16xf32>
    %cst_26 = arith.constant 1.000000e+00 : f32
    %193 = vector.broadcast %cst_26 : f32 to vector<8x16xf32>
    %194 = arith.addf %193, %192 : vector<8x16xf32>
    %195 = arith.divf %193, %194 : vector<8x16xf32>
    %196 = vector.extract_strided_slice %188 {offsets = [0, 128], sizes = [8, 16], strides = [1, 1]} : vector<8x384xf32> to vector<8x16xf32>
    %197 = arith.addf %186, %196 : vector<8x16xf32>
    %198 = arith.negf %197 : vector<8x16xf32>
    %199 = math.exp %198 : vector<8x16xf32>
    %cst_27 = arith.constant 1.000000e+00 : f32
    %200 = vector.broadcast %cst_27 : f32 to vector<8x16xf32>
    %201 = arith.addf %200, %199 : vector<8x16xf32>
    %202 = arith.divf %200, %201 : vector<8x16xf32>
    %203 = vector.extract_strided_slice %188 {offsets = [0, 256], sizes = [8, 16], strides = [1, 1]} : vector<8x384xf32> to vector<8x16xf32>
    %204 = arith.addf %203, %7 : vector<8x16xf32>
    %205 = arith.mulf %195, %204 : vector<8x16xf32>
    %206 = arith.addf %187, %205 : vector<8x16xf32>
    %207 = math.tanh %206 : vector<8x16xf32>
    %208 = arith.subf %184, %207 : vector<8x16xf32>
    %209 = arith.mulf %202, %208 : vector<8x16xf32>
    %210 = arith.addf %209, %207 : vector<8x16xf32>
    %211 = tpu.concatenate %28, %54, %80, %106, %132, %158, %184, %210 in 0 : vector<8x16xf32>, vector<8x16xf32>, vector<8x16xf32>, vector<8x16xf32>, vector<8x16xf32>, vector<8x16xf32>, vector<8x16xf32>, vector<8x16xf32> -> vector<64x16xf32>
    %c0_28 = arith.constant 0 : index
    %c0_29 = arith.constant 0 : index
    %212 = vector.load %arg3[%c0_28, %c0_29] : memref<32x384xf32, #tpu.memory_space<vmem>>, vector<8x384xf32>
    %c8_30 = arith.constant 8 : index
    %c0_31 = arith.constant 0 : index
    %213 = vector.load %arg3[%c8_30, %c0_31] : memref<32x384xf32, #tpu.memory_space<vmem>>, vector<16x384xf32>
    %c24_32 = arith.constant 24 : index
    %c0_33 = arith.constant 0 : index
    %214 = vector.load %arg3[%c24_32, %c0_33] : memref<32x384xf32, #tpu.memory_space<vmem>>, vector<8x384xf32>
    %215 = vector.extract_strided_slice %214 {offsets = [0, 0], sizes = [1, 384], strides = [1, 1]} : vector<8x384xf32> to vector<1x384xf32>
    %216 = vector.extract_strided_slice %214 {offsets = [1, 256], sizes = [1, 16], strides = [1, 1]} : vector<8x384xf32> to vector<1x16xf32>
    %217 = vector.shape_cast %216 : vector<1x16xf32> to vector<1x16xf32>
    %218 = vector.broadcast %217 : vector<1x16xf32> to vector<8x16xf32>
    %cst_34 = arith.constant dense<0.000000e+00> : vector<64x384xf32>
    %219 = tpu.matmul %0, %212, %cst_34 {dimension_numbers = #tpu.dot_dimension_numbers<[1], [0], [0], [1], [0, 0, 1, 1], [], []>} : vector<64x8xf32>, vector<8x384xf32>, vector<64x384xf32> -> vector<64x384xf32>
    %220 = vector.broadcast %215 : vector<1x384xf32> to vector<64x384xf32>
    %221 = arith.addf %219, %220 : vector<64x384xf32>
    %222 = vector.extract_strided_slice %221 {offsets = [56, 0], sizes = [8, 16], strides = [1, 1]} : vector<64x384xf32> to vector<8x16xf32>
    %223 = vector.extract_strided_slice %221 {offsets = [56, 128], sizes = [8, 16], strides = [1, 1]} : vector<64x384xf32> to vector<8x16xf32>
    %224 = vector.extract_strided_slice %221 {offsets = [56, 256], sizes = [8, 16], strides = [1, 1]} : vector<64x384xf32> to vector<8x16xf32>
    %225 = arith.negf %222 : vector<8x16xf32>
    %226 = math.exp %225 : vector<8x16xf32>
    %cst_35 = arith.constant 1.000000e+00 : f32
    %227 = vector.broadcast %cst_35 : f32 to vector<8x16xf32>
    %228 = arith.addf %227, %226 : vector<8x16xf32>
    %229 = arith.divf %227, %228 : vector<8x16xf32>
    %230 = arith.negf %223 : vector<8x16xf32>
    %231 = math.exp %230 : vector<8x16xf32>
    %cst_36 = arith.constant 1.000000e+00 : f32
    %232 = vector.broadcast %cst_36 : f32 to vector<8x16xf32>
    %233 = arith.addf %232, %231 : vector<8x16xf32>
    %234 = arith.divf %232, %233 : vector<8x16xf32>
    %235 = arith.mulf %229, %218 : vector<8x16xf32>
    %236 = arith.addf %224, %235 : vector<8x16xf32>
    %237 = math.tanh %236 : vector<8x16xf32>
    %238 = arith.mulf %234, %237 : vector<8x16xf32>
    %239 = arith.subf %237, %238 : vector<8x16xf32>
    %240 = vector.extract_strided_slice %221 {offsets = [48, 0], sizes = [8, 16], strides = [1, 1]} : vector<64x384xf32> to vector<8x16xf32>
    %241 = vector.extract_strided_slice %221 {offsets = [48, 128], sizes = [8, 16], strides = [1, 1]} : vector<64x384xf32> to vector<8x16xf32>
    %242 = vector.extract_strided_slice %221 {offsets = [48, 256], sizes = [8, 16], strides = [1, 1]} : vector<64x384xf32> to vector<8x16xf32>
    %cst_37 = arith.constant dense<0.000000e+00> : vector<8x384xf32>
    %243 = tpu.matmul %239, %213, %cst_37 {dimension_numbers = #tpu.dot_dimension_numbers<[1], [0], [0], [1], [0, 0, 1, 1], [], []>} : vector<8x16xf32>, vector<16x384xf32>, vector<8x384xf32> -> vector<8x384xf32>
    %244 = vector.extract_strided_slice %243 {offsets = [0, 0], sizes = [8, 16], strides = [1, 1]} : vector<8x384xf32> to vector<8x16xf32>
    %245 = arith.addf %240, %244 : vector<8x16xf32>
    %246 = arith.negf %245 : vector<8x16xf32>
    %247 = math.exp %246 : vector<8x16xf32>
    %cst_38 = arith.constant 1.000000e+00 : f32
    %248 = vector.broadcast %cst_38 : f32 to vector<8x16xf32>
    %249 = arith.addf %248, %247 : vector<8x16xf32>
    %250 = arith.divf %248, %249 : vector<8x16xf32>
    %251 = vector.extract_strided_slice %243 {offsets = [0, 128], sizes = [8, 16], strides = [1, 1]} : vector<8x384xf32> to vector<8x16xf32>
    %252 = arith.addf %241, %251 : vector<8x16xf32>
    %253 = arith.negf %252 : vector<8x16xf32>
    %254 = math.exp %253 : vector<8x16xf32>
    %cst_39 = arith.constant 1.000000e+00 : f32
    %255 = vector.broadcast %cst_39 : f32 to vector<8x16xf32>
    %256 = arith.addf %255, %254 : vector<8x16xf32>
    %257 = arith.divf %255, %256 : vector<8x16xf32>
    %258 = vector.extract_strided_slice %243 {offsets = [0, 256], sizes = [8, 16], strides = [1, 1]} : vector<8x384xf32> to vector<8x16xf32>
    %259 = arith.addf %258, %218 : vector<8x16xf32>
    %260 = arith.mulf %250, %259 : vector<8x16xf32>
    %261 = arith.addf %242, %260 : vector<8x16xf32>
    %262 = math.tanh %261 : vector<8x16xf32>
    %263 = arith.subf %239, %262 : vector<8x16xf32>
    %264 = arith.mulf %257, %263 : vector<8x16xf32>
    %265 = arith.addf %264, %262 : vector<8x16xf32>
    %266 = vector.extract_strided_slice %221 {offsets = [40, 0], sizes = [8, 16], strides = [1, 1]} : vector<64x384xf32> to vector<8x16xf32>
    %267 = vector.extract_strided_slice %221 {offsets = [40, 128], sizes = [8, 16], strides = [1, 1]} : vector<64x384xf32> to vector<8x16xf32>
    %268 = vector.extract_strided_slice %221 {offsets = [40, 256], sizes = [8, 16], strides = [1, 1]} : vector<64x384xf32> to vector<8x16xf32>
    %cst_40 = arith.constant dense<0.000000e+00> : vector<8x384xf32>
    %269 = tpu.matmul %265, %213, %cst_40 {dimension_numbers = #tpu.dot_dimension_numbers<[1], [0], [0], [1], [0, 0, 1, 1], [], []>} : vector<8x16xf32>, vector<16x384xf32>, vector<8x384xf32> -> vector<8x384xf32>
    %270 = vector.extract_strided_slice %269 {offsets = [0, 0], sizes = [8, 16], strides = [1, 1]} : vector<8x384xf32> to vector<8x16xf32>
    %271 = arith.addf %266, %270 : vector<8x16xf32>
    %272 = arith.negf %271 : vector<8x16xf32>
    %273 = math.exp %272 : vector<8x16xf32>
    %cst_41 = arith.constant 1.000000e+00 : f32
    %274 = vector.broadcast %cst_41 : f32 to vector<8x16xf32>
    %275 = arith.addf %274, %273 : vector<8x16xf32>
    %276 = arith.divf %274, %275 : vector<8x16xf32>
    %277 = vector.extract_strided_slice %269 {offsets = [0, 128], sizes = [8, 16], strides = [1, 1]} : vector<8x384xf32> to vector<8x16xf32>
    %278 = arith.addf %267, %277 : vector<8x16xf32>
    %279 = arith.negf %278 : vector<8x16xf32>
    %280 = math.exp %279 : vector<8x16xf32>
    %cst_42 = arith.constant 1.000000e+00 : f32
    %281 = vector.broadcast %cst_42 : f32 to vector<8x16xf32>
    %282 = arith.addf %281, %280 : vector<8x16xf32>
    %283 = arith.divf %281, %282 : vector<8x16xf32>
    %284 = vector.extract_strided_slice %269 {offsets = [0, 256], sizes = [8, 16], strides = [1, 1]} : vector<8x384xf32> to vector<8x16xf32>
    %285 = arith.addf %284, %218 : vector<8x16xf32>
    %286 = arith.mulf %276, %285 : vector<8x16xf32>
    %287 = arith.addf %268, %286 : vector<8x16xf32>
    %288 = math.tanh %287 : vector<8x16xf32>
    %289 = arith.subf %265, %288 : vector<8x16xf32>
    %290 = arith.mulf %283, %289 : vector<8x16xf32>
    %291 = arith.addf %290, %288 : vector<8x16xf32>
    %292 = vector.extract_strided_slice %221 {offsets = [32, 0], sizes = [8, 16], strides = [1, 1]} : vector<64x384xf32> to vector<8x16xf32>
    %293 = vector.extract_strided_slice %221 {offsets = [32, 128], sizes = [8, 16], strides = [1, 1]} : vector<64x384xf32> to vector<8x16xf32>
    %294 = vector.extract_strided_slice %221 {offsets = [32, 256], sizes = [8, 16], strides = [1, 1]} : vector<64x384xf32> to vector<8x16xf32>
    %cst_43 = arith.constant dense<0.000000e+00> : vector<8x384xf32>
    %295 = tpu.matmul %291, %213, %cst_43 {dimension_numbers = #tpu.dot_dimension_numbers<[1], [0], [0], [1], [0, 0, 1, 1], [], []>} : vector<8x16xf32>, vector<16x384xf32>, vector<8x384xf32> -> vector<8x384xf32>
    %296 = vector.extract_strided_slice %295 {offsets = [0, 0], sizes = [8, 16], strides = [1, 1]} : vector<8x384xf32> to vector<8x16xf32>
    %297 = arith.addf %292, %296 : vector<8x16xf32>
    %298 = arith.negf %297 : vector<8x16xf32>
    %299 = math.exp %298 : vector<8x16xf32>
    %cst_44 = arith.constant 1.000000e+00 : f32
    %300 = vector.broadcast %cst_44 : f32 to vector<8x16xf32>
    %301 = arith.addf %300, %299 : vector<8x16xf32>
    %302 = arith.divf %300, %301 : vector<8x16xf32>
    %303 = vector.extract_strided_slice %295 {offsets = [0, 128], sizes = [8, 16], strides = [1, 1]} : vector<8x384xf32> to vector<8x16xf32>
    %304 = arith.addf %293, %303 : vector<8x16xf32>
    %305 = arith.negf %304 : vector<8x16xf32>
    %306 = math.exp %305 : vector<8x16xf32>
    %cst_45 = arith.constant 1.000000e+00 : f32
    %307 = vector.broadcast %cst_45 : f32 to vector<8x16xf32>
    %308 = arith.addf %307, %306 : vector<8x16xf32>
    %309 = arith.divf %307, %308 : vector<8x16xf32>
    %310 = vector.extract_strided_slice %295 {offsets = [0, 256], sizes = [8, 16], strides = [1, 1]} : vector<8x384xf32> to vector<8x16xf32>
    %311 = arith.addf %310, %218 : vector<8x16xf32>
    %312 = arith.mulf %302, %311 : vector<8x16xf32>
    %313 = arith.addf %294, %312 : vector<8x16xf32>
    %314 = math.tanh %313 : vector<8x16xf32>
    %315 = arith.subf %291, %314 : vector<8x16xf32>
    %316 = arith.mulf %309, %315 : vector<8x16xf32>
    %317 = arith.addf %316, %314 : vector<8x16xf32>
    %318 = vector.extract_strided_slice %221 {offsets = [24, 0], sizes = [8, 16], strides = [1, 1]} : vector<64x384xf32> to vector<8x16xf32>
    %319 = vector.extract_strided_slice %221 {offsets = [24, 128], sizes = [8, 16], strides = [1, 1]} : vector<64x384xf32> to vector<8x16xf32>
    %320 = vector.extract_strided_slice %221 {offsets = [24, 256], sizes = [8, 16], strides = [1, 1]} : vector<64x384xf32> to vector<8x16xf32>
    %cst_46 = arith.constant dense<0.000000e+00> : vector<8x384xf32>
    %321 = tpu.matmul %317, %213, %cst_46 {dimension_numbers = #tpu.dot_dimension_numbers<[1], [0], [0], [1], [0, 0, 1, 1], [], []>} : vector<8x16xf32>, vector<16x384xf32>, vector<8x384xf32> -> vector<8x384xf32>
    %322 = vector.extract_strided_slice %321 {offsets = [0, 0], sizes = [8, 16], strides = [1, 1]} : vector<8x384xf32> to vector<8x16xf32>
    %323 = arith.addf %318, %322 : vector<8x16xf32>
    %324 = arith.negf %323 : vector<8x16xf32>
    %325 = math.exp %324 : vector<8x16xf32>
    %cst_47 = arith.constant 1.000000e+00 : f32
    %326 = vector.broadcast %cst_47 : f32 to vector<8x16xf32>
    %327 = arith.addf %326, %325 : vector<8x16xf32>
    %328 = arith.divf %326, %327 : vector<8x16xf32>
    %329 = vector.extract_strided_slice %321 {offsets = [0, 128], sizes = [8, 16], strides = [1, 1]} : vector<8x384xf32> to vector<8x16xf32>
    %330 = arith.addf %319, %329 : vector<8x16xf32>
    %331 = arith.negf %330 : vector<8x16xf32>
    %332 = math.exp %331 : vector<8x16xf32>
    %cst_48 = arith.constant 1.000000e+00 : f32
    %333 = vector.broadcast %cst_48 : f32 to vector<8x16xf32>
    %334 = arith.addf %333, %332 : vector<8x16xf32>
    %335 = arith.divf %333, %334 : vector<8x16xf32>
    %336 = vector.extract_strided_slice %321 {offsets = [0, 256], sizes = [8, 16], strides = [1, 1]} : vector<8x384xf32> to vector<8x16xf32>
    %337 = arith.addf %336, %218 : vector<8x16xf32>
    %338 = arith.mulf %328, %337 : vector<8x16xf32>
    %339 = arith.addf %320, %338 : vector<8x16xf32>
    %340 = math.tanh %339 : vector<8x16xf32>
    %341 = arith.subf %317, %340 : vector<8x16xf32>
    %342 = arith.mulf %335, %341 : vector<8x16xf32>
    %343 = arith.addf %342, %340 : vector<8x16xf32>
    %344 = vector.extract_strided_slice %221 {offsets = [16, 0], sizes = [8, 16], strides = [1, 1]} : vector<64x384xf32> to vector<8x16xf32>
    %345 = vector.extract_strided_slice %221 {offsets = [16, 128], sizes = [8, 16], strides = [1, 1]} : vector<64x384xf32> to vector<8x16xf32>
    %346 = vector.extract_strided_slice %221 {offsets = [16, 256], sizes = [8, 16], strides = [1, 1]} : vector<64x384xf32> to vector<8x16xf32>
    %cst_49 = arith.constant dense<0.000000e+00> : vector<8x384xf32>
    %347 = tpu.matmul %343, %213, %cst_49 {dimension_numbers = #tpu.dot_dimension_numbers<[1], [0], [0], [1], [0, 0, 1, 1], [], []>} : vector<8x16xf32>, vector<16x384xf32>, vector<8x384xf32> -> vector<8x384xf32>
    %348 = vector.extract_strided_slice %347 {offsets = [0, 0], sizes = [8, 16], strides = [1, 1]} : vector<8x384xf32> to vector<8x16xf32>
    %349 = arith.addf %344, %348 : vector<8x16xf32>
    %350 = arith.negf %349 : vector<8x16xf32>
    %351 = math.exp %350 : vector<8x16xf32>
    %cst_50 = arith.constant 1.000000e+00 : f32
    %352 = vector.broadcast %cst_50 : f32 to vector<8x16xf32>
    %353 = arith.addf %352, %351 : vector<8x16xf32>
    %354 = arith.divf %352, %353 : vector<8x16xf32>
    %355 = vector.extract_strided_slice %347 {offsets = [0, 128], sizes = [8, 16], strides = [1, 1]} : vector<8x384xf32> to vector<8x16xf32>
    %356 = arith.addf %345, %355 : vector<8x16xf32>
    %357 = arith.negf %356 : vector<8x16xf32>
    %358 = math.exp %357 : vector<8x16xf32>
    %cst_51 = arith.constant 1.000000e+00 : f32
    %359 = vector.broadcast %cst_51 : f32 to vector<8x16xf32>
    %360 = arith.addf %359, %358 : vector<8x16xf32>
    %361 = arith.divf %359, %360 : vector<8x16xf32>
    %362 = vector.extract_strided_slice %347 {offsets = [0, 256], sizes = [8, 16], strides = [1, 1]} : vector<8x384xf32> to vector<8x16xf32>
    %363 = arith.addf %362, %218 : vector<8x16xf32>
    %364 = arith.mulf %354, %363 : vector<8x16xf32>
    %365 = arith.addf %346, %364 : vector<8x16xf32>
    %366 = math.tanh %365 : vector<8x16xf32>
    %367 = arith.subf %343, %366 : vector<8x16xf32>
    %368 = arith.mulf %361, %367 : vector<8x16xf32>
    %369 = arith.addf %368, %366 : vector<8x16xf32>
    %370 = vector.extract_strided_slice %221 {offsets = [8, 0], sizes = [8, 16], strides = [1, 1]} : vector<64x384xf32> to vector<8x16xf32>
    %371 = vector.extract_strided_slice %221 {offsets = [8, 128], sizes = [8, 16], strides = [1, 1]} : vector<64x384xf32> to vector<8x16xf32>
    %372 = vector.extract_strided_slice %221 {offsets = [8, 256], sizes = [8, 16], strides = [1, 1]} : vector<64x384xf32> to vector<8x16xf32>
    %cst_52 = arith.constant dense<0.000000e+00> : vector<8x384xf32>
    %373 = tpu.matmul %369, %213, %cst_52 {dimension_numbers = #tpu.dot_dimension_numbers<[1], [0], [0], [1], [0, 0, 1, 1], [], []>} : vector<8x16xf32>, vector<16x384xf32>, vector<8x384xf32> -> vector<8x384xf32>
    %374 = vector.extract_strided_slice %373 {offsets = [0, 0], sizes = [8, 16], strides = [1, 1]} : vector<8x384xf32> to vector<8x16xf32>
    %375 = arith.addf %370, %374 : vector<8x16xf32>
    %376 = arith.negf %375 : vector<8x16xf32>
    %377 = math.exp %376 : vector<8x16xf32>
    %cst_53 = arith.constant 1.000000e+00 : f32
    %378 = vector.broadcast %cst_53 : f32 to vector<8x16xf32>
    %379 = arith.addf %378, %377 : vector<8x16xf32>
    %380 = arith.divf %378, %379 : vector<8x16xf32>
    %381 = vector.extract_strided_slice %373 {offsets = [0, 128], sizes = [8, 16], strides = [1, 1]} : vector<8x384xf32> to vector<8x16xf32>
    %382 = arith.addf %371, %381 : vector<8x16xf32>
    %383 = arith.negf %382 : vector<8x16xf32>
    %384 = math.exp %383 : vector<8x16xf32>
    %cst_54 = arith.constant 1.000000e+00 : f32
    %385 = vector.broadcast %cst_54 : f32 to vector<8x16xf32>
    %386 = arith.addf %385, %384 : vector<8x16xf32>
    %387 = arith.divf %385, %386 : vector<8x16xf32>
    %388 = vector.extract_strided_slice %373 {offsets = [0, 256], sizes = [8, 16], strides = [1, 1]} : vector<8x384xf32> to vector<8x16xf32>
    %389 = arith.addf %388, %218 : vector<8x16xf32>
    %390 = arith.mulf %380, %389 : vector<8x16xf32>
    %391 = arith.addf %372, %390 : vector<8x16xf32>
    %392 = math.tanh %391 : vector<8x16xf32>
    %393 = arith.subf %369, %392 : vector<8x16xf32>
    %394 = arith.mulf %387, %393 : vector<8x16xf32>
    %395 = arith.addf %394, %392 : vector<8x16xf32>
    %396 = vector.extract_strided_slice %221 {offsets = [0, 0], sizes = [8, 16], strides = [1, 1]} : vector<64x384xf32> to vector<8x16xf32>
    %397 = vector.extract_strided_slice %221 {offsets = [0, 128], sizes = [8, 16], strides = [1, 1]} : vector<64x384xf32> to vector<8x16xf32>
    %398 = vector.extract_strided_slice %221 {offsets = [0, 256], sizes = [8, 16], strides = [1, 1]} : vector<64x384xf32> to vector<8x16xf32>
    %cst_55 = arith.constant dense<0.000000e+00> : vector<8x384xf32>
    %399 = tpu.matmul %395, %213, %cst_55 {dimension_numbers = #tpu.dot_dimension_numbers<[1], [0], [0], [1], [0, 0, 1, 1], [], []>} : vector<8x16xf32>, vector<16x384xf32>, vector<8x384xf32> -> vector<8x384xf32>
    %400 = vector.extract_strided_slice %399 {offsets = [0, 0], sizes = [8, 16], strides = [1, 1]} : vector<8x384xf32> to vector<8x16xf32>
    %401 = arith.addf %396, %400 : vector<8x16xf32>
    %402 = arith.negf %401 : vector<8x16xf32>
    %403 = math.exp %402 : vector<8x16xf32>
    %cst_56 = arith.constant 1.000000e+00 : f32
    %404 = vector.broadcast %cst_56 : f32 to vector<8x16xf32>
    %405 = arith.addf %404, %403 : vector<8x16xf32>
    %406 = arith.divf %404, %405 : vector<8x16xf32>
    %407 = vector.extract_strided_slice %399 {offsets = [0, 128], sizes = [8, 16], strides = [1, 1]} : vector<8x384xf32> to vector<8x16xf32>
    %408 = arith.addf %397, %407 : vector<8x16xf32>
    %409 = arith.negf %408 : vector<8x16xf32>
    %410 = math.exp %409 : vector<8x16xf32>
    %cst_57 = arith.constant 1.000000e+00 : f32
    %411 = vector.broadcast %cst_57 : f32 to vector<8x16xf32>
    %412 = arith.addf %411, %410 : vector<8x16xf32>
    %413 = arith.divf %411, %412 : vector<8x16xf32>
    %414 = vector.extract_strided_slice %399 {offsets = [0, 256], sizes = [8, 16], strides = [1, 1]} : vector<8x384xf32> to vector<8x16xf32>
    %415 = arith.addf %414, %218 : vector<8x16xf32>
    %416 = arith.mulf %406, %415 : vector<8x16xf32>
    %417 = arith.addf %398, %416 : vector<8x16xf32>
    %418 = math.tanh %417 : vector<8x16xf32>
    %419 = arith.subf %395, %418 : vector<8x16xf32>
    %420 = arith.mulf %413, %419 : vector<8x16xf32>
    %421 = arith.addf %420, %418 : vector<8x16xf32>
    %422 = tpu.concatenate %421, %395, %369, %343, %317, %291, %265, %239 in 0 : vector<8x16xf32>, vector<8x16xf32>, vector<8x16xf32>, vector<8x16xf32>, vector<8x16xf32>, vector<8x16xf32>, vector<8x16xf32>, vector<8x16xf32> -> vector<64x16xf32>
    %c120 = arith.constant 120 : index
    %c0_58 = arith.constant 0 : index
    %423 = vector.load %arg5[%c120, %c0_58] : memref<128x32xf32, #tpu.memory_space<vmem>>, vector<8x32xf32>
    %c0_59 = arith.constant 0 : index
    %c0_60 = arith.constant 0 : index
    %424 = vector.load %arg5[%c0_59, %c0_60] : memref<128x32xf32, #tpu.memory_space<vmem>>, vector<16x8xf32>
    %c16 = arith.constant 16 : index
    %c0_61 = arith.constant 0 : index
    %425 = vector.load %arg5[%c16, %c0_61] : memref<128x32xf32, #tpu.memory_space<vmem>>, vector<16x8xf32>
    %c32 = arith.constant 32 : index
    %c0_62 = arith.constant 0 : index
    %426 = vector.load %arg5[%c32, %c0_62] : memref<128x32xf32, #tpu.memory_space<vmem>>, vector<16x8xf32>
    %c48 = arith.constant 48 : index
    %c0_63 = arith.constant 0 : index
    %427 = vector.load %arg5[%c48, %c0_63] : memref<128x32xf32, #tpu.memory_space<vmem>>, vector<16x8xf32>
    %c64 = arith.constant 64 : index
    %c0_64 = arith.constant 0 : index
    %428 = vector.load %arg5[%c64, %c0_64] : memref<128x32xf32, #tpu.memory_space<vmem>>, vector<8x16xf32>
    %c72 = arith.constant 72 : index
    %c0_65 = arith.constant 0 : index
    %429 = vector.load %arg5[%c72, %c0_65] : memref<128x32xf32, #tpu.memory_space<vmem>>, vector<16x32xf32>
    %c88 = arith.constant 88 : index
    %c0_66 = arith.constant 0 : index
    %430 = vector.load %arg5[%c88, %c0_66] : memref<128x32xf32, #tpu.memory_space<vmem>>, vector<32x8xf32>
    %cst_67 = arith.constant dense<0.000000e+00> : vector<64x8xf32>
    %431 = tpu.matmul %211, %424, %cst_67 {dimension_numbers = #tpu.dot_dimension_numbers<[1], [0], [0], [1], [0, 0, 1, 1], [], []>} : vector<64x16xf32>, vector<16x8xf32>, vector<64x8xf32> -> vector<64x8xf32>
    %cst_68 = arith.constant dense<0.000000e+00> : vector<64x8xf32>
    %432 = tpu.matmul %422, %425, %cst_68 {dimension_numbers = #tpu.dot_dimension_numbers<[1], [0], [0], [1], [0, 0, 1, 1], [], []>} : vector<64x16xf32>, vector<16x8xf32>, vector<64x8xf32> -> vector<64x8xf32>
    %433 = arith.addf %431, %432 : vector<64x8xf32>
    %434 = vector.extract_strided_slice %423 {offsets = [0, 0], sizes = [1, 8], strides = [1, 1]} : vector<8x32xf32> to vector<1x8xf32>
    %435 = vector.broadcast %434 : vector<1x8xf32> to vector<64x8xf32>
    %436 = arith.addf %433, %435 : vector<64x8xf32>
    %cst_69 = arith.constant dense<0.000000e+00> : vector<64x8xf32>
    %437 = tpu.matmul %211, %426, %cst_69 {dimension_numbers = #tpu.dot_dimension_numbers<[1], [0], [0], [1], [0, 0, 1, 1], [], []>} : vector<64x16xf32>, vector<16x8xf32>, vector<64x8xf32> -> vector<64x8xf32>
    %cst_70 = arith.constant dense<0.000000e+00> : vector<64x8xf32>
    %438 = tpu.matmul %422, %427, %cst_70 {dimension_numbers = #tpu.dot_dimension_numbers<[1], [0], [0], [1], [0, 0, 1, 1], [], []>} : vector<64x16xf32>, vector<16x8xf32>, vector<64x8xf32> -> vector<64x8xf32>
    %439 = arith.addf %437, %438 : vector<64x8xf32>
    %440 = vector.extract_strided_slice %423 {offsets = [1, 0], sizes = [1, 8], strides = [1, 1]} : vector<8x32xf32> to vector<1x8xf32>
    %441 = vector.broadcast %440 : vector<1x8xf32> to vector<64x8xf32>
    %442 = arith.addf %439, %441 : vector<64x8xf32>
    %c0_71 = arith.constant 0 : index
    %c0_72 = arith.constant 0 : index
    %443 = vector.load %arg1[%c0_71, %c0_72] : memref<64x8xf32, #tpu.memory_space<vmem>>, vector<64x8xf32>
    %cst_73 = arith.constant 5.000000e-01 : f32
    %444 = vector.broadcast %cst_73 : f32 to vector<64x8xf32>
    %445 = arith.mulf %444, %442 : vector<64x8xf32>
    %446 = math.exp %445 : vector<64x8xf32>
    %447 = arith.mulf %443, %446 : vector<64x8xf32>
    %448 = arith.addf %447, %436 : vector<64x8xf32>
    %cst_74 = arith.constant dense<0.000000e+00> : vector<64x16xf32>
    %449 = tpu.matmul %448, %428, %cst_74 {dimension_numbers = #tpu.dot_dimension_numbers<[1], [0], [0], [1], [0, 0, 1, 1], [], []>} : vector<64x8xf32>, vector<8x16xf32>, vector<64x16xf32> -> vector<64x16xf32>
    %450 = vector.extract_strided_slice %423 {offsets = [2, 0], sizes = [1, 16], strides = [1, 1]} : vector<8x32xf32> to vector<1x16xf32>
    %451 = vector.broadcast %450 : vector<1x16xf32> to vector<64x16xf32>
    %452 = arith.addf %449, %451 : vector<64x16xf32>
    %c0_75 = arith.constant 0 : index
    %c0_76 = arith.constant 0 : index
    %453 = vector.load %arg4[%c0_75, %c0_76] : memref<40x384xf32, #tpu.memory_space<vmem>>, vector<16x384xf32>
    %c16_77 = arith.constant 16 : index
    %c0_78 = arith.constant 0 : index
    %454 = vector.load %arg4[%c16_77, %c0_78] : memref<40x384xf32, #tpu.memory_space<vmem>>, vector<16x384xf32>
    %c32_79 = arith.constant 32 : index
    %c0_80 = arith.constant 0 : index
    %455 = vector.load %arg4[%c32_79, %c0_80] : memref<40x384xf32, #tpu.memory_space<vmem>>, vector<8x384xf32>
    %456 = vector.extract_strided_slice %455 {offsets = [0, 0], sizes = [1, 384], strides = [1, 1]} : vector<8x384xf32> to vector<1x384xf32>
    %457 = vector.extract_strided_slice %455 {offsets = [1, 256], sizes = [1, 16], strides = [1, 1]} : vector<8x384xf32> to vector<1x16xf32>
    %458 = vector.shape_cast %457 : vector<1x16xf32> to vector<1x16xf32>
    %459 = vector.broadcast %458 : vector<1x16xf32> to vector<8x16xf32>
    %cst_81 = arith.constant dense<0.000000e+00> : vector<64x384xf32>
    %460 = tpu.matmul %452, %453, %cst_81 {dimension_numbers = #tpu.dot_dimension_numbers<[1], [0], [0], [1], [0, 0, 1, 1], [], []>} : vector<64x16xf32>, vector<16x384xf32>, vector<64x384xf32> -> vector<64x384xf32>
    %461 = vector.broadcast %456 : vector<1x384xf32> to vector<64x384xf32>
    %462 = arith.addf %460, %461 : vector<64x384xf32>
    %463 = vector.extract_strided_slice %462 {offsets = [0, 0], sizes = [8, 16], strides = [1, 1]} : vector<64x384xf32> to vector<8x16xf32>
    %464 = vector.extract_strided_slice %462 {offsets = [0, 128], sizes = [8, 16], strides = [1, 1]} : vector<64x384xf32> to vector<8x16xf32>
    %465 = vector.extract_strided_slice %462 {offsets = [0, 256], sizes = [8, 16], strides = [1, 1]} : vector<64x384xf32> to vector<8x16xf32>
    %466 = arith.negf %463 : vector<8x16xf32>
    %467 = math.exp %466 : vector<8x16xf32>
    %cst_82 = arith.constant 1.000000e+00 : f32
    %468 = vector.broadcast %cst_82 : f32 to vector<8x16xf32>
    %469 = arith.addf %468, %467 : vector<8x16xf32>
    %470 = arith.divf %468, %469 : vector<8x16xf32>
    %471 = arith.negf %464 : vector<8x16xf32>
    %472 = math.exp %471 : vector<8x16xf32>
    %cst_83 = arith.constant 1.000000e+00 : f32
    %473 = vector.broadcast %cst_83 : f32 to vector<8x16xf32>
    %474 = arith.addf %473, %472 : vector<8x16xf32>
    %475 = arith.divf %473, %474 : vector<8x16xf32>
    %476 = arith.mulf %470, %459 : vector<8x16xf32>
    %477 = arith.addf %465, %476 : vector<8x16xf32>
    %478 = math.tanh %477 : vector<8x16xf32>
    %479 = arith.mulf %475, %478 : vector<8x16xf32>
    %480 = arith.subf %478, %479 : vector<8x16xf32>
    %481 = vector.extract_strided_slice %462 {offsets = [8, 0], sizes = [8, 16], strides = [1, 1]} : vector<64x384xf32> to vector<8x16xf32>
    %482 = vector.extract_strided_slice %462 {offsets = [8, 128], sizes = [8, 16], strides = [1, 1]} : vector<64x384xf32> to vector<8x16xf32>
    %483 = vector.extract_strided_slice %462 {offsets = [8, 256], sizes = [8, 16], strides = [1, 1]} : vector<64x384xf32> to vector<8x16xf32>
    %cst_84 = arith.constant dense<0.000000e+00> : vector<8x384xf32>
    %484 = tpu.matmul %480, %454, %cst_84 {dimension_numbers = #tpu.dot_dimension_numbers<[1], [0], [0], [1], [0, 0, 1, 1], [], []>} : vector<8x16xf32>, vector<16x384xf32>, vector<8x384xf32> -> vector<8x384xf32>
    %485 = vector.extract_strided_slice %484 {offsets = [0, 0], sizes = [8, 16], strides = [1, 1]} : vector<8x384xf32> to vector<8x16xf32>
    %486 = arith.addf %481, %485 : vector<8x16xf32>
    %487 = arith.negf %486 : vector<8x16xf32>
    %488 = math.exp %487 : vector<8x16xf32>
    %cst_85 = arith.constant 1.000000e+00 : f32
    %489 = vector.broadcast %cst_85 : f32 to vector<8x16xf32>
    %490 = arith.addf %489, %488 : vector<8x16xf32>
    %491 = arith.divf %489, %490 : vector<8x16xf32>
    %492 = vector.extract_strided_slice %484 {offsets = [0, 128], sizes = [8, 16], strides = [1, 1]} : vector<8x384xf32> to vector<8x16xf32>
    %493 = arith.addf %482, %492 : vector<8x16xf32>
    %494 = arith.negf %493 : vector<8x16xf32>
    %495 = math.exp %494 : vector<8x16xf32>
    %cst_86 = arith.constant 1.000000e+00 : f32
    %496 = vector.broadcast %cst_86 : f32 to vector<8x16xf32>
    %497 = arith.addf %496, %495 : vector<8x16xf32>
    %498 = arith.divf %496, %497 : vector<8x16xf32>
    %499 = vector.extract_strided_slice %484 {offsets = [0, 256], sizes = [8, 16], strides = [1, 1]} : vector<8x384xf32> to vector<8x16xf32>
    %500 = arith.addf %499, %459 : vector<8x16xf32>
    %501 = arith.mulf %491, %500 : vector<8x16xf32>
    %502 = arith.addf %483, %501 : vector<8x16xf32>
    %503 = math.tanh %502 : vector<8x16xf32>
    %504 = arith.subf %480, %503 : vector<8x16xf32>
    %505 = arith.mulf %498, %504 : vector<8x16xf32>
    %506 = arith.addf %505, %503 : vector<8x16xf32>
    %507 = vector.extract_strided_slice %462 {offsets = [16, 0], sizes = [8, 16], strides = [1, 1]} : vector<64x384xf32> to vector<8x16xf32>
    %508 = vector.extract_strided_slice %462 {offsets = [16, 128], sizes = [8, 16], strides = [1, 1]} : vector<64x384xf32> to vector<8x16xf32>
    %509 = vector.extract_strided_slice %462 {offsets = [16, 256], sizes = [8, 16], strides = [1, 1]} : vector<64x384xf32> to vector<8x16xf32>
    %cst_87 = arith.constant dense<0.000000e+00> : vector<8x384xf32>
    %510 = tpu.matmul %506, %454, %cst_87 {dimension_numbers = #tpu.dot_dimension_numbers<[1], [0], [0], [1], [0, 0, 1, 1], [], []>} : vector<8x16xf32>, vector<16x384xf32>, vector<8x384xf32> -> vector<8x384xf32>
    %511 = vector.extract_strided_slice %510 {offsets = [0, 0], sizes = [8, 16], strides = [1, 1]} : vector<8x384xf32> to vector<8x16xf32>
    %512 = arith.addf %507, %511 : vector<8x16xf32>
    %513 = arith.negf %512 : vector<8x16xf32>
    %514 = math.exp %513 : vector<8x16xf32>
    %cst_88 = arith.constant 1.000000e+00 : f32
    %515 = vector.broadcast %cst_88 : f32 to vector<8x16xf32>
    %516 = arith.addf %515, %514 : vector<8x16xf32>
    %517 = arith.divf %515, %516 : vector<8x16xf32>
    %518 = vector.extract_strided_slice %510 {offsets = [0, 128], sizes = [8, 16], strides = [1, 1]} : vector<8x384xf32> to vector<8x16xf32>
    %519 = arith.addf %508, %518 : vector<8x16xf32>
    %520 = arith.negf %519 : vector<8x16xf32>
    %521 = math.exp %520 : vector<8x16xf32>
    %cst_89 = arith.constant 1.000000e+00 : f32
    %522 = vector.broadcast %cst_89 : f32 to vector<8x16xf32>
    %523 = arith.addf %522, %521 : vector<8x16xf32>
    %524 = arith.divf %522, %523 : vector<8x16xf32>
    %525 = vector.extract_strided_slice %510 {offsets = [0, 256], sizes = [8, 16], strides = [1, 1]} : vector<8x384xf32> to vector<8x16xf32>
    %526 = arith.addf %525, %459 : vector<8x16xf32>
    %527 = arith.mulf %517, %526 : vector<8x16xf32>
    %528 = arith.addf %509, %527 : vector<8x16xf32>
    %529 = math.tanh %528 : vector<8x16xf32>
    %530 = arith.subf %506, %529 : vector<8x16xf32>
    %531 = arith.mulf %524, %530 : vector<8x16xf32>
    %532 = arith.addf %531, %529 : vector<8x16xf32>
    %533 = vector.extract_strided_slice %462 {offsets = [24, 0], sizes = [8, 16], strides = [1, 1]} : vector<64x384xf32> to vector<8x16xf32>
    %534 = vector.extract_strided_slice %462 {offsets = [24, 128], sizes = [8, 16], strides = [1, 1]} : vector<64x384xf32> to vector<8x16xf32>
    %535 = vector.extract_strided_slice %462 {offsets = [24, 256], sizes = [8, 16], strides = [1, 1]} : vector<64x384xf32> to vector<8x16xf32>
    %cst_90 = arith.constant dense<0.000000e+00> : vector<8x384xf32>
    %536 = tpu.matmul %532, %454, %cst_90 {dimension_numbers = #tpu.dot_dimension_numbers<[1], [0], [0], [1], [0, 0, 1, 1], [], []>} : vector<8x16xf32>, vector<16x384xf32>, vector<8x384xf32> -> vector<8x384xf32>
    %537 = vector.extract_strided_slice %536 {offsets = [0, 0], sizes = [8, 16], strides = [1, 1]} : vector<8x384xf32> to vector<8x16xf32>
    %538 = arith.addf %533, %537 : vector<8x16xf32>
    %539 = arith.negf %538 : vector<8x16xf32>
    %540 = math.exp %539 : vector<8x16xf32>
    %cst_91 = arith.constant 1.000000e+00 : f32
    %541 = vector.broadcast %cst_91 : f32 to vector<8x16xf32>
    %542 = arith.addf %541, %540 : vector<8x16xf32>
    %543 = arith.divf %541, %542 : vector<8x16xf32>
    %544 = vector.extract_strided_slice %536 {offsets = [0, 128], sizes = [8, 16], strides = [1, 1]} : vector<8x384xf32> to vector<8x16xf32>
    %545 = arith.addf %534, %544 : vector<8x16xf32>
    %546 = arith.negf %545 : vector<8x16xf32>
    %547 = math.exp %546 : vector<8x16xf32>
    %cst_92 = arith.constant 1.000000e+00 : f32
    %548 = vector.broadcast %cst_92 : f32 to vector<8x16xf32>
    %549 = arith.addf %548, %547 : vector<8x16xf32>
    %550 = arith.divf %548, %549 : vector<8x16xf32>
    %551 = vector.extract_strided_slice %536 {offsets = [0, 256], sizes = [8, 16], strides = [1, 1]} : vector<8x384xf32> to vector<8x16xf32>
    %552 = arith.addf %551, %459 : vector<8x16xf32>
    %553 = arith.mulf %543, %552 : vector<8x16xf32>
    %554 = arith.addf %535, %553 : vector<8x16xf32>
    %555 = math.tanh %554 : vector<8x16xf32>
    %556 = arith.subf %532, %555 : vector<8x16xf32>
    %557 = arith.mulf %550, %556 : vector<8x16xf32>
    %558 = arith.addf %557, %555 : vector<8x16xf32>
    %559 = vector.extract_strided_slice %462 {offsets = [32, 0], sizes = [8, 16], strides = [1, 1]} : vector<64x384xf32> to vector<8x16xf32>
    %560 = vector.extract_strided_slice %462 {offsets = [32, 128], sizes = [8, 16], strides = [1, 1]} : vector<64x384xf32> to vector<8x16xf32>
    %561 = vector.extract_strided_slice %462 {offsets = [32, 256], sizes = [8, 16], strides = [1, 1]} : vector<64x384xf32> to vector<8x16xf32>
    %cst_93 = arith.constant dense<0.000000e+00> : vector<8x384xf32>
    %562 = tpu.matmul %558, %454, %cst_93 {dimension_numbers = #tpu.dot_dimension_numbers<[1], [0], [0], [1], [0, 0, 1, 1], [], []>} : vector<8x16xf32>, vector<16x384xf32>, vector<8x384xf32> -> vector<8x384xf32>
    %563 = vector.extract_strided_slice %562 {offsets = [0, 0], sizes = [8, 16], strides = [1, 1]} : vector<8x384xf32> to vector<8x16xf32>
    %564 = arith.addf %559, %563 : vector<8x16xf32>
    %565 = arith.negf %564 : vector<8x16xf32>
    %566 = math.exp %565 : vector<8x16xf32>
    %cst_94 = arith.constant 1.000000e+00 : f32
    %567 = vector.broadcast %cst_94 : f32 to vector<8x16xf32>
    %568 = arith.addf %567, %566 : vector<8x16xf32>
    %569 = arith.divf %567, %568 : vector<8x16xf32>
    %570 = vector.extract_strided_slice %562 {offsets = [0, 128], sizes = [8, 16], strides = [1, 1]} : vector<8x384xf32> to vector<8x16xf32>
    %571 = arith.addf %560, %570 : vector<8x16xf32>
    %572 = arith.negf %571 : vector<8x16xf32>
    %573 = math.exp %572 : vector<8x16xf32>
    %cst_95 = arith.constant 1.000000e+00 : f32
    %574 = vector.broadcast %cst_95 : f32 to vector<8x16xf32>
    %575 = arith.addf %574, %573 : vector<8x16xf32>
    %576 = arith.divf %574, %575 : vector<8x16xf32>
    %577 = vector.extract_strided_slice %562 {offsets = [0, 256], sizes = [8, 16], strides = [1, 1]} : vector<8x384xf32> to vector<8x16xf32>
    %578 = arith.addf %577, %459 : vector<8x16xf32>
    %579 = arith.mulf %569, %578 : vector<8x16xf32>
    %580 = arith.addf %561, %579 : vector<8x16xf32>
    %581 = math.tanh %580 : vector<8x16xf32>
    %582 = arith.subf %558, %581 : vector<8x16xf32>
    %583 = arith.mulf %576, %582 : vector<8x16xf32>
    %584 = arith.addf %583, %581 : vector<8x16xf32>
    %585 = vector.extract_strided_slice %462 {offsets = [40, 0], sizes = [8, 16], strides = [1, 1]} : vector<64x384xf32> to vector<8x16xf32>
    %586 = vector.extract_strided_slice %462 {offsets = [40, 128], sizes = [8, 16], strides = [1, 1]} : vector<64x384xf32> to vector<8x16xf32>
    %587 = vector.extract_strided_slice %462 {offsets = [40, 256], sizes = [8, 16], strides = [1, 1]} : vector<64x384xf32> to vector<8x16xf32>
    %cst_96 = arith.constant dense<0.000000e+00> : vector<8x384xf32>
    %588 = tpu.matmul %584, %454, %cst_96 {dimension_numbers = #tpu.dot_dimension_numbers<[1], [0], [0], [1], [0, 0, 1, 1], [], []>} : vector<8x16xf32>, vector<16x384xf32>, vector<8x384xf32> -> vector<8x384xf32>
    %589 = vector.extract_strided_slice %588 {offsets = [0, 0], sizes = [8, 16], strides = [1, 1]} : vector<8x384xf32> to vector<8x16xf32>
    %590 = arith.addf %585, %589 : vector<8x16xf32>
    %591 = arith.negf %590 : vector<8x16xf32>
    %592 = math.exp %591 : vector<8x16xf32>
    %cst_97 = arith.constant 1.000000e+00 : f32
    %593 = vector.broadcast %cst_97 : f32 to vector<8x16xf32>
    %594 = arith.addf %593, %592 : vector<8x16xf32>
    %595 = arith.divf %593, %594 : vector<8x16xf32>
    %596 = vector.extract_strided_slice %588 {offsets = [0, 128], sizes = [8, 16], strides = [1, 1]} : vector<8x384xf32> to vector<8x16xf32>
    %597 = arith.addf %586, %596 : vector<8x16xf32>
    %598 = arith.negf %597 : vector<8x16xf32>
    %599 = math.exp %598 : vector<8x16xf32>
    %cst_98 = arith.constant 1.000000e+00 : f32
    %600 = vector.broadcast %cst_98 : f32 to vector<8x16xf32>
    %601 = arith.addf %600, %599 : vector<8x16xf32>
    %602 = arith.divf %600, %601 : vector<8x16xf32>
    %603 = vector.extract_strided_slice %588 {offsets = [0, 256], sizes = [8, 16], strides = [1, 1]} : vector<8x384xf32> to vector<8x16xf32>
    %604 = arith.addf %603, %459 : vector<8x16xf32>
    %605 = arith.mulf %595, %604 : vector<8x16xf32>
    %606 = arith.addf %587, %605 : vector<8x16xf32>
    %607 = math.tanh %606 : vector<8x16xf32>
    %608 = arith.subf %584, %607 : vector<8x16xf32>
    %609 = arith.mulf %602, %608 : vector<8x16xf32>
    %610 = arith.addf %609, %607 : vector<8x16xf32>
    %611 = vector.extract_strided_slice %462 {offsets = [48, 0], sizes = [8, 16], strides = [1, 1]} : vector<64x384xf32> to vector<8x16xf32>
    %612 = vector.extract_strided_slice %462 {offsets = [48, 128], sizes = [8, 16], strides = [1, 1]} : vector<64x384xf32> to vector<8x16xf32>
    %613 = vector.extract_strided_slice %462 {offsets = [48, 256], sizes = [8, 16], strides = [1, 1]} : vector<64x384xf32> to vector<8x16xf32>
    %cst_99 = arith.constant dense<0.000000e+00> : vector<8x384xf32>
    %614 = tpu.matmul %610, %454, %cst_99 {dimension_numbers = #tpu.dot_dimension_numbers<[1], [0], [0], [1], [0, 0, 1, 1], [], []>} : vector<8x16xf32>, vector<16x384xf32>, vector<8x384xf32> -> vector<8x384xf32>
    %615 = vector.extract_strided_slice %614 {offsets = [0, 0], sizes = [8, 16], strides = [1, 1]} : vector<8x384xf32> to vector<8x16xf32>
    %616 = arith.addf %611, %615 : vector<8x16xf32>
    %617 = arith.negf %616 : vector<8x16xf32>
    %618 = math.exp %617 : vector<8x16xf32>
    %cst_100 = arith.constant 1.000000e+00 : f32
    %619 = vector.broadcast %cst_100 : f32 to vector<8x16xf32>
    %620 = arith.addf %619, %618 : vector<8x16xf32>
    %621 = arith.divf %619, %620 : vector<8x16xf32>
    %622 = vector.extract_strided_slice %614 {offsets = [0, 128], sizes = [8, 16], strides = [1, 1]} : vector<8x384xf32> to vector<8x16xf32>
    %623 = arith.addf %612, %622 : vector<8x16xf32>
    %624 = arith.negf %623 : vector<8x16xf32>
    %625 = math.exp %624 : vector<8x16xf32>
    %cst_101 = arith.constant 1.000000e+00 : f32
    %626 = vector.broadcast %cst_101 : f32 to vector<8x16xf32>
    %627 = arith.addf %626, %625 : vector<8x16xf32>
    %628 = arith.divf %626, %627 : vector<8x16xf32>
    %629 = vector.extract_strided_slice %614 {offsets = [0, 256], sizes = [8, 16], strides = [1, 1]} : vector<8x384xf32> to vector<8x16xf32>
    %630 = arith.addf %629, %459 : vector<8x16xf32>
    %631 = arith.mulf %621, %630 : vector<8x16xf32>
    %632 = arith.addf %613, %631 : vector<8x16xf32>
    %633 = math.tanh %632 : vector<8x16xf32>
    %634 = arith.subf %610, %633 : vector<8x16xf32>
    %635 = arith.mulf %628, %634 : vector<8x16xf32>
    %636 = arith.addf %635, %633 : vector<8x16xf32>
    %637 = vector.extract_strided_slice %462 {offsets = [56, 0], sizes = [8, 16], strides = [1, 1]} : vector<64x384xf32> to vector<8x16xf32>
    %638 = vector.extract_strided_slice %462 {offsets = [56, 128], sizes = [8, 16], strides = [1, 1]} : vector<64x384xf32> to vector<8x16xf32>
    %639 = vector.extract_strided_slice %462 {offsets = [56, 256], sizes = [8, 16], strides = [1, 1]} : vector<64x384xf32> to vector<8x16xf32>
    %cst_102 = arith.constant dense<0.000000e+00> : vector<8x384xf32>
    %640 = tpu.matmul %636, %454, %cst_102 {dimension_numbers = #tpu.dot_dimension_numbers<[1], [0], [0], [1], [0, 0, 1, 1], [], []>} : vector<8x16xf32>, vector<16x384xf32>, vector<8x384xf32> -> vector<8x384xf32>
    %641 = vector.extract_strided_slice %640 {offsets = [0, 0], sizes = [8, 16], strides = [1, 1]} : vector<8x384xf32> to vector<8x16xf32>
    %642 = arith.addf %637, %641 : vector<8x16xf32>
    %643 = arith.negf %642 : vector<8x16xf32>
    %644 = math.exp %643 : vector<8x16xf32>
    %cst_103 = arith.constant 1.000000e+00 : f32
    %645 = vector.broadcast %cst_103 : f32 to vector<8x16xf32>
    %646 = arith.addf %645, %644 : vector<8x16xf32>
    %647 = arith.divf %645, %646 : vector<8x16xf32>
    %648 = vector.extract_strided_slice %640 {offsets = [0, 128], sizes = [8, 16], strides = [1, 1]} : vector<8x384xf32> to vector<8x16xf32>
    %649 = arith.addf %638, %648 : vector<8x16xf32>
    %650 = arith.negf %649 : vector<8x16xf32>
    %651 = math.exp %650 : vector<8x16xf32>
    %cst_104 = arith.constant 1.000000e+00 : f32
    %652 = vector.broadcast %cst_104 : f32 to vector<8x16xf32>
    %653 = arith.addf %652, %651 : vector<8x16xf32>
    %654 = arith.divf %652, %653 : vector<8x16xf32>
    %655 = vector.extract_strided_slice %640 {offsets = [0, 256], sizes = [8, 16], strides = [1, 1]} : vector<8x384xf32> to vector<8x16xf32>
    %656 = arith.addf %655, %459 : vector<8x16xf32>
    %657 = arith.mulf %647, %656 : vector<8x16xf32>
    %658 = arith.addf %639, %657 : vector<8x16xf32>
    %659 = math.tanh %658 : vector<8x16xf32>
    %660 = arith.subf %636, %659 : vector<8x16xf32>
    %661 = arith.mulf %654, %660 : vector<8x16xf32>
    %662 = arith.addf %661, %659 : vector<8x16xf32>
    %663 = tpu.concatenate %480, %506, %532, %558, %584, %610, %636, %662 in 0 : vector<8x16xf32>, vector<8x16xf32>, vector<8x16xf32>, vector<8x16xf32>, vector<8x16xf32>, vector<8x16xf32>, vector<8x16xf32>, vector<8x16xf32> -> vector<64x16xf32>
    %cst_105 = arith.constant dense<0.000000e+00> : vector<64x32xf32>
    %664 = tpu.matmul %663, %429, %cst_105 {dimension_numbers = #tpu.dot_dimension_numbers<[1], [0], [0], [1], [0, 0, 1, 1], [], []>} : vector<64x16xf32>, vector<16x32xf32>, vector<64x32xf32> -> vector<64x32xf32>
    %665 = vector.extract_strided_slice %423 {offsets = [3, 0], sizes = [1, 32], strides = [1, 1]} : vector<8x32xf32> to vector<1x32xf32>
    %666 = vector.broadcast %665 : vector<1x32xf32> to vector<64x32xf32>
    %667 = arith.addf %664, %666 : vector<64x32xf32>
    %cst_106 = arith.constant 0.000000e+00 : f32
    %668 = vector.broadcast %cst_106 : f32 to vector<64x32xf32>
    %669 = arith.maximumf %667, %668 : vector<64x32xf32>
    %cst_107 = arith.constant dense<0.000000e+00> : vector<64x8xf32>
    %670 = tpu.matmul %669, %430, %cst_107 {dimension_numbers = #tpu.dot_dimension_numbers<[1], [0], [0], [1], [0, 0, 1, 1], [], []>} : vector<64x32xf32>, vector<32x8xf32>, vector<64x8xf32> -> vector<64x8xf32>
    %671 = vector.extract_strided_slice %423 {offsets = [4, 0], sizes = [1, 8], strides = [1, 1]} : vector<8x32xf32> to vector<1x8xf32>
    %672 = vector.broadcast %671 : vector<1x8xf32> to vector<64x8xf32>
    %673 = arith.addf %670, %672 : vector<64x8xf32>
    %674 = tpu.concatenate %436, %442, %673 in 1 : vector<64x8xf32>, vector<64x8xf32>, vector<64x8xf32> -> vector<64x24xf32>
    %c0_108 = arith.constant 0 : index
    %c0_109 = arith.constant 0 : index
    %675 = vector.load %arg6[%c0_108, %c0_109] : memref<64x24xf32, #tpu.memory_space<vmem>>, vector<64x24xf32>
    tpu.vector_store %arg6[%c0_108, %c0_109], %674 {strides = array<i32>} : memref<64x24xf32, #tpu.memory_space<vmem>>, vector<64x24xf32>,
    return
  }
}

</mosaic_0001>

<llo_original>
// kernel: vcd_forward.1
$region0: #{vcd_forward.1}
  #allocation0 [shape = 'u32[]', space=smem, size = 0x4, offset = 0x4, fixed_abs, tag = 'smem constant byte address 0x4 - core index']
  #allocation1 [shape = 'u32[144,128]{1,0:T(1,128)}', space=vmem, size = 0x12000, scoped, tag = 'internal scratch']
  %s0 = inlined_call_operand.vmem [shape: f32[64,8], index: 0, kind: input, shape index: {}]
  %s1 = inlined_call_operand.vmem [shape: f32[64,8], index: 1, kind: input, shape index: {}]
  %s2 = inlined_call_operand.vmem [shape: f32[32,384], index: 2, kind: input, shape index: {}]
  %s3 = inlined_call_operand.vmem [shape: f32[32,384], index: 3, kind: input, shape index: {}]
  %s4 = inlined_call_operand.vmem [shape: f32[40,384], index: 4, kind: input, shape index: {}]
  %s5 = inlined_call_operand.vmem [shape: f32[128,32], index: 5, kind: input, shape index: {}]
  %s6 = inlined_call_operand.vmem [shape: f32[64,24], index: 6, kind: output, shape index: {}]
  %s7 = sld [smem:[#allocation0]]
  $region34: #{vcd_forward.1} parent=0
    _
  %s9 = ssub.s32 1, %s7
  %s10 = scalar_select 0, %s9, %s7
  // Predicated region
  $region2: #{vcd_forward.1} parent=0 // pred_check
    _
  $region3: #{vcd_forward.1} parent=0 // pred_check_branch
    %12 = sbr.rel (0) target = $region5
  $region4: #{vcd_forward.1} parent=0 // pred_region
    _
  $region5: #{vcd_forward.1} parent=0 // pred_fallthru
    _
  // Predicated region
  $region6: #{vcd_forward.1} parent=0 // pred_check
    _
  $region7: #{vcd_forward.1} parent=0 // pred_check_branch
    %14 = sbr.rel (0) target = $region9
  $region8: #{vcd_forward.1} parent=0 // pred_region
    _
  $region9: #{vcd_forward.1} parent=0 // pred_fallthru
    _
  // Predicated region
  $region10: #{vcd_forward.1} parent=0 // pred_check
    _
  $region11: #{vcd_forward.1} parent=0 // pred_check_branch
    %16 = sbr.rel (0) target = $region13
  $region12: #{vcd_forward.1} parent=0 // pred_region
    _
  $region13: #{vcd_forward.1} parent=0 // pred_fallthru
    _
  // Predicated region
  $region14: #{vcd_forward.1} parent=0 // pred_check
    _
  $region15: #{vcd_forward.1} parent=0 // pred_check_branch
    %18 = sbr.rel (0) target = $region17
  $region16: #{vcd_forward.1} parent=0 // pred_region
    _
  $region17: #{vcd_forward.1} parent=0 // pred_fallthru
    _
  // Predicated region
  $region18: #{vcd_forward.1} parent=0 // pred_check
    _
  $region19: #{vcd_forward.1} parent=0 // pred_check_branch
    %20 = sbr.rel (0) target = $region21
  $region20: #{vcd_forward.1} parent=0 // pred_region
    _
  $region21: #{vcd_forward.1} parent=0 // pred_fallthru
    _
  // Predicated region
  $region22: #{vcd_forward.1} parent=0 // pred_check
    _
  $region23: #{vcd_forward.1} parent=0 // pred_check_branch
    %22 = sbr.rel (0) target = $region25
  $region24: #{vcd_forward.1} parent=0 // pred_region
    _
  $region25: #{vcd_forward.1} parent=0 // pred_fallthru
    _
  %v23 = vld [vmem:[%s0] sm:$0xff]
  %v24 = vld [vmem:[%s0 + $0x8] sm:$0xff]
  %v25 = vld [vmem:[%s0 + $0x10] sm:$0xff]
  %v26 = vld [vmem:[%s0 + $0x18] sm:$0xff]
  %v27 = vld [vmem:[%s0 + $0x20] sm:$0xff]
  %v28 = vld [vmem:[%s0 + $0x28] sm:$0xff]
  %v29 = vld [vmem:[%s0 + $0x30] sm:$0xff]
  %v30 = vld [vmem:[%s0 + $0x38] sm:$0xff]
  %v31 = vld [vmem:[%s2] sm:$0xff]
  %v32 = vld [vmem:[%s2 + $0x8] sm:$0xff]
  %v33 = vld [vmem:[%s2 + $0x10] sm:$0xff]
  %v34 = vld [vmem:[%s2 + $0x18] sm:$0xff]
  %v35 = vld [vmem:[%s2 + $0x20] sm:$0xff]
  %v36 = vld [vmem:[%s2 + $0x28] sm:$0xff]
  %v37 = vld [vmem:[%s2 + $0x30] sm:$0xff]
  %v38 = vld [vmem:[%s2 + $0x38] sm:$0xff]
  %v39 = vld [vmem:[%s2 + $0x40] sm:$0xff]
  %v40 = vld [vmem:[%s2 + $0x48] sm:$0xff]
  %v41 = vld [vmem:[%s2 + $0x50] sm:$0xff]
  %v42 = vld [vmem:[%s2 + $0x58] sm:$0xff]
  %v43 = vlaneseq
  %v44 = vshrl.u32 %v43, 7
  %v45 = vsub.s32 1, %v44
  %v46 = vrot.slane %v42, %v45
  %v47 = vlaneseq
  %v48 = vshrl.u32 %v47, 7
  %v49 = vsub.s32 0, %v48
  %v50 = vrot.slane %v40, %v49
  %v51 = vlaneseq
  %v52 = vshrl.u32 %v51, 7
  %v53 = vsub.s32 0, %v52
  %v54 = vrot.slane %v41, %v53
  %v55 = vlaneseq
  %v56 = vshrl.u32 %v55, 7
  %v57 = vsub.s32 0, %v56
  %v58 = vrot.slane %v42, %v57
  %vm59 = vcmask 64512
  %v61 = vsel %vm59, %v23, 0
  %v64 = vsel %vm59, %v24, 0
  %v67 = vsel %vm59, %v25, 0
  %v70 = vsel %vm59, %v26, 0
  %v73 = vsel %vm59, %v27, 0
  %v76 = vsel %vm59, %v28, 0
  %v79 = vsel %vm59, %v29, 0
  %v82 = vsel %vm59, %v30, 0
  %84 = vmatprep.subr.mxu0 %v32
  %85 = vmatpush1.msra.mxu0 %v31
  %86 = vmatprep.subr.mxu0 0.0
  %87 = vmatpush1.msra.mxu0 0.0
  %88 = vmatprep.subr.mxu0 0.0
  %89 = vmatpush1.msra.mxu0 0.0
  %90 = vmatprep.subr.mxu0 0.0
  %91 = vmatpush1.msra.mxu0 0.0
  %92 = vmatprep.subr.mxu0 0.0
  %93 = vmatpush1.msra.mxu0 0.0
  %94 = vmatprep.subr.mxu0 0.0
  %95 = vmatpush1.msra.mxu0 0.0
  %96 = vmatprep.subr.mxu0 0.0
  %97 = vmatpush1.msra.mxu0 0.0
  %98 = vmatprep.subr.mxu0 0.0
  %99 = vmatpush1.msra.mxu0 0.0
  %100 = vmatprep.subr.mxu0 0.0
  %101 = vmatpush1.msra.mxu0 0.0
  %102 = vmatprep.subr.mxu0 0.0
  %103 = vmatpush1.msra.mxu0 0.0
  %104 = vmatprep.subr.mxu0 0.0
  %105 = vmatpush1.msra.mxu0 0.0
  %106 = vmatprep.subr.mxu0 0.0
  %107 = vmatpush1.msra.mxu0 0.0
  %108 = vmatprep.subr.mxu0 0.0
  %109 = vmatpush1.msra.mxu0 0.0
  %110 = vmatprep.subr.mxu0 0.0
  %111 = vmatpush1.msra.mxu0 0.0
  %112 = vmatprep.subr.mxu0 0.0
  %113 = vmatpush1.msra.mxu0 0.0
  %114 = vmatprep.subr.mxu0 0.0
  %115 = vmatpush1.msra.mxu0 0.0
  %116 = vmatprep.subr.mxu0 0.0
  %117 = vmatpush1.msra.mxu0 0.0
  %118 = vmatprep.subr.mxu0 0.0
  %119 = vmatpush1.msra.mxu0 0.0
  %120 = vmatprep.subr.mxu0 0.0
  %121 = vmatpush1.msra.mxu0 0.0
  %122 = vmatprep.subr.mxu0 0.0
  %123 = vmatpush1.msra.mxu0 0.0
  %124 = vmatprep.subr.mxu0 0.0
  %125 = vmatpush1.msra.mxu0 0.0
  %126 = vmatprep.subr.mxu0 0.0
  %127 = vmatpush1.msra.mxu0 0.0
  %128 = vmatprep.subr.mxu0 0.0
  %129 = vmatpush1.msra.mxu0 0.0
  %130 = vmatprep.subr.mxu0 0.0
  %131 = vmatpush1.msra.mxu0 0.0
  %132 = vmatprep.subr.mxu0 0.0
  %133 = vmatpush1.msra.mxu0 0.0
  %134 = vmatprep.subr.mxu0 0.0
  %135 = vmatpush1.msra.mxu0 0.0
  %136 = vmatprep.subr.mxu0 0.0
  %137 = vmatpush1.msra.mxu0 0.0
  %138 = vmatprep.subr.mxu0 0.0
  %139 = vmatpush1.msra.mxu0 0.0
  %140 = vmatprep.subr.mxu0 0.0
  %141 = vmatpush1.msra.mxu0 0.0
  %142 = vmatprep.subr.mxu0 0.0
  %143 = vmatpush1.msra.mxu0 0.0
  %144 = vmatprep.subr.mxu0 0.0
  %145 = vmatpush1.msra.mxu0 0.0
  %146 = vmatprep.subr.mxu0 0.0
  %147 = vmatpush1.msra.mxu0 0.0
  %148 = vmatprep.mubr.f32.mxu0 0.0
  %149 = vmatmul.mubr.f32.gmra.mrb[0].mxu0 %v61
  %v150 = vpop.f32.mrb[0].mxu0
  %v151 = vadd.f32 %v50, %v150
  %v152 = vpop.f32.mrb[0].mxu0
  %v153 = vadd.f32 %v54, %v152
  %154 = vmatprep.mubr.f32.mxu0 0.0
  %155 = vmatmul.mubr.f32.gmra.mrb[0].mxu0 %v64
  %v156 = vpop.f32.mrb[0].mxu0
  %v157 = vadd.f32 %v50, %v156
  %v158 = vpop.f32.mrb[0].mxu0
  %v159 = vadd.f32 %v54, %v158
  %160 = vmatprep.mubr.f32.mxu0 0.0
  %161 = vmatmul.mubr.f32.gmra.mrb[0].mxu0 %v67
  %v162 = vpop.f32.mrb[0].mxu0
  %v163 = vadd.f32 %v50, %v162
  %v164 = vpop.f32.mrb[0].mxu0
  %v165 = vadd.f32 %v54, %v164
  %166 = vmatprep.mubr.f32.mxu0 0.0
  %167 = vmatmul.mubr.f32.gmra.mrb[0].mxu0 %v70
  %v168 = vpop.f32.mrb[0].mxu0
  %v169 = vadd.f32 %v50, %v168
  %v170 = vpop.f32.mrb[0].mxu0
  %v171 = vadd.f32 %v54, %v170
  %172 = vmatprep.mubr.f32.mxu0 0.0
  %173 = vmatmul.mubr.f32.gmra.mrb[0].mxu0 %v73
  %v174 = vpop.f32.mrb[0].mxu0
  %v175 = vadd.f32 %v50, %v174
  %v176 = vpop.f32.mrb[0].mxu0
  %v177 = vadd.f32 %v54, %v176
  %178 = vmatprep.mubr.f32.mxu0 0.0
  %179 = vmatmul.mubr.f32.gmra.mrb[0].mxu0 %v76
  %v180 = vpop.f32.mrb[0].mxu0
  %v181 = vadd.f32 %v50, %v180
  %v182 = vpop.f32.mrb[0].mxu0
  %v183 = vadd.f32 %v54, %v182
  %184 = vmatprep.mubr.f32.mxu0 0.0
  %185 = vmatmul.mubr.f32.gmra.mrb[0].mxu0 %v79
  %v186 = vpop.f32.mrb[0].mxu0
  %v187 = vadd.f32 %v50, %v186
  %v188 = vpop.f32.mrb[0].mxu0
  %v189 = vadd.f32 %v54, %v188
  %190 = vmatprep.mubr.f32.mxu0 0.0
  %191 = vmatmul.mubr.f32.gmra.mrb[0].mxu0 %v82
  %v192 = vpop.f32.mrb[0].mxu0
  %v193 = vadd.f32 %v50, %v192
  %v194 = vpop.f32.mrb[0].mxu0
  %v195 = vadd.f32 %v54, %v194
  %196 = vdwg.mxu0
  %197 = vmatprep.subr.mxu0 0.0
  %198 = vmatpush1.msra.mxu0 %v33
  %199 = vmatprep.subr.mxu0 0.0
  %200 = vmatpush1.msra.mxu0 0.0
  %201 = vmatprep.subr.mxu0 0.0
  %202 = vmatpush1.msra.mxu0 0.0
  %203 = vmatprep.subr.mxu0 0.0
  %204 = vmatpush1.msra.mxu0 0.0
  %205 = vmatprep.subr.mxu0 0.0
  %206 = vmatpush1.msra.mxu0 0.0
  %207 = vmatprep.subr.mxu0 0.0
  %208 = vmatpush1.msra.mxu0 0.0
  %209 = vmatprep.subr.mxu0 0.0
  %210 = vmatpush1.msra.mxu0 0.0
  %211 = vmatprep.subr.mxu0 0.0
  %212 = vmatpush1.msra.mxu0 0.0
  %213 = vmatprep.subr.mxu0 0.0
  %214 = vmatpush1.msra.mxu0 0.0
  %215 = vmatprep.subr.mxu0 0.0
  %216 = vmatpush1.msra.mxu0 0.0
  %217 = vmatprep.subr.mxu0 0.0
  %218 = vmatpush1.msra.mxu0 0.0
  %219 = vmatprep.subr.mxu0 0.0
  %220 = vmatpush1.msra.mxu0 0.0
  %221 = vmatprep.subr.mxu0 0.0
  %222 = vmatpush1.msra.mxu0 0.0
  %223 = vmatprep.subr.mxu0 0.0
  %224 = vmatpush1.msra.mxu0 0.0
  %225 = vmatprep.subr.mxu0 0.0
  %226 = vmatpush1.msra.mxu0 0.0
  %227 = vmatprep.subr.mxu0 0.0
  %228 = vmatpush1.msra.mxu0 0.0
  %229 = vmatprep.subr.mxu0 0.0
  %230 = vmatpush1.msra.mxu0 0.0
  %231 = vmatprep.subr.mxu0 0.0
  %232 = vmatpush1.msra.mxu0 0.0
  %233 = vmatprep.subr.mxu0 0.0
  %234 = vmatpush1.msra.mxu0 0.0
  %235 = vmatprep.subr.mxu0 0.0
  %236 = vmatpush1.msra.mxu0 0.0
  %237 = vmatprep.subr.mxu0 0.0
  %238 = vmatpush1.msra.mxu0 0.0
  %239 = vmatprep.subr.mxu0 0.0
  %240 = vmatpush1.msra.mxu0 0.0
  %241 = vmatprep.subr.mxu0 0.0
  %242 = vmatpush1.msra.mxu0 0.0
  %243 = vmatprep.subr.mxu0 0.0
  %244 = vmatpush1.msra.mxu0 0.0
  %245 = vmatprep.subr.mxu0 0.0
  %246 = vmatpush1.msra.mxu0 0.0
  %247 = vmatprep.subr.mxu0 0.0
  %248 = vmatpush1.msra.mxu0 0.0
  %249 = vmatprep.subr.mxu0 0.0
  %250 = vmatpush1.msra.mxu0 0.0
  %251 = vmatprep.subr.mxu0 0.0
  %252 = vmatpush1.msra.mxu0 0.0
  %253 = vmatprep.subr.mxu0 0.0
  %254 = vmatpush1.msra.mxu0 0.0
  %255 = vmatprep.subr.mxu0 0.0
  %256 = vmatpush1.msra.mxu0 0.0
  %257 = vmatprep.subr.mxu0 0.0
  %258 = vmatpush1.msra.mxu0 0.0
  %259 = vmatprep.subr.mxu0 0.0
  %260 = vmatpush1.msra.mxu0 0.0
  %261 = vmatprep.mubr.f32.mxu0 0.0
  %262 = vmatmul.mubr.f32.gmra.mrb[0].mxu0 %v61
  %v263 = vpop.f32.mrb[0].mxu0
  %v264 = vadd.f32 %v58, %v263
  %v265 = vpop.f32.mrb[0].mxu0
  %266 = vmatprep.mubr.f32.mxu0 0.0
  %267 = vmatmul.mubr.f32.gmra.mrb[0].mxu0 %v64
  %v268 = vpop.f32.mrb[0].mxu0
  %v269 = vadd.f32 %v58, %v268
  %v270 = vpop.f32.mrb[0].mxu0
  %271 = vmatprep.mubr.f32.mxu0 0.0
  %272 = vmatmul.mubr.f32.gmra.mrb[0].mxu0 %v67
  %v273 = vpop.f32.mrb[0].mxu0
  %v274 = vadd.f32 %v58, %v273
  %v275 = vpop.f32.mrb[0].mxu0
  %276 = vmatprep.mubr.f32.mxu0 0.0
  %277 = vmatmul.mubr.f32.gmra.mrb[0].mxu0 %v70
  %v278 = vpop.f32.mrb[0].mxu0
  %v279 = vadd.f32 %v58, %v278
  %v280 = vpop.f32.mrb[0].mxu0
  %281 = vmatprep.mubr.f32.mxu0 0.0
  %282 = vmatmul.mubr.f32.gmra.mrb[0].mxu0 %v73
  %v283 = vpop.f32.mrb[0].mxu0
  %v284 = vadd.f32 %v58, %v283
  %v285 = vpop.f32.mrb[0].mxu0
  %286 = vmatprep.mubr.f32.mxu0 0.0
  %287 = vmatmul.mubr.f32.gmra.mrb[0].mxu0 %v76
  %v288 = vpop.f32.mrb[0].mxu0
  %v289 = vadd.f32 %v58, %v288
  %v290 = vpop.f32.mrb[0].mxu0
  %291 = vmatprep.mubr.f32.mxu0 0.0
  %292 = vmatmul.mubr.f32.gmra.mrb[0].mxu0 %v79
  %v293 = vpop.f32.mrb[0].mxu0
  %v294 = vadd.f32 %v58, %v293
  %v295 = vpop.f32.mrb[0].mxu0
  %296 = vmatprep.mubr.f32.mxu0 0.0
  %297 = vmatmul.mubr.f32.gmra.mrb[0].mxu0 %v82
  %v298 = vpop.f32.mrb[0].mxu0
  %v299 = vadd.f32 %v58, %v298
  %v300 = vpop.f32.mrb[0].mxu0
  %301 = vdwg.mxu0
  %v302 = vxor.u32 %v151, 2147483648
  %v303 = vmul.f32 %v302, 1.442695
  %v304 = vpow.pop %v303
  %v305 = vadd.f32 %v304, 1.0
  %v306 = vrcp.pop %v305
  %v307 = vmul.f32 1.0, %v306
  %v308 = vxor.u32 %v153, 2147483648
  %v309 = vmul.f32 %v308, 1.442695
  %v310 = vpow.pop %v309
  %v311 = vadd.f32 %v310, 1.0
  %v312 = vrcp.pop %v311
  %v313 = vmul.f32 1.0, %v312
  %v314 = vmul.f32 %v307, %v46
  %v315 = vadd.f32 %v264, %v314
  %v316 = vtanh.pop %v315
  %v317 = vmul.f32 %v313, %v316
  %v318 = vsub.f32 %v316, %v317
  %vm319 = vcmask 130048
  %v321 = vsel %vm319, %v318, 0
  %323 = vmatprep.subr.mxu0 %v35
  %324 = vmatpush1.msra.mxu0 %v34
  %325 = vmatprep.subr.mxu0 %v38
  %326 = vmatpush1.msra.mxu0 %v37
  %327 = vmatprep.subr.mxu0 0.0
  %328 = vmatpush1.msra.mxu0 0.0
  %329 = vmatprep.subr.mxu0 0.0
  %330 = vmatpush1.msra.mxu0 0.0
  %331 = vmatprep.subr.mxu0 0.0
  %332 = vmatpush1.msra.mxu0 0.0
  %333 = vmatprep.subr.mxu0 0.0
  %334 = vmatpush1.msra.mxu0 0.0
  %335 = vmatprep.subr.mxu0 0.0
  %336 = vmatpush1.msra.mxu0 0.0
  %337 = vmatprep.subr.mxu0 0.0
  %338 = vmatpush1.msra.mxu0 0.0
  %339 = vmatprep.subr.mxu0 0.0
  %340 = vmatpush1.msra.mxu0 0.0
  %341 = vmatprep.subr.mxu0 0.0
  %342 = vmatpush1.msra.mxu0 0.0
  %343 = vmatprep.subr.mxu0 0.0
  %344 = vmatpush1.msra.mxu0 0.0
  %345 = vmatprep.subr.mxu0 0.0
  %346 = vmatpush1.msra.mxu0 0.0
  %347 = vmatprep.subr.mxu0 0.0
  %348 = vmatpush1.msra.mxu0 0.0
  %349 = vmatprep.subr.mxu0 0.0
  %350 = vmatpush1.msra.mxu0 0.0
  %351 = vmatprep.subr.mxu0 0.0
  %352 = vmatpush1.msra.mxu0 0.0
  %353 = vmatprep.subr.mxu0 0.0
  %354 = vmatpush1.msra.mxu0 0.0
  %355 = vmatprep.subr.mxu0 0.0
  %356 = vmatpush1.msra.mxu0 0.0
  %357 = vmatprep.subr.mxu0 0.0
  %358 = vmatpush1.msra.mxu0 0.0
  %359 = vmatprep.subr.mxu0 0.0
  %360 = vmatpush1.msra.mxu0 0.0
  %361 = vmatprep.subr.mxu0 0.0
  %362 = vmatpush1.msra.mxu0 0.0
  %363 = vmatprep.subr.mxu0 0.0
  %364 = vmatpush1.msra.mxu0 0.0
  %365 = vmatprep.subr.mxu0 0.0
  %366 = vmatpush1.msra.mxu0 0.0
  %367 = vmatprep.subr.mxu0 0.0
  %368 = vmatpush1.msra.mxu0 0.0
  %369 = vmatprep.subr.mxu0 0.0
  %370 = vmatpush1.msra.mxu0 0.0
  %371 = vmatprep.subr.mxu0 0.0
  %372 = vmatpush1.msra.mxu0 0.0
  %373 = vmatprep.subr.mxu0 0.0
  %374 = vmatpush1.msra.mxu0 0.0
  %375 = vmatprep.subr.mxu0 0.0
  %376 = vmatpush1.msra.mxu0 0.0
  %377 = vmatprep.subr.mxu0 0.0
  %378 = vmatpush1.msra.mxu0 0.0
  %379 = vmatprep.subr.mxu0 0.0
  %380 = vmatpush1.msra.mxu0 0.0
  %381 = vmatprep.subr.mxu0 0.0
  %382 = vmatpush1.msra.mxu0 0.0
  %383 = vmatprep.subr.mxu0 0.0
  %384 = vmatpush1.msra.mxu0 0.0
  %385 = vmatprep.subr.mxu0 0.0
  %386 = vmatpush1.msra.mxu0 0.0
  %387 = vmatprep.mubr.f32.mxu0 0.0
  %388 = vmatmul.mubr.f32.gmra.mrb[0].mxu0 %v321
  %v389 = vpop.f32.mrb[0].mxu0
  %v390 = vadd.f32 0.0, %v389
  %v391 = vpop.f32.mrb[0].mxu0
  %v392 = vadd.f32 0.0, %v391
  %393 = vdwg.mxu0
  %394 = vmatprep.subr.mxu0 0.0
  %395 = vmatpush1.msra.mxu0 %v36
  %396 = vmatprep.subr.mxu0 0.0
  %397 = vmatpush1.msra.mxu0 %v39
  %398 = vmatprep.subr.mxu0 0.0
  %399 = vmatpush1.msra.mxu0 0.0
  %400 = vmatprep.subr.mxu0 0.0
  %401 = vmatpush1.msra.mxu0 0.0
  %402 = vmatprep.subr.mxu0 0.0
  %403 = vmatpush1.msra.mxu0 0.0
  %404 = vmatprep.subr.mxu0 0.0
  %405 = vmatpush1.msra.mxu0 0.0
  %406 = vmatprep.subr.mxu0 0.0
  %407 = vmatpush1.msra.mxu0 0.0
  %408 = vmatprep.subr.mxu0 0.0
  %409 = vmatpush1.msra.mxu0 0.0
  %410 = vmatprep.subr.mxu0 0.0
  %411 = vmatpush1.msra.mxu0 0.0
  %412 = vmatprep.subr.mxu0 0.0
  %413 = vmatpush1.msra.mxu0 0.0
  %414 = vmatprep.subr.mxu0 0.0
  %415 = vmatpush1.msra.mxu0 0.0
  %416 = vmatprep.subr.mxu0 0.0
  %417 = vmatpush1.msra.mxu0 0.0
  %418 = vmatprep.subr.mxu0 0.0
  %419 = vmatpush1.msra.mxu0 0.0
  %420 = vmatprep.subr.mxu0 0.0
  %421 = vmatpush1.msra.mxu0 0.0
  %422 = vmatprep.subr.mxu0 0.0
  %423 = vmatpush1.msra.mxu0 0.0
  %424 = vmatprep.subr.mxu0 0.0
  %425 = vmatpush1.msra.mxu0 0.0
  %426 = vmatprep.subr.mxu0 0.0
  %427 = vmatpush1.msra.mxu0 0.0
  %428 = vmatprep.subr.mxu0 0.0
  %429 = vmatpush1.msra.mxu0 0.0
  %430 = vmatprep.subr.mxu0 0.0
  %431 = vmatpush1.msra.mxu0 0.0
  %432 = vmatprep.subr.mxu0 0.0
  %433 = vmatpush1.msra.mxu0 0.0
  %434 = vmatprep.subr.mxu0 0.0
  %435 = vmatpush1.msra.mxu0 0.0
  %436 = vmatprep.subr.mxu0 0.0
  %437 = vmatpush1.msra.mxu0 0.0
  %438 = vmatprep.subr.mxu0 0.0
  %439 = vmatpush1.msra.mxu0 0.0
  %440 = vmatprep.subr.mxu0 0.0
  %441 = vmatpush1.msra.mxu0 0.0
  %442 = vmatprep.subr.mxu0 0.0
  %443 = vmatpush1.msra.mxu0 0.0
  %444 = vmatprep.subr.mxu0 0.0
  %445 = vmatpush1.msra.mxu0 0.0
  %446 = vmatprep.subr.mxu0 0.0
  %447 = vmatpush1.msra.mxu0 0.0
  %448 = vmatprep.subr.mxu0 0.0
  %449 = vmatpush1.msra.mxu0 0.0
  %450 = vmatprep.subr.mxu0 0.0
  %451 = vmatpush1.msra.mxu0 0.0
  %452 = vmatprep.subr.mxu0 0.0
  %453 = vmatpush1.msra.mxu0 0.0
  %454 = vmatprep.subr.mxu0 0.0
  %455 = vmatpush1.msra.mxu0 0.0
  %456 = vmatprep.subr.mxu0 0.0
  %457 = vmatpush1.msra.mxu0 0.0
  %458 = vmatprep.mubr.f32.mxu0 0.0
  %459 = vmatmul.mubr.f32.gmra.mrb[0].mxu0 %v321
  %v460 = vpop.f32.mrb[0].mxu0
  %v461 = vadd.f32 0.0, %v460
  %v462 = vpop.f32.mrb[0].mxu0
  %463 = vdwg.mxu0
  %v464 = vadd.f32 %v157, %v390
  %v465 = vxor.u32 %v464, 2147483648
  %v466 = vmul.f32 %v465, 1.442695
  %v467 = vpow.pop %v466
  %v468 = vadd.f32 %v467, 1.0
  %v469 = vrcp.pop %v468
  %v470 = vmul.f32 1.0, %v469
  %v471 = vadd.f32 %v159, %v392
  %v472 = vxor.u32 %v471, 2147483648
  %v473 = vmul.f32 %v472, 1.442695
  %v474 = vpow.pop %v473
  %v475 = vadd.f32 %v474, 1.0
  %v476 = vrcp.pop %v475
  %v477 = vmul.f32 1.0, %v476
  %v478 = vadd.f32 %v461, %v46
  %v479 = vmul.f32 %v470, %v478
  %v480 = vadd.f32 %v269, %v479
  %v481 = vtanh.pop %v480
  %v482 = vsub.f32 %v318, %v481
  %v483 = vmul.f32 %v477, %v482
  %v484 = vadd.f32 %v483, %v481
  %v486 = vsel %vm319, %v484, 0
  %488 = vmatprep.subr.mxu0 %v35
  %489 = vmatpush1.msra.mxu0 %v34
  %490 = vmatprep.subr.mxu0 %v38
  %491 = vmatpush1.msra.mxu0 %v37
  %492 = vmatprep.subr.mxu0 0.0
  %493 = vmatpush1.msra.mxu0 0.0
  %494 = vmatprep.subr.mxu0 0.0
  %495 = vmatpush1.msra.mxu0 0.0
  %496 = vmatprep.subr.mxu0 0.0
  %497 = vmatpush1.msra.mxu0 0.0
  %498 = vmatprep.subr.mxu0 0.0
  %499 = vmatpush1.msra.mxu0 0.0
  %500 = vmatprep.subr.mxu0 0.0
  %501 = vmatpush1.msra.mxu0 0.0
  %502 = vmatprep.subr.mxu0 0.0
  %503 = vmatpush1.msra.mxu0 0.0
  %504 = vmatprep.subr.mxu0 0.0
  %505 = vmatpush1.msra.mxu0 0.0
  %506 = vmatprep.subr.mxu0 0.0
  %507 = vmatpush1.msra.mxu0 0.0
  %508 = vmatprep.subr.mxu0 0.0
  %509 = vmatpush1.msra.mxu0 0.0
  %510 = vmatprep.subr.mxu0 0.0
  %511 = vmatpush1.msra.mxu0 0.0
  %512 = vmatprep.subr.mxu0 0.0
  %513 = vmatpush1.msra.mxu0 0.0
  %514 = vmatprep.subr.mxu0 0.0
  %515 = vmatpush1.msra.mxu0 0.0
  %516 = vmatprep.subr.mxu0 0.0
  %517 = vmatpush1.msra.mxu0 0.0
  %518 = vmatprep.subr.mxu0 0.0
  %519 = vmatpush1.msra.mxu0 0.0
  %520 = vmatprep.subr.mxu0 0.0
  %521 = vmatpush1.msra.mxu0 0.0
  %522 = vmatprep.subr.mxu0 0.0
  %523 = vmatpush1.msra.mxu0 0.0
  %524 = vmatprep.subr.mxu0 0.0
  %525 = vmatpush1.msra.mxu0 0.0
  %526 = vmatprep.subr.mxu0 0.0
  %527 = vmatpush1.msra.mxu0 0.0
  %528 = vmatprep.subr.mxu0 0.0
  %529 = vmatpush1.msra.mxu0 0.0
  %530 = vmatprep.subr.mxu0 0.0
  %531 = vmatpush1.msra.mxu0 0.0
  %532 = vmatprep.subr.mxu0 0.0
  %533 = vmatpush1.msra.mxu0 0.0
  %534 = vmatprep.subr.mxu0 0.0
  %535 = vmatpush1.msra.mxu0 0.0
  %536 = vmatprep.subr.mxu0 0.0
  %537 = vmatpush1.msra.mxu0 0.0
  %538 = vmatprep.subr.mxu0 0.0
  %539 = vmatpush1.msra.mxu0 0.0
  %540 = vmatprep.subr.mxu0 0.0
  %541 = vmatpush1.msra.mxu0 0.0
  %542 = vmatprep.subr.mxu0 0.0
  %543 = vmatpush1.msra.mxu0 0.0
  %544 = vmatprep.subr.mxu0 0.0
  %545 = vmatpush1.msra.mxu0 0.0
  %546 = vmatprep.subr.mxu0 0.0
  %547 = vmatpush1.msra.mxu0 0.0
  %548 = vmatprep.subr.mxu0 0.0
  %549 = vmatpush1.msra.mxu0 0.0
  %550 = vmatprep.subr.mxu0 0.0
  %551 = vmatpush1.msra.mxu0 0.0
  %552 = vmatprep.mubr.f32.mxu0 0.0
  %553 = vmatmul.mubr.f32.gmra.mrb[0].mxu0 %v486
  %v554 = vpop.f32.mrb[0].mxu0
  %v555 = vadd.f32 0.0, %v554
  %v556 = vpop.f32.mrb[0].mxu0
  %v557 = vadd.f32 0.0, %v556
  %558 = vdwg.mxu0
  %559 = vmatprep.subr.mxu0 0.0
  %560 = vmatpush1.msra.mxu0 %v36
  %561 = vmatprep.subr.mxu0 0.0
  %562 = vmatpush1.msra.mxu0 %v39
  %563 = vmatprep.subr.mxu0 0.0
  %564 = vmatpush1.msra.mxu0 0.0
  %565 = vmatprep.subr.mxu0 0.0
  %566 = vmatpush1.msra.mxu0 0.0
  %567 = vmatprep.subr.mxu0 0.0
  %568 = vmatpush1.msra.mxu0 0.0
  %569 = vmatprep.subr.mxu0 0.0
  %570 = vmatpush1.msra.mxu0 0.0
  %571 = vmatprep.subr.mxu0 0.0
  %572 = vmatpush1.msra.mxu0 0.0
  %573 = vmatprep.subr.mxu0 0.0
  %574 = vmatpush1.msra.mxu0 0.0
  %575 = vmatprep.subr.mxu0 0.0
  %576 = vmatpush1.msra.mxu0 0.0
  %577 = vmatprep.subr.mxu0 0.0
  %578 = vmatpush1.msra.mxu0 0.0
  %579 = vmatprep.subr.mxu0 0.0
  %580 = vmatpush1.msra.mxu0 0.0
  %581 = vmatprep.subr.mxu0 0.0
  %582 = vmatpush1.msra.mxu0 0.0
  %583 = vmatprep.subr.mxu0 0.0
  %584 = vmatpush1.msra.mxu0 0.0
  %585 = vmatprep.subr.mxu0 0.0
  %586 = vmatpush1.msra.mxu0 0.0
  %587 = vmatprep.subr.mxu0 0.0
  %588 = vmatpush1.msra.mxu0 0.0
  %589 = vmatprep.subr.mxu0 0.0
  %590 = vmatpush1.msra.mxu0 0.0
  %591 = vmatprep.subr.mxu0 0.0
  %592 = vmatpush1.msra.mxu0 0.0
  %593 = vmatprep.subr.mxu0 0.0
  %594 = vmatpush1.msra.mxu0 0.0
  %595 = vmatprep.subr.mxu0 0.0
  %596 = vmatpush1.msra.mxu0 0.0
  %597 = vmatprep.subr.mxu0 0.0
  %598 = vmatpush1.msra.mxu0 0.0
  %599 = vmatprep.subr.mxu0 0.0
  %600 = vmatpush1.msra.mxu0 0.0
  %601 = vmatprep.subr.mxu0 0.0
  %602 = vmatpush1.msra.mxu0 0.0
  %603 = vmatprep.subr.mxu0 0.0
  %604 = vmatpush1.msra.mxu0 0.0
  %605 = vmatprep.subr.mxu0 0.0
  %606 = vmatpush1.msra.mxu0 0.0
  %607 = vmatprep.subr.mxu0 0.0
  %608 = vmatpush1.msra.mxu0 0.0
  %609 = vmatprep.subr.mxu0 0.0
  %610 = vmatpush1.msra.mxu0 0.0
  %611 = vmatprep.subr.mxu0 0.0
  %612 = vmatpush1.msra.mxu0 0.0
  %613 = vmatprep.subr.mxu0 0.0
  %614 = vmatpush1.msra.mxu0 0.0
  %615 = vmatprep.subr.mxu0 0.0
  %616 = vmatpush1.msra.mxu0 0.0
  %617 = vmatprep.subr.mxu0 0.0
  %618 = vmatpush1.msra.mxu0 0.0
  %619 = vmatprep.subr.mxu0 0.0
  %620 = vmatpush1.msra.mxu0 0.0
  %621 = vmatprep.subr.mxu0 0.0
  %622 = vmatpush1.msra.mxu0 0.0
  %623 = vmatprep.mubr.f32.mxu0 0.0
  %624 = vmatmul.mubr.f32.gmra.mrb[0].mxu0 %v486
  %v625 = vpop.f32.mrb[0].mxu0
  %v626 = vadd.f32 0.0, %v625
  %v627 = vpop.f32.mrb[0].mxu0
  %628 = vdwg.mxu0
  %v629 = vadd.f32 %v163, %v555
  %v630 = vxor.u32 %v629, 2147483648
  %v631 = vmul.f32 %v630, 1.442695
  %v632 = vpow.pop %v631
  %v633 = vadd.f32 %v632, 1.0
  %v634 = vrcp.pop %v633
  %v635 = vmul.f32 1.0, %v634
  %v636 = vadd.f32 %v165, %v557
  %v637 = vxor.u32 %v636, 2147483648
  %v638 = vmul.f32 %v637, 1.442695
  %v639 = vpow.pop %v638
  %v640 = vadd.f32 %v639, 1.0
  %v641 = vrcp.pop %v640
  %v642 = vmul.f32 1.0, %v641
  %v643 = vadd.f32 %v626, %v46
  %v644 = vmul.f32 %v635, %v643
  %v645 = vadd.f32 %v274, %v644
  %v646 = vtanh.pop %v645
  %v647 = vsub.f32 %v484, %v646
  %v648 = vmul.f32 %v642, %v647
  %v649 = vadd.f32 %v648, %v646
  %v651 = vsel %vm319, %v649, 0
  %653 = vmatprep.subr.mxu0 %v35
  %654 = vmatpush1.msra.mxu0 %v34
  %655 = vmatprep.subr.mxu0 %v38
  %656 = vmatpush1.msra.mxu0 %v37
  %657 = vmatprep.subr.mxu0 0.0
  %658 = vmatpush1.msra.mxu0 0.0
  %659 = vmatprep.subr.mxu0 0.0
  %660 = vmatpush1.msra.mxu0 0.0
  %661 = vmatprep.subr.mxu0 0.0
  %662 = vmatpush1.msra.mxu0 0.0
  %663 = vmatprep.subr.mxu0 0.0
  %664 = vmatpush1.msra.mxu0 0.0
  %665 = vmatprep.subr.mxu0 0.0
  %666 = vmatpush1.msra.mxu0 0.0
  %667 = vmatprep.subr.mxu0 0.0
  %668 = vmatpush1.msra.mxu0 0.0
  %669 = vmatprep.subr.mxu0 0.0
  %670 = vmatpush1.msra.mxu0 0.0
  %671 = vmatprep.subr.mxu0 0.0
  %672 = vmatpush1.msra.mxu0 0.0
  %673 = vmatprep.subr.mxu0 0.0
  %674 = vmatpush1.msra.mxu0 0.0
  %675 = vmatprep.subr.mxu0 0.0
  %676 = vmatpush1.msra.mxu0 0.0
  %677 = vmatprep.subr.mxu0 0.0
  %678 = vmatpush1.msra.mxu0 0.0
  %679 = vmatprep.subr.mxu0 0.0
  %680 = vmatpush1.msra.mxu0 0.0
  %681 = vmatprep.subr.mxu0 0.0
  %682 = vmatpush1.msra.mxu0 0.0
  %683 = vmatprep.subr.mxu0 0.0
  %684 = vmatpush1.msra.mxu0 0.0
  %685 = vmatprep.subr.mxu0 0.0
  %686 = vmatpush1.msra.mxu0 0.0
  %687 = vmatprep.subr.mxu0 0.0
  %688 = vmatpush1.msra.mxu0 0.0
  %689 = vmatprep.subr.mxu0 0.0
  %690 = vmatpush1.msra.mxu0 0.0
  %691 = vmatprep.subr.mxu0 0.0
  %692 = vmatpush1.msra.mxu0 0.0
  %693 = vmatprep.subr.mxu0 0.0
  %694 = vmatpush1.msra.mxu0 0.0
  %695 = vmatprep.subr.mxu0 0.0
  %696 = vmatpush1.msra.mxu0 0.0
  %697 = vmatprep.subr.mxu0 0.0
  %698 = vmatpush1.msra.mxu0 0.0
  %699 = vmatprep.subr.mxu0 0.0
  %700 = vmatpush1.msra.mxu0 0.0
  %701 = vmatprep.subr.mxu0 0.0
  %702 = vmatpush1.msra.mxu0 0.0
  %703 = vmatprep.subr.mxu0 0.0
  %704 = vmatpush1.msra.mxu0 0.0
  %705 = vmatprep.subr.mxu0 0.0
  %706 = vmatpush1.msra.mxu0 0.0
  %707 = vmatprep.subr.mxu0 0.0
  %708 = vmatpush1.msra.mxu0 0.0
  %709 = vmatprep.subr.mxu0 0.0
  %710 = vmatpush1.msra.mxu0 0.0
  %711 = vmatprep.subr.mxu0 0.0
  %712 = vmatpush1.msra.mxu0 0.0
  %713 = vmatprep.subr.mxu0 0.0
  %714 = vmatpush1.msra.mxu0 0.0
  %715 = vmatprep.subr.mxu0 0.0
  %716 = vmatpush1.msra.mxu0 0.0
  %717 = vmatprep.mubr.f32.mxu0 0.0
  %718 = vmatmul.mubr.f32.gmra.mrb[0].mxu0 %v651
  %v719 = vpop.f32.mrb[0].mxu0
  %v720 = vadd.f32 0.0, %v719
  %v721 = vpop.f32.mrb[0].mxu0
  %v722 = vadd.f32 0.0, %v721
  %723 = vdwg.mxu0
  %724 = vmatprep.subr.mxu0 0.0
  %725 = vmatpush1.msra.mxu0 %v36
  %726 = vmatprep.subr.mxu0 0.0
  %727 = vmatpush1.msra.mxu0 %v39
  %728 = vmatprep.subr.mxu0 0.0
  %729 = vmatpush1.msra.mxu0 0.0
  %730 = vmatprep.subr.mxu0 0.0
  %731 = vmatpush1.msra.mxu0 0.0
  %732 = vmatprep.subr.mxu0 0.0
  %733 = vmatpush1.msra.mxu0 0.0
  %734 = vmatprep.subr.mxu0 0.0
  %735 = vmatpush1.msra.mxu0 0.0
  %736 = vmatprep.subr.mxu0 0.0
  %737 = vmatpush1.msra.mxu0 0.0
  %738 = vmatprep.subr.mxu0 0.0
  %739 = vmatpush1.msra.mxu0 0.0
  %740 = vmatprep.subr.mxu0 0.0
  %741 = vmatpush1.msra.mxu0 0.0
  %742 = vmatprep.subr.mxu0 0.0
  %743 = vmatpush1.msra.mxu0 0.0
  %744 = vmatprep.subr.mxu0 0.0
  %745 = vmatpush1.msra.mxu0 0.0
  %746 = vmatprep.subr.mxu0 0.0
  %747 = vmatpush1.msra.mxu0 0.0
  %748 = vmatprep.subr.mxu0 0.0
  %749 = vmatpush1.msra.mxu0 0.0
  %750 = vmatprep.subr.mxu0 0.0
  %751 = vmatpush1.msra.mxu0 0.0
  %752 = vmatprep.subr.mxu0 0.0
  %753 = vmatpush1.msra.mxu0 0.0
  %754 = vmatprep.subr.mxu0 0.0
  %755 = vmatpush1.msra.mxu0 0.0
  %756 = vmatprep.subr.mxu0 0.0
  %757 = vmatpush1.msra.mxu0 0.0
  %758 = vmatprep.subr.mxu0 0.0
  %759 = vmatpush1.msra.mxu0 0.0
  %760 = vmatprep.subr.mxu0 0.0
  %761 = vmatpush1.msra.mxu0 0.0
  %762 = vmatprep.subr.mxu0 0.0
  %763 = vmatpush1.msra.mxu0 0.0
  %764 = vmatprep.subr.mxu0 0.0
  %765 = vmatpush1.msra.mxu0 0.0
  %766 = vmatprep.subr.mxu0 0.0
  %767 = vmatpush1.msra.mxu0 0.0
  %768 = vmatprep.subr.mxu0 0.0
  %769 = vmatpush1.msra.mxu0 0.0
  %770 = vmatprep.subr.mxu0 0.0
  %771 = vmatpush1.msra.mxu0 0.0
  %772 = vmatprep.subr.mxu0 0.0
  %773 = vmatpush1.msra.mxu0 0.0
  %774 = vmatprep.subr.mxu0 0.0
  %775 = vmatpush1.msra.mxu0 0.0
  %776 = vmatprep.subr.mxu0 0.0
  %777 = vmatpush1.msra.mxu0 0.0
  %778 = vmatprep.subr.mxu0 0.0
  %779 = vmatpush1.msra.mxu0 0.0
  %780 = vmatprep.subr.mxu0 0.0
  %781 = vmatpush1.msra.mxu0 0.0
  %782 = vmatprep.subr.mxu0 0.0
  %783 = vmatpush1.msra.mxu0 0.0
  %784 = vmatprep.subr.mxu0 0.0
  %785 = vmatpush1.msra.mxu0 0.0
  %786 = vmatprep.subr.mxu0 0.0
  %787 = vmatpush1.msra.mxu0 0.0
  %788 = vmatprep.mubr.f32.mxu0 0.0
  %789 = vmatmul.mubr.f32.gmra.mrb[0].mxu0 %v651
  %v790 = vpop.f32.mrb[0].mxu0
  %v791 = vadd.f32 0.0, %v790
  %v792 = vpop.f32.mrb[0].mxu0
  %793 = vdwg.mxu0
  %v794 = vadd.f32 %v169, %v720
  %v795 = vxor.u32 %v794, 2147483648
  %v796 = vmul.f32 %v795, 1.442695
  %v797 = vpow.pop %v796
  %v798 = vadd.f32 %v797, 1.0
  %v799 = vrcp.pop %v798
  %v800 = vmul.f32 1.0, %v799
  %v801 = vadd.f32 %v171, %v722
  %v802 = vxor.u32 %v801, 2147483648
  %v803 = vmul.f32 %v802, 1.442695
  %v804 = vpow.pop %v803
  %v805 = vadd.f32 %v804, 1.0
  %v806 = vrcp.pop %v805
  %v807 = vmul.f32 1.0, %v806
  %v808 = vadd.f32 %v791, %v46
  %v809 = vmul.f32 %v800, %v808
  %v810 = vadd.f32 %v279, %v809
  %v811 = vtanh.pop %v810
  %v812 = vsub.f32 %v649, %v811
  %v813 = vmul.f32 %v807, %v812
  %v814 = vadd.f32 %v813, %v811
  %v816 = vsel %vm319, %v814, 0
  %818 = vmatprep.subr.mxu0 %v35
  %819 = vmatpush1.msra.mxu0 %v34
  %820 = vmatprep.subr.mxu0 %v38
  %821 = vmatpush1.msra.mxu0 %v37
  %822 = vmatprep.subr.mxu0 0.0
  %823 = vmatpush1.msra.mxu0 0.0
  %824 = vmatprep.subr.mxu0 0.0
  %825 = vmatpush1.msra.mxu0 0.0
  %826 = vmatprep.subr.mxu0 0.0
  %827 = vmatpush1.msra.mxu0 0.0
  %828 = vmatprep.subr.mxu0 0.0
  %829 = vmatpush1.msra.mxu0 0.0
  %830 = vmatprep.subr.mxu0 0.0
  %831 = vmatpush1.msra.mxu0 0.0
  %832 = vmatprep.subr.mxu0 0.0
  %833 = vmatpush1.msra.mxu0 0.0
  %834 = vmatprep.subr.mxu0 0.0
  %835 = vmatpush1.msra.mxu0 0.0
  %836 = vmatprep.subr.mxu0 0.0
  %837 = vmatpush1.msra.mxu0 0.0
  %838 = vmatprep.subr.mxu0 0.0
  %839 = vmatpush1.msra.mxu0 0.0
  %840 = vmatprep.subr.mxu0 0.0
  %841 = vmatpush1.msra.mxu0 0.0
  %842 = vmatprep.subr.mxu0 0.0
  %843 = vmatpush1.msra.mxu0 0.0
  %844 = vmatprep.subr.mxu0 0.0
  %845 = vmatpush1.msra.mxu0 0.0
  %846 = vmatprep.subr.mxu0 0.0
  %847 = vmatpush1.msra.mxu0 0.0
  %848 = vmatprep.subr.mxu0 0.0
  %849 = vmatpush1.msra.mxu0 0.0
  %850 = vmatprep.subr.mxu0 0.0
  %851 = vmatpush1.msra.mxu0 0.0
  %852 = vmatprep.subr.mxu0 0.0
  %853 = vmatpush1.msra.mxu0 0.0
  %854 = vmatprep.subr.mxu0 0.0
  %855 = vmatpush1.msra.mxu0 0.0
  %856 = vmatprep.subr.mxu0 0.0
  %857 = vmatpush1.msra.mxu0 0.0
  %858 = vmatprep.subr.mxu0 0.0
  %859 = vmatpush1.msra.mxu0 0.0
  %860 = vmatprep.subr.mxu0 0.0
  %861 = vmatpush1.msra.mxu0 0.0
  %862 = vmatprep.subr.mxu0 0.0
  %863 = vmatpush1.msra.mxu0 0.0
  %864 = vmatprep.subr.mxu0 0.0
  %865 = vmatpush1.msra.mxu0 0.0
  %866 = vmatprep.subr.mxu0 0.0
  %867 = vmatpush1.msra.mxu0 0.0
  %868 = vmatprep.subr.mxu0 0.0
  %869 = vmatpush1.msra.mxu0 0.0
  %870 = vmatprep.subr.mxu0 0.0
  %871 = vmatpush1.msra.mxu0 0.0
  %872 = vmatprep.subr.mxu0 0.0
  %873 = vmatpush1.msra.mxu0 0.0
  %874 = vmatprep.subr.mxu0 0.0
  %875 = vmatpush1.msra.mxu0 0.0
  %876 = vmatprep.subr.mxu0 0.0
  %877 = vmatpush1.msra.mxu0 0.0
  %878 = vmatprep.subr.mxu0 0.0
  %879 = vmatpush1.msra.mxu0 0.0
  %880 = vmatprep.subr.mxu0 0.0
  %881 = vmatpush1.msra.mxu0 0.0
  %882 = vmatprep.mubr.f32.mxu0 0.0
  %883 = vmatmul.mubr.f32.gmra.mrb[0].mxu0 %v816
  %v884 = vpop.f32.mrb[0].mxu0
  %v885 = vadd.f32 0.0, %v884
  %v886 = vpop.f32.mrb[0].mxu0
  %v887 = vadd.f32 0.0, %v886
  %888 = vdwg.mxu0
  %889 = vmatprep.subr.mxu0 0.0
  %890 = vmatpush1.msra.mxu0 %v36
  %891 = vmatprep.subr.mxu0 0.0
  %892 = vmatpush1.msra.mxu0 %v39
  %893 = vmatprep.subr.mxu0 0.0
  %894 = vmatpush1.msra.mxu0 0.0
  %895 = vmatprep.subr.mxu0 0.0
  %896 = vmatpush1.msra.mxu0 0.0
  %897 = vmatprep.subr.mxu0 0.0
  %898 = vmatpush1.msra.mxu0 0.0
  %899 = vmatprep.subr.mxu0 0.0
  %900 = vmatpush1.msra.mxu0 0.0
  %901 = vmatprep.subr.mxu0 0.0
  %902 = vmatpush1.msra.mxu0 0.0
  %903 = vmatprep.subr.mxu0 0.0
  %904 = vmatpush1.msra.mxu0 0.0
  %905 = vmatprep.subr.mxu0 0.0
  %906 = vmatpush1.msra.mxu0 0.0
  %907 = vmatprep.subr.mxu0 0.0
  %908 = vmatpush1.msra.mxu0 0.0
  %909 = vmatprep.subr.mxu0 0.0
  %910 = vmatpush1.msra.mxu0 0.0
  %911 = vmatprep.subr.mxu0 0.0
  %912 = vmatpush1.msra.mxu0 0.0
  %913 = vmatprep.subr.mxu0 0.0
  %914 = vmatpush1.msra.mxu0 0.0
  %915 = vmatprep.subr.mxu0 0.0
  %916 = vmatpush1.msra.mxu0 0.0
  %917 = vmatprep.subr.mxu0 0.0
  %918 = vmatpush1.msra.mxu0 0.0
  %919 = vmatprep.subr.mxu0 0.0
  %920 = vmatpush1.msra.mxu0 0.0
  %921 = vmatprep.subr.mxu0 0.0
  %922 = vmatpush1.msra.mxu0 0.0
  %923 = vmatprep.subr.mxu0 0.0
  %924 = vmatpush1.msra.mxu0 0.0
  %925 = vmatprep.subr.mxu0 0.0
  %926 = vmatpush1.msra.mxu0 0.0
  %927 = vmatprep.subr.mxu0 0.0
  %928 = vmatpush1.msra.mxu0 0.0
  %929 = vmatprep.subr.mxu0 0.0
  %930 = vmatpush1.msra.mxu0 0.0
  %931 = vmatprep.subr.mxu0 0.0
  %932 = vmatpush1.msra.mxu0 0.0
  %933 = vmatprep.subr.mxu0 0.0
  %934 = vmatpush1.msra.mxu0 0.0
  %935 = vmatprep.subr.mxu0 0.0
  %936 = vmatpush1.msra.mxu0 0.0
  %937 = vmatprep.subr.mxu0 0.0
  %938 = vmatpush1.msra.mxu0 0.0
  %939 = vmatprep.subr.mxu0 0.0
  %940 = vmatpush1.msra.mxu0 0.0
  %941 = vmatprep.subr.mxu0 0.0
  %942 = vmatpush1.msra.mxu0 0.0
  %943 = vmatprep.subr.mxu0 0.0
  %944 = vmatpush1.msra.mxu0 0.0
  %945 = vmatprep.subr.mxu0 0.0
  %946 = vmatpush1.msra.mxu0 0.0
  %947 = vmatprep.subr.mxu0 0.0
  %948 = vmatpush1.msra.mxu0 0.0
  %949 = vmatprep.subr.mxu0 0.0
  %950 = vmatpush1.msra.mxu0 0.0
  %951 = vmatprep.subr.mxu0 0.0
  %952 = vmatpush1.msra.mxu0 0.0
  %953 = vmatprep.mubr.f32.mxu0 0.0
  %954 = vmatmul.mubr.f32.gmra.mrb[0].mxu0 %v816
  %v955 = vpop.f32.mrb[0].mxu0
  %v956 = vadd.f32 0.0, %v955
  %v957 = vpop.f32.mrb[0].mxu0
  %958 = vdwg.mxu0
  %v959 = vadd.f32 %v175, %v885
  %v960 = vxor.u32 %v959, 2147483648
  %v961 = vmul.f32 %v960, 1.442695
  %v962 = vpow.pop %v961
  %v963 = vadd.f32 %v962, 1.0
  %v964 = vrcp.pop %v963
  %v965 = vmul.f32 1.0, %v964
  %v966 = vadd.f32 %v177, %v887
  %v967 = vxor.u32 %v966, 2147483648
  %v968 = vmul.f32 %v967, 1.442695
  %v969 = vpow.pop %v968
  %v970 = vadd.f32 %v969, 1.0
  %v971 = vrcp.pop %v970
  %v972 = vmul.f32 1.0, %v971
  %v973 = vadd.f32 %v956, %v46
  %v974 = vmul.f32 %v965, %v973
  %v975 = vadd.f32 %v284, %v974
  %v976 = vtanh.pop %v975
  %v977 = vsub.f32 %v814, %v976
  %v978 = vmul.f32 %v972, %v977
  %v979 = vadd.f32 %v978, %v976
  %v981 = vsel %vm319, %v979, 0
  %983 = vmatprep.subr.mxu0 %v35
  %984 = vmatpush1.msra.mxu0 %v34
  %985 = vmatprep.subr.mxu0 %v38
  %986 = vmatpush1.msra.mxu0 %v37
  %987 = vmatprep.subr.mxu0 0.0
  %988 = vmatpush1.msra.mxu0 0.0
  %989 = vmatprep.subr.mxu0 0.0
  %990 = vmatpush1.msra.mxu0 0.0
  %991 = vmatprep.subr.mxu0 0.0
  %992 = vmatpush1.msra.mxu0 0.0
  %993 = vmatprep.subr.mxu0 0.0
  %994 = vmatpush1.msra.mxu0 0.0
  %995 = vmatprep.subr.mxu0 0.0
  %996 = vmatpush1.msra.mxu0 0.0
  %997 = vmatprep.subr.mxu0 0.0
  %998 = vmatpush1.msra.mxu0 0.0
  %999 = vmatprep.subr.mxu0 0.0
  %1000 = vmatpush1.msra.mxu0 0.0
  %1001 = vmatprep.subr.mxu0 0.0
  %1002 = vmatpush1.msra.mxu0 0.0
  %1003 = vmatprep.subr.mxu0 0.0
  %1004 = vmatpush1.msra.mxu0 0.0
  %1005 = vmatprep.subr.mxu0 0.0
  %1006 = vmatpush1.msra.mxu0 0.0
  %1007 = vmatprep.subr.mxu0 0.0
  %1008 = vmatpush1.msra.mxu0 0.0
  %1009 = vmatprep.subr.mxu0 0.0
  %1010 = vmatpush1.msra.mxu0 0.0
  %1011 = vmatprep.subr.mxu0 0.0
  %1012 = vmatpush1.msra.mxu0 0.0
  %1013 = vmatprep.subr.mxu0 0.0
  %1014 = vmatpush1.msra.mxu0 0.0
  %1015 = vmatprep.subr.mxu0 0.0
  %1016 = vmatpush1.msra.mxu0 0.0
  %1017 = vmatprep.subr.mxu0 0.0
  %1018 = vmatpush1.msra.mxu0 0.0
  %1019 = vmatprep.subr.mxu0 0.0
  %1020 = vmatpush1.msra.mxu0 0.0
  %1021 = vmatprep.subr.mxu0 0.0
  %1022 = vmatpush1.msra.mxu0 0.0
  %1023 = vmatprep.subr.mxu0 0.0
  %1024 = vmatpush1.msra.mxu0 0.0
  %1025 = vmatprep.subr.mxu0 0.0
  %1026 = vmatpush1.msra.mxu0 0.0
  %1027 = vmatprep.subr.mxu0 0.0
  %1028 = vmatpush1.msra.mxu0 0.0
  %1029 = vmatprep.subr.mxu0 0.0
  %1030 = vmatpush1.msra.mxu0 0.0
  %1031 = vmatprep.subr.mxu0 0.0
  %1032 = vmatpush1.msra.mxu0 0.0
  %1033 = vmatprep.subr.mxu0 0.0
  %1034 = vmatpush1.msra.mxu0 0.0
  %1035 = vmatprep.subr.mxu0 0.0
  %1036 = vmatpush1.msra.mxu0 0.0
  %1037 = vmatprep.subr.mxu0 0.0
  %1038 = vmatpush1.msra.mxu0 0.0
  %1039 = vmatprep.subr.mxu0 0.0
  %1040 = vmatpush1.msra.mxu0 0.0
  %1041 = vmatprep.subr.mxu0 0.0
  %1042 = vmatpush1.msra.mxu0 0.0
  %1043 = vmatprep.subr.mxu0 0.0
  %1044 = vmatpush1.msra.mxu0 0.0
  %1045 = vmatprep.subr.mxu0 0.0
  %1046 = vmatpush1.msra.mxu0 0.0
  %1047 = vmatprep.mubr.f32.mxu0 0.0
  %1048 = vmatmul.mubr.f32.gmra.mrb[0].mxu0 %v981
  %v1049 = vpop.f32.mrb[0].mxu0
  %v1050 = vadd.f32 0.0, %v1049
  %v1051 = vpop.f32.mrb[0].mxu0
  %v1052 = vadd.f32 0.0, %v1051
  %1053 = vdwg.mxu0
  %1054 = vmatprep.subr.mxu0 0.0
  %1055 = vmatpush1.msra.mxu0 %v36
  %1056 = vmatprep.subr.mxu0 0.0
  %1057 = vmatpush1.msra.mxu0 %v39
  %1058 = vmatprep.subr.mxu0 0.0
  %1059 = vmatpush1.msra.mxu0 0.0
  %1060 = vmatprep.subr.mxu0 0.0
  %1061 = vmatpush1.msra.mxu0 0.0
  %1062 = vmatprep.subr.mxu0 0.0
  %1063 = vmatpush1.msra.mxu0 0.0
  %1064 = vmatprep.subr.mxu0 0.0
  %1065 = vmatpush1.msra.mxu0 0.0
  %1066 = vmatprep.subr.mxu0 0.0
  %1067 = vmatpush1.msra.mxu0 0.0
  %1068 = vmatprep.subr.mxu0 0.0
  %1069 = vmatpush1.msra.mxu0 0.0
  %1070 = vmatprep.subr.mxu0 0.0
  %1071 = vmatpush1.msra.mxu0 0.0
  %1072 = vmatprep.subr.mxu0 0.0
  %1073 = vmatpush1.msra.mxu0 0.0
  %1074 = vmatprep.subr.mxu0 0.0
  %1075 = vmatpush1.msra.mxu0 0.0
  %1076 = vmatprep.subr.mxu0 0.0
  %1077 = vmatpush1.msra.mxu0 0.0
  %1078 = vmatprep.subr.mxu0 0.0
  %1079 = vmatpush1.msra.mxu0 0.0
  %1080 = vmatprep.subr.mxu0 0.0
  %1081 = vmatpush1.msra.mxu0 0.0
  %1082 = vmatprep.subr.mxu0 0.0
  %1083 = vmatpush1.msra.mxu0 0.0
  %1084 = vmatprep.subr.mxu0 0.0
  %1085 = vmatpush1.msra.mxu0 0.0
  %1086 = vmatprep.subr.mxu0 0.0
  %1087 = vmatpush1.msra.mxu0 0.0
  %1088 = vmatprep.subr.mxu0 0.0
  %1089 = vmatpush1.msra.mxu0 0.0
  %1090 = vmatprep.subr.mxu0 0.0
  %1091 = vmatpush1.msra.mxu0 0.0
  %1092 = vmatprep.subr.mxu0 0.0
  %1093 = vmatpush1.msra.mxu0 0.0
  %1094 = vmatprep.subr.mxu0 0.0
  %1095 = vmatpush1.msra.mxu0 0.0
  %1096 = vmatprep.subr.mxu0 0.0
  %1097 = vmatpush1.msra.mxu0 0.0
  %1098 = vmatprep.subr.mxu0 0.0
  %1099 = vmatpush1.msra.mxu0 0.0
  %1100 = vmatprep.subr.mxu0 0.0
  %1101 = vmatpush1.msra.mxu0 0.0
  %1102 = vmatprep.subr.mxu0 0.0
  %1103 = vmatpush1.msra.mxu0 0.0
  %1104 = vmatprep.subr.mxu0 0.0
  %1105 = vmatpush1.msra.mxu0 0.0
  %1106 = vmatprep.subr.mxu0 0.0
  %1107 = vmatpush1.msra.mxu0 0.0
  %1108 = vmatprep.subr.mxu0 0.0
  %1109 = vmatpush1.msra.mxu0 0.0
  %1110 = vmatprep.subr.mxu0 0.0
  %1111 = vmatpush1.msra.mxu0 0.0
  %1112 = vmatprep.subr.mxu0 0.0
  %1113 = vmatpush1.msra.mxu0 0.0
  %1114 = vmatprep.subr.mxu0 0.0
  %1115 = vmatpush1.msra.mxu0 0.0
  %1116 = vmatprep.subr.mxu0 0.0
  %1117 = vmatpush1.msra.mxu0 0.0
  %1118 = vmatprep.mubr.f32.mxu0 0.0
  %1119 = vmatmul.mubr.f32.gmra.mrb[0].mxu0 %v981
  %v1120 = vpop.f32.mrb[0].mxu0
  %v1121 = vadd.f32 0.0, %v1120
  %v1122 = vpop.f32.mrb[0].mxu0
  %1123 = vdwg.mxu0
  %v1124 = vadd.f32 %v181, %v1050
  %v1125 = vxor.u32 %v1124, 2147483648
  %v1126 = vmul.f32 %v1125, 1.442695
  %v1127 = vpow.pop %v1126
  %v1128 = vadd.f32 %v1127, 1.0
  %v1129 = vrcp.pop %v1128
  %v1130 = vmul.f32 1.0, %v1129
  %v1131 = vadd.f32 %v183, %v1052
  %v1132 = vxor.u32 %v1131, 2147483648
  %v1133 = vmul.f32 %v1132, 1.442695
  %v1134 = vpow.pop %v1133
  %v1135 = vadd.f32 %v1134, 1.0
  %v1136 = vrcp.pop %v1135
  %v1137 = vmul.f32 1.0, %v1136
  %v1138 = vadd.f32 %v1121, %v46
  %v1139 = vmul.f32 %v1130, %v1138
  %v1140 = vadd.f32 %v289, %v1139
  %v1141 = vtanh.pop %v1140
  %v1142 = vsub.f32 %v979, %v1141
  %v1143 = vmul.f32 %v1137, %v1142
  %v1144 = vadd.f32 %v1143, %v1141
  %v1146 = vsel %vm319, %v1144, 0
  %1148 = vmatprep.subr.mxu0 %v35
  %1149 = vmatpush1.msra.mxu0 %v34
  %1150 = vmatprep.subr.mxu0 %v38
  %1151 = vmatpush1.msra.mxu0 %v37
  %1152 = vmatprep.subr.mxu0 0.0
  %1153 = vmatpush1.msra.mxu0 0.0
  %1154 = vmatprep.subr.mxu0 0.0
  %1155 = vmatpush1.msra.mxu0 0.0
  %1156 = vmatprep.subr.mxu0 0.0
  %1157 = vmatpush1.msra.mxu0 0.0
  %1158 = vmatprep.subr.mxu0 0.0
  %1159 = vmatpush1.msra.mxu0 0.0
  %1160 = vmatprep.subr.mxu0 0.0
  %1161 = vmatpush1.msra.mxu0 0.0
  %1162 = vmatprep.subr.mxu0 0.0
  %1163 = vmatpush1.msra.mxu0 0.0
  %1164 = vmatprep.subr.mxu0 0.0
  %1165 = vmatpush1.msra.mxu0 0.0
  %1166 = vmatprep.subr.mxu0 0.0
  %1167 = vmatpush1.msra.mxu0 0.0
  %1168 = vmatprep.subr.mxu0 0.0
  %1169 = vmatpush1.msra.mxu0 0.0
  %1170 = vmatprep.subr.mxu0 0.0
  %1171 = vmatpush1.msra.mxu0 0.0
  %1172 = vmatprep.subr.mxu0 0.0
  %1173 = vmatpush1.msra.mxu0 0.0
  %1174 = vmatprep.subr.mxu0 0.0
  %1175 = vmatpush1.msra.mxu0 0.0
  %1176 = vmatprep.subr.mxu0 0.0
  %1177 = vmatpush1.msra.mxu0 0.0
  %1178 = vmatprep.subr.mxu0 0.0
  %1179 = vmatpush1.msra.mxu0 0.0
  %1180 = vmatprep.subr.mxu0 0.0
  %1181 = vmatpush1.msra.mxu0 0.0
  %1182 = vmatprep.subr.mxu0 0.0
  %1183 = vmatpush1.msra.mxu0 0.0
  %1184 = vmatprep.subr.mxu0 0.0
  %1185 = vmatpush1.msra.mxu0 0.0
  %1186 = vmatprep.subr.mxu0 0.0
  %1187 = vmatpush1.msra.mxu0 0.0
  %1188 = vmatprep.subr.mxu0 0.0
  %1189 = vmatpush1.msra.mxu0 0.0
  %1190 = vmatprep.subr.mxu0 0.0
  %1191 = vmatpush1.msra.mxu0 0.0
  %1192 = vmatprep.subr.mxu0 0.0
  %1193 = vmatpush1.msra.mxu0 0.0
  %1194 = vmatprep.subr.mxu0 0.0
  %1195 = vmatpush1.msra.mxu0 0.0
  %1196 = vmatprep.subr.mxu0 0.0
  %1197 = vmatpush1.msra.mxu0 0.0
  %1198 = vmatprep.subr.mxu0 0.0
  %1199 = vmatpush1.msra.mxu0 0.0
  %1200 = vmatprep.subr.mxu0 0.0
  %1201 = vmatpush1.msra.mxu0 0.0
  %1202 = vmatprep.subr.mxu0 0.0
  %1203 = vmatpush1.msra.mxu0 0.0
  %1204 = vmatprep.subr.mxu0 0.0
  %1205 = vmatpush1.msra.mxu0 0.0
  %1206 = vmatprep.subr.mxu0 0.0
  %1207 = vmatpush1.msra.mxu0 0.0
  %1208 = vmatprep.subr.mxu0 0.0
  %1209 = vmatpush1.msra.mxu0 0.0
  %1210 = vmatprep.subr.mxu0 0.0
  %1211 = vmatpush1.msra.mxu0 0.0
  %1212 = vmatprep.mubr.f32.mxu0 0.0
  %1213 = vmatmul.mubr.f32.gmra.mrb[0].mxu0 %v1146
  %v1214 = vpop.f32.mrb[0].mxu0
  %v1215 = vadd.f32 0.0, %v1214
  %v1216 = vpop.f32.mrb[0].mxu0
  %v1217 = vadd.f32 0.0, %v1216
  %1218 = vdwg.mxu0
  %1219 = vmatprep.subr.mxu0 0.0
  %1220 = vmatpush1.msra.mxu0 %v36
  %1221 = vmatprep.subr.mxu0 0.0
  %1222 = vmatpush1.msra.mxu0 %v39
  %1223 = vmatprep.subr.mxu0 0.0
  %1224 = vmatpush1.msra.mxu0 0.0
  %1225 = vmatprep.subr.mxu0 0.0
  %1226 = vmatpush1.msra.mxu0 0.0
  %1227 = vmatprep.subr.mxu0 0.0
  %1228 = vmatpush1.msra.mxu0 0.0
  %1229 = vmatprep.subr.mxu0 0.0
  %1230 = vmatpush1.msra.mxu0 0.0
  %1231 = vmatprep.subr.mxu0 0.0
  %1232 = vmatpush1.msra.mxu0 0.0
  %1233 = vmatprep.subr.mxu0 0.0
  %1234 = vmatpush1.msra.mxu0 0.0
  %1235 = vmatprep.subr.mxu0 0.0
  %1236 = vmatpush1.msra.mxu0 0.0
  %1237 = vmatprep.subr.mxu0 0.0
  %1238 = vmatpush1.msra.mxu0 0.0
  %1239 = vmatprep.subr.mxu0 0.0
  %1240 = vmatpush1.msra.mxu0 0.0
  %1241 = vmatprep.subr.mxu0 0.0
  %1242 = vmatpush1.msra.mxu0 0.0
  %1243 = vmatprep.subr.mxu0 0.0
  %1244 = vmatpush1.msra.mxu0 0.0
  %1245 = vmatprep.subr.mxu0 0.0
  %1246 = vmatpush1.msra.mxu0 0.0
  %1247 = vmatprep.subr.mxu0 0.0
  %1248 = vmatpush1.msra.mxu0 0.0
  %1249 = vmatprep.subr.mxu0 0.0
  %1250 = vmatpush1.msra.mxu0 0.0
  %1251 = vmatprep.subr.mxu0 0.0
  %1252 = vmatpush1.msra.mxu0 0.0
  %1253 = vmatprep.subr.mxu0 0.0
  %1254 = vmatpush1.msra.mxu0 0.0
  %1255 = vmatprep.subr.mxu0 0.0
  %1256 = vmatpush1.msra.mxu0 0.0
  %1257 = vmatprep.subr.mxu0 0.0
  %1258 = vmatpush1.msra.mxu0 0.0
  %1259 = vmatprep.subr.mxu0 0.0
  %1260 = vmatpush1.msra.mxu0 0.0
  %1261 = vmatprep.subr.mxu0 0.0
  %1262 = vmatpush1.msra.mxu0 0.0
  %1263 = vmatprep.subr.mxu0 0.0
  %1264 = vmatpush1.msra.mxu0 0.0
  %1265 = vmatprep.subr.mxu0 0.0
  %1266 = vmatpush1.msra.mxu0 0.0
  %1267 = vmatprep.subr.mxu0 0.0
  %1268 = vmatpush1.msra.mxu0 0.0
  %1269 = vmatprep.subr.mxu0 0.0
  %1270 = vmatpush1.msra.mxu0 0.0
  %1271 = vmatprep.subr.mxu0 0.0
  %1272 = vmatpush1.msra.mxu0 0.0
  %1273 = vmatprep.subr.mxu0 0.0
  %1274 = vmatpush1.msra.mxu0 0.0
  %1275 = vmatprep.subr.mxu0 0.0
  %1276 = vmatpush1.msra.mxu0 0.0
  %1277 = vmatprep.subr.mxu0 0.0
  %1278 = vmatpush1.msra.mxu0 0.0
  %1279 = vmatprep.subr.mxu0 0.0
  %1280 = vmatpush1.msra.mxu0 0.0
  %1281 = vmatprep.subr.mxu0 0.0
  %1282 = vmatpush1.msra.mxu0 0.0
  %1283 = vmatprep.mubr.f32.mxu0 0.0
  %1284 = vmatmul.mubr.f32.gmra.mrb[0].mxu0 %v1146
  %v1285 = vpop.f32.mrb[0].mxu0
  %v1286 = vadd.f32 0.0, %v1285
  %v1287 = vpop.f32.mrb[0].mxu0
  %1288 = vdwg.mxu0
  %v1289 = vadd.f32 %v187, %v1215
  %v1290 = vxor.u32 %v1289, 2147483648
  %v1291 = vmul.f32 %v1290, 1.442695
  %v1292 = vpow.pop %v1291
  %v1293 = vadd.f32 %v1292, 1.0
  %v1294 = vrcp.pop %v1293
  %v1295 = vmul.f32 1.0, %v1294
  %v1296 = vadd.f32 %v189, %v1217
  %v1297 = vxor.u32 %v1296, 2147483648
  %v1298 = vmul.f32 %v1297, 1.442695
  %v1299 = vpow.pop %v1298
  %v1300 = vadd.f32 %v1299, 1.0
  %v1301 = vrcp.pop %v1300
  %v1302 = vmul.f32 1.0, %v1301
  %v1303 = vadd.f32 %v1286, %v46
  %v1304 = vmul.f32 %v1295, %v1303
  %v1305 = vadd.f32 %v294, %v1304
  %v1306 = vtanh.pop %v1305
  %v1307 = vsub.f32 %v1144, %v1306
  %v1308 = vmul.f32 %v1302, %v1307
  %v1309 = vadd.f32 %v1308, %v1306
  %v1311 = vsel %vm319, %v1309, 0
  %1313 = vmatprep.subr.mxu0 %v35
  %1314 = vmatpush1.msra.mxu0 %v34
  %1315 = vmatprep.subr.mxu0 %v38
  %1316 = vmatpush1.msra.mxu0 %v37
  %1317 = vmatprep.subr.mxu0 0.0
  %1318 = vmatpush1.msra.mxu0 0.0
  %1319 = vmatprep.subr.mxu0 0.0
  %1320 = vmatpush1.msra.mxu0 0.0
  %1321 = vmatprep.subr.mxu0 0.0
  %1322 = vmatpush1.msra.mxu0 0.0
  %1323 = vmatprep.subr.mxu0 0.0
  %1324 = vmatpush1.msra.mxu0 0.0
  %1325 = vmatprep.subr.mxu0 0.0
  %1326 = vmatpush1.msra.mxu0 0.0
  %1327 = vmatprep.subr.mxu0 0.0
  %1328 = vmatpush1.msra.mxu0 0.0
  %1329 = vmatprep.subr.mxu0 0.0
  %1330 = vmatpush1.msra.mxu0 0.0
  %1331 = vmatprep.subr.mxu0 0.0
  %1332 = vmatpush1.msra.mxu0 0.0
  %1333 = vmatprep.subr.mxu0 0.0
  %1334 = vmatpush1.msra.mxu0 0.0
  %1335 = vmatprep.subr.mxu0 0.0
  %1336 = vmatpush1.msra.mxu0 0.0
  %1337 = vmatprep.subr.mxu0 0.0
  %1338 = vmatpush1.msra.mxu0 0.0
  %1339 = vmatprep.subr.mxu0 0.0
  %1340 = vmatpush1.msra.mxu0 0.0
  %1341 = vmatprep.subr.mxu0 0.0
  %1342 = vmatpush1.msra.mxu0 0.0
  %1343 = vmatprep.subr.mxu0 0.0
  %1344 = vmatpush1.msra.mxu0 0.0
  %1345 = vmatprep.subr.mxu0 0.0
  %1346 = vmatpush1.msra.mxu0 0.0
  %1347 = vmatprep.subr.mxu0 0.0
  %1348 = vmatpush1.msra.mxu0 0.0
  %1349 = vmatprep.subr.mxu0 0.0
  %1350 = vmatpush1.msra.mxu0 0.0
  %1351 = vmatprep.subr.mxu0 0.0
  %1352 = vmatpush1.msra.mxu0 0.0
  %1353 = vmatprep.subr.mxu0 0.0
  %1354 = vmatpush1.msra.mxu0 0.0
  %1355 = vmatprep.subr.mxu0 0.0
  %1356 = vmatpush1.msra.mxu0 0.0
  %1357 = vmatprep.subr.mxu0 0.0
  %1358 = vmatpush1.msra.mxu0 0.0
  %1359 = vmatprep.subr.mxu0 0.0
  %1360 = vmatpush1.msra.mxu0 0.0
  %1361 = vmatprep.subr.mxu0 0.0
  %1362 = vmatpush1.msra.mxu0 0.0
  %1363 = vmatprep.subr.mxu0 0.0
  %1364 = vmatpush1.msra.mxu0 0.0
  %1365 = vmatprep.subr.mxu0 0.0
  %1366 = vmatpush1.msra.mxu0 0.0
  %1367 = vmatprep.subr.mxu0 0.0
  %1368 = vmatpush1.msra.mxu0 0.0
  %1369 = vmatprep.subr.mxu0 0.0
  %1370 = vmatpush1.msra.mxu0 0.0
  %1371 = vmatprep.subr.mxu0 0.0
  %1372 = vmatpush1.msra.mxu0 0.0
  %1373 = vmatprep.subr.mxu0 0.0
  %1374 = vmatpush1.msra.mxu0 0.0
  %1375 = vmatprep.subr.mxu0 0.0
  %1376 = vmatpush1.msra.mxu0 0.0
  %1377 = vmatprep.mubr.f32.mxu0 0.0
  %1378 = vmatmul.mubr.f32.gmra.mrb[0].mxu0 %v1311
  %v1379 = vpop.f32.mrb[0].mxu0
  %v1380 = vadd.f32 0.0, %v1379
  %v1381 = vpop.f32.mrb[0].mxu0
  %v1382 = vadd.f32 0.0, %v1381
  %1383 = vdwg.mxu0
  %1384 = vmatprep.subr.mxu0 0.0
  %1385 = vmatpush1.msra.mxu0 %v36
  %1386 = vmatprep.subr.mxu0 0.0
  %1387 = vmatpush1.msra.mxu0 %v39
  %1388 = vmatprep.subr.mxu0 0.0
  %1389 = vmatpush1.msra.mxu0 0.0
  %1390 = vmatprep.subr.mxu0 0.0
  %1391 = vmatpush1.msra.mxu0 0.0
  %1392 = vmatprep.subr.mxu0 0.0
  %1393 = vmatpush1.msra.mxu0 0.0
  %1394 = vmatprep.subr.mxu0 0.0
  %1395 = vmatpush1.msra.mxu0 0.0
  %1396 = vmatprep.subr.mxu0 0.0
  %1397 = vmatpush1.msra.mxu0 0.0
  %1398 = vmatprep.subr.mxu0 0.0
  %1399 = vmatpush1.msra.mxu0 0.0
  %1400 = vmatprep.subr.mxu0 0.0
  %1401 = vmatpush1.msra.mxu0 0.0
  %1402 = vmatprep.subr.mxu0 0.0
  %1403 = vmatpush1.msra.mxu0 0.0
  %1404 = vmatprep.subr.mxu0 0.0
  %1405 = vmatpush1.msra.mxu0 0.0
  %1406 = vmatprep.subr.mxu0 0.0
  %1407 = vmatpush1.msra.mxu0 0.0
  %1408 = vmatprep.subr.mxu0 0.0
  %1409 = vmatpush1.msra.mxu0 0.0
  %1410 = vmatprep.subr.mxu0 0.0
  %1411 = vmatpush1.msra.mxu0 0.0
  %1412 = vmatprep.subr.mxu0 0.0
  %1413 = vmatpush1.msra.mxu0 0.0
  %1414 = vmatprep.subr.mxu0 0.0
  %1415 = vmatpush1.msra.mxu0 0.0
  %1416 = vmatprep.subr.mxu0 0.0
  %1417 = vmatpush1.msra.mxu0 0.0
  %1418 = vmatprep.subr.mxu0 0.0
  %1419 = vmatpush1.msra.mxu0 0.0
  %1420 = vmatprep.subr.mxu0 0.0
  %1421 = vmatpush1.msra.mxu0 0.0
  %1422 = vmatprep.subr.mxu0 0.0
  %1423 = vmatpush1.msra.mxu0 0.0
  %1424 = vmatprep.subr.mxu0 0.0
  %1425 = vmatpush1.msra.mxu0 0.0
  %1426 = vmatprep.subr.mxu0 0.0
  %1427 = vmatpush1.msra.mxu0 0.0
  %1428 = vmatprep.subr.mxu0 0.0
  %1429 = vmatpush1.msra.mxu0 0.0
  %1430 = vmatprep.subr.mxu0 0.0
  %1431 = vmatpush1.msra.mxu0 0.0
  %1432 = vmatprep.subr.mxu0 0.0
  %1433 = vmatpush1.msra.mxu0 0.0
  %1434 = vmatprep.subr.mxu0 0.0
  %1435 = vmatpush1.msra.mxu0 0.0
  %1436 = vmatprep.subr.mxu0 0.0
  %1437 = vmatpush1.msra.mxu0 0.0
  %1438 = vmatprep.subr.mxu0 0.0
  %1439 = vmatpush1.msra.mxu0 0.0
  %1440 = vmatprep.subr.mxu0 0.0
  %1441 = vmatpush1.msra.mxu0 0.0
  %1442 = vmatprep.subr.mxu0 0.0
  %1443 = vmatpush1.msra.mxu0 0.0
  %1444 = vmatprep.subr.mxu0 0.0
  %1445 = vmatpush1.msra.mxu0 0.0
  %1446 = vmatprep.subr.mxu0 0.0
  %1447 = vmatpush1.msra.mxu0 0.0
  %1448 = vmatprep.mubr.f32.mxu0 0.0
  %1449 = vmatmul.mubr.f32.gmra.mrb[0].mxu0 %v1311
  %v1450 = vpop.f32.mrb[0].mxu0
  %v1451 = vadd.f32 0.0, %v1450
  %v1452 = vpop.f32.mrb[0].mxu0
  %1453 = vdwg.mxu0
  %v1454 = vadd.f32 %v193, %v1380
  %v1455 = vxor.u32 %v1454, 2147483648
  %v1456 = vmul.f32 %v1455, 1.442695
  %v1457 = vpow.pop %v1456
  %v1458 = vadd.f32 %v1457, 1.0
  %v1459 = vrcp.pop %v1458
  %v1460 = vmul.f32 1.0, %v1459
  %v1461 = vadd.f32 %v195, %v1382
  %v1462 = vxor.u32 %v1461, 2147483648
  %v1463 = vmul.f32 %v1462, 1.442695
  %v1464 = vpow.pop %v1463
  %v1465 = vadd.f32 %v1464, 1.0
  %v1466 = vrcp.pop %v1465
  %v1467 = vmul.f32 1.0, %v1466
  %v1468 = vadd.f32 %v1451, %v46
  %v1469 = vmul.f32 %v1460, %v1468
  %v1470 = vadd.f32 %v299, %v1469
  %v1471 = vtanh.pop %v1470
  %v1472 = vsub.f32 %v1309, %v1471
  %v1473 = vmul.f32 %v1467, %v1472
  %v1474 = vadd.f32 %v1473, %v1471
  %v1475 = vld [vmem:[%s3] sm:$0xff]
  %v1476 = vld [vmem:[%s3 + $0x8] sm:$0xff]
  %v1477 = vld [vmem:[%s3 + $0x10] sm:$0xff]
  %v1478 = vld [vmem:[%s3 + $0x18] sm:$0xff]
  %v1479 = vld [vmem:[%s3 + $0x20] sm:$0xff]
  %v1480 = vld [vmem:[%s3 + $0x28] sm:$0xff]
  %v1481 = vld [vmem:[%s3 + $0x30] sm:$0xff]
  %v1482 = vld [vmem:[%s3 + $0x38] sm:$0xff]
  %v1483 = vld [vmem:[%s3 + $0x40] sm:$0xff]
  %v1484 = vld [vmem:[%s3 + $0x48] sm:$0xff]
  %v1485 = vld [vmem:[%s3 + $0x50] sm:$0xff]
  %v1486 = vld [vmem:[%s3 + $0x58] sm:$0xff]
  %v1487 = vlaneseq
  %v1488 = vshrl.u32 %v1487, 7
  %v1489 = vsub.s32 1, %v1488
  %v1490 = vrot.slane %v1486, %v1489
  %v1491 = vlaneseq
  %v1492 = vshrl.u32 %v1491, 7
  %v1493 = vsub.s32 0, %v1492
  %v1494 = vrot.slane %v1484, %v1493
  %v1495 = vlaneseq
  %v1496 = vshrl.u32 %v1495, 7
  %v1497 = vsub.s32 0, %v1496
  %v1498 = vrot.slane %v1485, %v1497
  %v1499 = vlaneseq
  %v1500 = vshrl.u32 %v1499, 7
  %v1501 = vsub.s32 0, %v1500
  %v1502 = vrot.slane %v1486, %v1501
  %1503 = vmatprep.subr.mxu0 %v1476
  %1504 = vmatpush1.msra.mxu0 %v1475
  %1505 = vmatprep.subr.mxu0 0.0
  %1506 = vmatpush1.msra.mxu0 0.0
  %1507 = vmatprep.subr.mxu0 0.0
  %1508 = vmatpush1.msra.mxu0 0.0
  %1509 = vmatprep.subr.mxu0 0.0
  %1510 = vmatpush1.msra.mxu0 0.0
  %1511 = vmatprep.subr.mxu0 0.0
  %1512 = vmatpush1.msra.mxu0 0.0
  %1513 = vmatprep.subr.mxu0 0.0
  %1514 = vmatpush1.msra.mxu0 0.0
  %1515 = vmatprep.subr.mxu0 0.0
  %1516 = vmatpush1.msra.mxu0 0.0
  %1517 = vmatprep.subr.mxu0 0.0
  %1518 = vmatpush1.msra.mxu0 0.0
  %1519 = vmatprep.subr.mxu0 0.0
  %1520 = vmatpush1.msra.mxu0 0.0
  %1521 = vmatprep.subr.mxu0 0.0
  %1522 = vmatpush1.msra.mxu0 0.0
  %1523 = vmatprep.subr.mxu0 0.0
  %1524 = vmatpush1.msra.mxu0 0.0
  %1525 = vmatprep.subr.mxu0 0.0
  %1526 = vmatpush1.msra.mxu0 0.0
  %1527 = vmatprep.subr.mxu0 0.0
  %1528 = vmatpush1.msra.mxu0 0.0
  %1529 = vmatprep.subr.mxu0 0.0
  %1530 = vmatpush1.msra.mxu0 0.0
  %1531 = vmatprep.subr.mxu0 0.0
  %1532 = vmatpush1.msra.mxu0 0.0
  %1533 = vmatprep.subr.mxu0 0.0
  %1534 = vmatpush1.msra.mxu0 0.0
  %1535 = vmatprep.subr.mxu0 0.0
  %1536 = vmatpush1.msra.mxu0 0.0
  %1537 = vmatprep.subr.mxu0 0.0
  %1538 = vmatpush1.msra.mxu0 0.0
  %1539 = vmatprep.subr.mxu0 0.0
  %1540 = vmatpush1.msra.mxu0 0.0
  %1541 = vmatprep.subr.mxu0 0.0
  %1542 = vmatpush1.msra.mxu0 0.0
  %1543 = vmatprep.subr.mxu0 0.0
  %1544 = vmatpush1.msra.mxu0 0.0
  %1545 = vmatprep.subr.mxu0 0.0
  %1546 = vmatpush1.msra.mxu0 0.0
  %1547 = vmatprep.subr.mxu0 0.0
  %1548 = vmatpush1.msra.mxu0 0.0
  %1549 = vmatprep.subr.mxu0 0.0
  %1550 = vmatpush1.msra.mxu0 0.0
  %1551 = vmatprep.subr.mxu0 0.0
  %1552 = vmatpush1.msra.mxu0 0.0
  %1553 = vmatprep.subr.mxu0 0.0
  %1554 = vmatpush1.msra.mxu0 0.0
  %1555 = vmatprep.subr.mxu0 0.0
  %1556 = vmatpush1.msra.mxu0 0.0
  %1557 = vmatprep.subr.mxu0 0.0
  %1558 = vmatpush1.msra.mxu0 0.0
  %1559 = vmatprep.subr.mxu0 0.0
  %1560 = vmatpush1.msra.mxu0 0.0
  %1561 = vmatprep.subr.mxu0 0.0
  %1562 = vmatpush1.msra.mxu0 0.0
  %1563 = vmatprep.subr.mxu0 0.0
  %1564 = vmatpush1.msra.mxu0 0.0
  %1565 = vmatprep.subr.mxu0 0.0
  %1566 = vmatpush1.msra.mxu0 0.0
  %1567 = vmatprep.mubr.f32.mxu0 0.0
  %1568 = vmatmul.mubr.f32.gmra.mrb[0].mxu0 %v61
  %v1569 = vpop.f32.mrb[0].mxu0
  %v1570 = vadd.f32 %v1494, %v1569
  %v1571 = vpop.f32.mrb[0].mxu0
  %v1572 = vadd.f32 %v1498, %v1571
  %1573 = vmatprep.mubr.f32.mxu0 0.0
  %1574 = vmatmul.mubr.f32.gmra.mrb[0].mxu0 %v64
  %v1575 = vpop.f32.mrb[0].mxu0
  %v1576 = vadd.f32 %v1494, %v1575
  %v1577 = vpop.f32.mrb[0].mxu0
  %v1578 = vadd.f32 %v1498, %v1577
  %1579 = vmatprep.mubr.f32.mxu0 0.0
  %1580 = vmatmul.mubr.f32.gmra.mrb[0].mxu0 %v67
  %v1581 = vpop.f32.mrb[0].mxu0
  %v1582 = vadd.f32 %v1494, %v1581
  %v1583 = vpop.f32.mrb[0].mxu0
  %v1584 = vadd.f32 %v1498, %v1583
  %1585 = vmatprep.mubr.f32.mxu0 0.0
  %1586 = vmatmul.mubr.f32.gmra.mrb[0].mxu0 %v70
  %v1587 = vpop.f32.mrb[0].mxu0
  %v1588 = vadd.f32 %v1494, %v1587
  %v1589 = vpop.f32.mrb[0].mxu0
  %v1590 = vadd.f32 %v1498, %v1589
  %1591 = vmatprep.mubr.f32.mxu0 0.0
  %1592 = vmatmul.mubr.f32.gmra.mrb[0].mxu0 %v73
  %v1593 = vpop.f32.mrb[0].mxu0
  %v1594 = vadd.f32 %v1494, %v1593
  %v1595 = vpop.f32.mrb[0].mxu0
  %v1596 = vadd.f32 %v1498, %v1595
  %1597 = vmatprep.mubr.f32.mxu0 0.0
  %1598 = vmatmul.mubr.f32.gmra.mrb[0].mxu0 %v76
  %v1599 = vpop.f32.mrb[0].mxu0
  %v1600 = vadd.f32 %v1494, %v1599
  %v1601 = vpop.f32.mrb[0].mxu0
  %v1602 = vadd.f32 %v1498, %v1601
  %1603 = vmatprep.mubr.f32.mxu0 0.0
  %1604 = vmatmul.mubr.f32.gmra.mrb[0].mxu0 %v79
  %v1605 = vpop.f32.mrb[0].mxu0
  %v1606 = vadd.f32 %v1494, %v1605
  %v1607 = vpop.f32.mrb[0].mxu0
  %v1608 = vadd.f32 %v1498, %v1607
  %1609 = vmatprep.mubr.f32.mxu0 0.0
  %1610 = vmatmul.mubr.f32.gmra.mrb[0].mxu0 %v82
  %v1611 = vpop.f32.mrb[0].mxu0
  %v1612 = vadd.f32 %v1494, %v1611
  %v1613 = vpop.f32.mrb[0].mxu0
  %v1614 = vadd.f32 %v1498, %v1613
  %1615 = vdwg.mxu0
  %1616 = vmatprep.subr.mxu0 0.0
  %1617 = vmatpush1.msra.mxu0 %v1477
  %1618 = vmatprep.subr.mxu0 0.0
  %1619 = vmatpush1.msra.mxu0 0.0
  %1620 = vmatprep.subr.mxu0 0.0
  %1621 = vmatpush1.msra.mxu0 0.0
  %1622 = vmatprep.subr.mxu0 0.0
  %1623 = vmatpush1.msra.mxu0 0.0
  %1624 = vmatprep.subr.mxu0 0.0
  %1625 = vmatpush1.msra.mxu0 0.0
  %1626 = vmatprep.subr.mxu0 0.0
  %1627 = vmatpush1.msra.mxu0 0.0
  %1628 = vmatprep.subr.mxu0 0.0
  %1629 = vmatpush1.msra.mxu0 0.0
  %1630 = vmatprep.subr.mxu0 0.0
  %1631 = vmatpush1.msra.mxu0 0.0
  %1632 = vmatprep.subr.mxu0 0.0
  %1633 = vmatpush1.msra.mxu0 0.0
  %1634 = vmatprep.subr.mxu0 0.0
  %1635 = vmatpush1.msra.mxu0 0.0
  %1636 = vmatprep.subr.mxu0 0.0
  %1637 = vmatpush1.msra.mxu0 0.0
  %1638 = vmatprep.subr.mxu0 0.0
  %1639 = vmatpush1.msra.mxu0 0.0
  %1640 = vmatprep.subr.mxu0 0.0
  %1641 = vmatpush1.msra.mxu0 0.0
  %1642 = vmatprep.subr.mxu0 0.0
  %1643 = vmatpush1.msra.mxu0 0.0
  %1644 = vmatprep.subr.mxu0 0.0
  %1645 = vmatpush1.msra.mxu0 0.0
  %1646 = vmatprep.subr.mxu0 0.0
  %1647 = vmatpush1.msra.mxu0 0.0
  %1648 = vmatprep.subr.mxu0 0.0
  %1649 = vmatpush1.msra.mxu0 0.0
  %1650 = vmatprep.subr.mxu0 0.0
  %1651 = vmatpush1.msra.mxu0 0.0
  %1652 = vmatprep.subr.mxu0 0.0
  %1653 = vmatpush1.msra.mxu0 0.0
  %1654 = vmatprep.subr.mxu0 0.0
  %1655 = vmatpush1.msra.mxu0 0.0
  %1656 = vmatprep.subr.mxu0 0.0
  %1657 = vmatpush1.msra.mxu0 0.0
  %1658 = vmatprep.subr.mxu0 0.0
  %1659 = vmatpush1.msra.mxu0 0.0
  %1660 = vmatprep.subr.mxu0 0.0
  %1661 = vmatpush1.msra.mxu0 0.0
  %1662 = vmatprep.subr.mxu0 0.0
  %1663 = vmatpush1.msra.mxu0 0.0
  %1664 = vmatprep.subr.mxu0 0.0
  %1665 = vmatpush1.msra.mxu0 0.0
  %1666 = vmatprep.subr.mxu0 0.0
  %1667 = vmatpush1.msra.mxu0 0.0
  %1668 = vmatprep.subr.mxu0 0.0
  %1669 = vmatpush1.msra.mxu0 0.0
  %1670 = vmatprep.subr.mxu0 0.0
  %1671 = vmatpush1.msra.mxu0 0.0
  %1672 = vmatprep.subr.mxu0 0.0
  %1673 = vmatpush1.msra.mxu0 0.0
  %1674 = vmatprep.subr.mxu0 0.0
  %1675 = vmatpush1.msra.mxu0 0.0
  %1676 = vmatprep.subr.mxu0 0.0
  %1677 = vmatpush1.msra.mxu0 0.0
  %1678 = vmatprep.subr.mxu0 0.0
  %1679 = vmatpush1.msra.mxu0 0.0
  %1680 = vmatprep.mubr.f32.mxu0 0.0
  %1681 = vmatmul.mubr.f32.gmra.mrb[0].mxu0 %v61
  %v1682 = vpop.f32.mrb[0].mxu0
  %v1683 = vadd.f32 %v1502, %v1682
  %v1684 = vpop.f32.mrb[0].mxu0
  %1685 = vmatprep.mubr.f32.mxu0 0.0
  %1686 = vmatmul.mubr.f32.gmra.mrb[0].mxu0 %v64
  %v1687 = vpop.f32.mrb[0].mxu0
  %v1688 = vadd.f32 %v1502, %v1687
  %v1689 = vpop.f32.mrb[0].mxu0
  %1690 = vmatprep.mubr.f32.mxu0 0.0
  %1691 = vmatmul.mubr.f32.gmra.mrb[0].mxu0 %v67
  %v1692 = vpop.f32.mrb[0].mxu0
  %v1693 = vadd.f32 %v1502, %v1692
  %v1694 = vpop.f32.mrb[0].mxu0
  %1695 = vmatprep.mubr.f32.mxu0 0.0
  %1696 = vmatmul.mubr.f32.gmra.mrb[0].mxu0 %v70
  %v1697 = vpop.f32.mrb[0].mxu0
  %v1698 = vadd.f32 %v1502, %v1697
  %v1699 = vpop.f32.mrb[0].mxu0
  %1700 = vmatprep.mubr.f32.mxu0 0.0
  %1701 = vmatmul.mubr.f32.gmra.mrb[0].mxu0 %v73
  %v1702 = vpop.f32.mrb[0].mxu0
  %v1703 = vadd.f32 %v1502, %v1702
  %v1704 = vpop.f32.mrb[0].mxu0
  %1705 = vmatprep.mubr.f32.mxu0 0.0
  %1706 = vmatmul.mubr.f32.gmra.mrb[0].mxu0 %v76
  %v1707 = vpop.f32.mrb[0].mxu0
  %v1708 = vadd.f32 %v1502, %v1707
  %v1709 = vpop.f32.mrb[0].mxu0
  %1710 = vmatprep.mubr.f32.mxu0 0.0
  %1711 = vmatmul.mubr.f32.gmra.mrb[0].mxu0 %v79
  %v1712 = vpop.f32.mrb[0].mxu0
  %v1713 = vadd.f32 %v1502, %v1712
  %v1714 = vpop.f32.mrb[0].mxu0
  %1715 = vmatprep.mubr.f32.mxu0 0.0
  %1716 = vmatmul.mubr.f32.gmra.mrb[0].mxu0 %v82
  %v1717 = vpop.f32.mrb[0].mxu0
  %v1718 = vadd.f32 %v1502, %v1717
  %v1719 = vpop.f32.mrb[0].mxu0
  %1720 = vdwg.mxu0
  %v1721 = vxor.u32 %v1612, 2147483648
  %v1722 = vmul.f32 %v1721, 1.442695
  %v1723 = vpow.pop %v1722
  %v1724 = vadd.f32 %v1723, 1.0
  %v1725 = vrcp.pop %v1724
  %v1726 = vmul.f32 1.0, %v1725
  %v1727 = vxor.u32 %v1614, 2147483648
  %v1728 = vmul.f32 %v1727, 1.442695
  %v1729 = vpow.pop %v1728
  %v1730 = vadd.f32 %v1729, 1.0
  %v1731 = vrcp.pop %v1730
  %v1732 = vmul.f32 1.0, %v1731
  %v1733 = vmul.f32 %v1726, %v1490
  %v1734 = vadd.f32 %v1718, %v1733
  %v1735 = vtanh.pop %v1734
  %v1736 = vmul.f32 %v1732, %v1735
  %v1737 = vsub.f32 %v1735, %v1736
  %v1739 = vsel %vm319, %v1737, 0
  %1741 = vmatprep.subr.mxu0 %v1479
  %1742 = vmatpush1.msra.mxu0 %v1478
  %1743 = vmatprep.subr.mxu0 %v1482
  %1744 = vmatpush1.msra.mxu0 %v1481
  %1745 = vmatprep.subr.mxu0 0.0
  %1746 = vmatpush1.msra.mxu0 0.0
  %1747 = vmatprep.subr.mxu0 0.0
  %1748 = vmatpush1.msra.mxu0 0.0
  %1749 = vmatprep.subr.mxu0 0.0
  %1750 = vmatpush1.msra.mxu0 0.0
  %1751 = vmatprep.subr.mxu0 0.0
  %1752 = vmatpush1.msra.mxu0 0.0
  %1753 = vmatprep.subr.mxu0 0.0
  %1754 = vmatpush1.msra.mxu0 0.0
  %1755 = vmatprep.subr.mxu0 0.0
  %1756 = vmatpush1.msra.mxu0 0.0
  %1757 = vmatprep.subr.mxu0 0.0
  %1758 = vmatpush1.msra.mxu0 0.0
  %1759 = vmatprep.subr.mxu0 0.0
  %1760 = vmatpush1.msra.mxu0 0.0
  %1761 = vmatprep.subr.mxu0 0.0
  %1762 = vmatpush1.msra.mxu0 0.0
  %1763 = vmatprep.subr.mxu0 0.0
  %1764 = vmatpush1.msra.mxu0 0.0
  %1765 = vmatprep.subr.mxu0 0.0
  %1766 = vmatpush1.msra.mxu0 0.0
  %1767 = vmatprep.subr.mxu0 0.0
  %1768 = vmatpush1.msra.mxu0 0.0
  %1769 = vmatprep.subr.mxu0 0.0
  %1770 = vmatpush1.msra.mxu0 0.0
  %1771 = vmatprep.subr.mxu0 0.0
  %1772 = vmatpush1.msra.mxu0 0.0
  %1773 = vmatprep.subr.mxu0 0.0
  %1774 = vmatpush1.msra.mxu0 0.0
  %1775 = vmatprep.subr.mxu0 0.0
  %1776 = vmatpush1.msra.mxu0 0.0
  %1777 = vmatprep.subr.mxu0 0.0
  %1778 = vmatpush1.msra.mxu0 0.0
  %1779 = vmatprep.subr.mxu0 0.0
  %1780 = vmatpush1.msra.mxu0 0.0
  %1781 = vmatprep.subr.mxu0 0.0
  %1782 = vmatpush1.msra.mxu0 0.0
  %1783 = vmatprep.subr.mxu0 0.0
  %1784 = vmatpush1.msra.mxu0 0.0
  %1785 = vmatprep.subr.mxu0 0.0
  %1786 = vmatpush1.msra.mxu0 0.0
  %1787 = vmatprep.subr.mxu0 0.0
  %1788 = vmatpush1.msra.mxu0 0.0
  %1789 = vmatprep.subr.mxu0 0.0
  %1790 = vmatpush1.msra.mxu0 0.0
  %1791 = vmatprep.subr.mxu0 0.0
  %1792 = vmatpush1.msra.mxu0 0.0
  %1793 = vmatprep.subr.mxu0 0.0
  %1794 = vmatpush1.msra.mxu0 0.0
  %1795 = vmatprep.subr.mxu0 0.0
  %1796 = vmatpush1.msra.mxu0 0.0
  %1797 = vmatprep.subr.mxu0 0.0
  %1798 = vmatpush1.msra.mxu0 0.0
  %1799 = vmatprep.subr.mxu0 0.0
  %1800 = vmatpush1.msra.mxu0 0.0
  %1801 = vmatprep.subr.mxu0 0.0
  %1802 = vmatpush1.msra.mxu0 0.0
  %1803 = vmatprep.subr.mxu0 0.0
  %1804 = vmatpush1.msra.mxu0 0.0
  %1805 = vmatprep.mubr.f32.mxu0 0.0
  %1806 = vmatmul.mubr.f32.gmra.mrb[0].mxu0 %v1739
  %v1807 = vpop.f32.mrb[0].mxu0
  %v1808 = vadd.f32 0.0, %v1807
  %v1809 = vpop.f32.mrb[0].mxu0
  %v1810 = vadd.f32 0.0, %v1809
  %1811 = vdwg.mxu0
  %1812 = vmatprep.subr.mxu0 0.0
  %1813 = vmatpush1.msra.mxu0 %v1480
  %1814 = vmatprep.subr.mxu0 0.0
  %1815 = vmatpush1.msra.mxu0 %v1483
  %1816 = vmatprep.subr.mxu0 0.0
  %1817 = vmatpush1.msra.mxu0 0.0
  %1818 = vmatprep.subr.mxu0 0.0
  %1819 = vmatpush1.msra.mxu0 0.0
  %1820 = vmatprep.subr.mxu0 0.0
  %1821 = vmatpush1.msra.mxu0 0.0
  %1822 = vmatprep.subr.mxu0 0.0
  %1823 = vmatpush1.msra.mxu0 0.0
  %1824 = vmatprep.subr.mxu0 0.0
  %1825 = vmatpush1.msra.mxu0 0.0
  %1826 = vmatprep.subr.mxu0 0.0
  %1827 = vmatpush1.msra.mxu0 0.0
  %1828 = vmatprep.subr.mxu0 0.0
  %1829 = vmatpush1.msra.mxu0 0.0
  %1830 = vmatprep.subr.mxu0 0.0
  %1831 = vmatpush1.msra.mxu0 0.0
  %1832 = vmatprep.subr.mxu0 0.0
  %1833 = vmatpush1.msra.mxu0 0.0
  %1834 = vmatprep.subr.mxu0 0.0
  %1835 = vmatpush1.msra.mxu0 0.0
  %1836 = vmatprep.subr.mxu0 0.0
  %1837 = vmatpush1.msra.mxu0 0.0
  %1838 = vmatprep.subr.mxu0 0.0
  %1839 = vmatpush1.msra.mxu0 0.0
  %1840 = vmatprep.subr.mxu0 0.0
  %1841 = vmatpush1.msra.mxu0 0.0
  %1842 = vmatprep.subr.mxu0 0.0
  %1843 = vmatpush1.msra.mxu0 0.0
  %1844 = vmatprep.subr.mxu0 0.0
  %1845 = vmatpush1.msra.mxu0 0.0
  %1846 = vmatprep.subr.mxu0 0.0
  %1847 = vmatpush1.msra.mxu0 0.0
  %1848 = vmatprep.subr.mxu0 0.0
  %1849 = vmatpush1.msra.mxu0 0.0
  %1850 = vmatprep.subr.mxu0 0.0
  %1851 = vmatpush1.msra.mxu0 0.0
  %1852 = vmatprep.subr.mxu0 0.0
  %1853 = vmatpush1.msra.mxu0 0.0
  %1854 = vmatprep.subr.mxu0 0.0
  %1855 = vmatpush1.msra.mxu0 0.0
  %1856 = vmatprep.subr.mxu0 0.0
  %1857 = vmatpush1.msra.mxu0 0.0
  %1858 = vmatprep.subr.mxu0 0.0
  %1859 = vmatpush1.msra.mxu0 0.0
  %1860 = vmatprep.subr.mxu0 0.0
  %1861 = vmatpush1.msra.mxu0 0.0
  %1862 = vmatprep.subr.mxu0 0.0
  %1863 = vmatpush1.msra.mxu0 0.0
  %1864 = vmatprep.subr.mxu0 0.0
  %1865 = vmatpush1.msra.mxu0 0.0
  %1866 = vmatprep.subr.mxu0 0.0
  %1867 = vmatpush1.msra.mxu0 0.0
  %1868 = vmatprep.subr.mxu0 0.0
  %1869 = vmatpush1.msra.mxu0 0.0
  %1870 = vmatprep.subr.mxu0 0.0
  %1871 = vmatpush1.msra.mxu0 0.0
  %1872 = vmatprep.subr.mxu0 0.0
  %1873 = vmatpush1.msra.mxu0 0.0
  %1874 = vmatprep.subr.mxu0 0.0
  %1875 = vmatpush1.msra.mxu0 0.0
  %1876 = vmatprep.mubr.f32.mxu0 0.0
  %1877 = vmatmul.mubr.f32.gmra.mrb[0].mxu0 %v1739
  %v1878 = vpop.f32.mrb[0].mxu0
  %v1879 = vadd.f32 0.0, %v1878
  %v1880 = vpop.f32.mrb[0].mxu0
  %1881 = vdwg.mxu0
  %v1882 = vadd.f32 %v1606, %v1808
  %v1883 = vxor.u32 %v1882, 2147483648
  %v1884 = vmul.f32 %v1883, 1.442695
  %v1885 = vpow.pop %v1884
  %v1886 = vadd.f32 %v1885, 1.0
  %v1887 = vrcp.pop %v1886
  %v1888 = vmul.f32 1.0, %v1887
  %v1889 = vadd.f32 %v1608, %v1810
  %v1890 = vxor.u32 %v1889, 2147483648
  %v1891 = vmul.f32 %v1890, 1.442695
  %v1892 = vpow.pop %v1891
  %v1893 = vadd.f32 %v1892, 1.0
  %v1894 = vrcp.pop %v1893
  %v1895 = vmul.f32 1.0, %v1894
  %v1896 = vadd.f32 %v1879, %v1490
  %v1897 = vmul.f32 %v1888, %v1896
  %v1898 = vadd.f32 %v1713, %v1897
  %v1899 = vtanh.pop %v1898
  %v1900 = vsub.f32 %v1737, %v1899
  %v1901 = vmul.f32 %v1895, %v1900
  %v1902 = vadd.f32 %v1901, %v1899
  %v1904 = vsel %vm319, %v1902, 0
  %1906 = vmatprep.subr.mxu0 %v1479
  %1907 = vmatpush1.msra.mxu0 %v1478
  %1908 = vmatprep.subr.mxu0 %v1482
  %1909 = vmatpush1.msra.mxu0 %v1481
  %1910 = vmatprep.subr.mxu0 0.0
  %1911 = vmatpush1.msra.mxu0 0.0
  %1912 = vmatprep.subr.mxu0 0.0
  %1913 = vmatpush1.msra.mxu0 0.0
  %1914 = vmatprep.subr.mxu0 0.0
  %1915 = vmatpush1.msra.mxu0 0.0
  %1916 = vmatprep.subr.mxu0 0.0
  %1917 = vmatpush1.msra.mxu0 0.0
  %1918 = vmatprep.subr.mxu0 0.0
  %1919 = vmatpush1.msra.mxu0 0.0
  %1920 = vmatprep.subr.mxu0 0.0
  %1921 = vmatpush1.msra.mxu0 0.0
  %1922 = vmatprep.subr.mxu0 0.0
  %1923 = vmatpush1.msra.mxu0 0.0
  %1924 = vmatprep.subr.mxu0 0.0
  %1925 = vmatpush1.msra.mxu0 0.0
  %1926 = vmatprep.subr.mxu0 0.0
  %1927 = vmatpush1.msra.mxu0 0.0
  %1928 = vmatprep.subr.mxu0 0.0
  %1929 = vmatpush1.msra.mxu0 0.0
  %1930 = vmatprep.subr.mxu0 0.0
  %1931 = vmatpush1.msra.mxu0 0.0
  %1932 = vmatprep.subr.mxu0 0.0
  %1933 = vmatpush1.msra.mxu0 0.0
  %1934 = vmatprep.subr.mxu0 0.0
  %1935 = vmatpush1.msra.mxu0 0.0
  %1936 = vmatprep.subr.mxu0 0.0
  %1937 = vmatpush1.msra.mxu0 0.0
  %1938 = vmatprep.subr.mxu0 0.0
  %1939 = vmatpush1.msra.mxu0 0.0
  %1940 = vmatprep.subr.mxu0 0.0
  %1941 = vmatpush1.msra.mxu0 0.0
  %1942 = vmatprep.subr.mxu0 0.0
  %1943 = vmatpush1.msra.mxu0 0.0
  %1944 = vmatprep.subr.mxu0 0.0
  %1945 = vmatpush1.msra.mxu0 0.0
  %1946 = vmatprep.subr.mxu0 0.0
  %1947 = vmatpush1.msra.mxu0 0.0
  %1948 = vmatprep.subr.mxu0 0.0
  %1949 = vmatpush1.msra.mxu0 0.0
  %1950 = vmatprep.subr.mxu0 0.0
  %1951 = vmatpush1.msra.mxu0 0.0
  %1952 = vmatprep.subr.mxu0 0.0
  %1953 = vmatpush1.msra.mxu0 0.0
  %1954 = vmatprep.subr.mxu0 0.0
  %1955 = vmatpush1.msra.mxu0 0.0
  %1956 = vmatprep.subr.mxu0 0.0
  %1957 = vmatpush1.msra.mxu0 0.0
  %1958 = vmatprep.subr.mxu0 0.0
  %1959 = vmatpush1.msra.mxu0 0.0
  %1960 = vmatprep.subr.mxu0 0.0
  %1961 = vmatpush1.msra.mxu0 0.0
  %1962 = vmatprep.subr.mxu0 0.0
  %1963 = vmatpush1.msra.mxu0 0.0
  %1964 = vmatprep.subr.mxu0 0.0
  %1965 = vmatpush1.msra.mxu0 0.0
  %1966 = vmatprep.subr.mxu0 0.0
  %1967 = vmatpush1.msra.mxu0 0.0
  %1968 = vmatprep.subr.mxu0 0.0
  %1969 = vmatpush1.msra.mxu0 0.0
  %1970 = vmatprep.mubr.f32.mxu0 0.0
  %1971 = vmatmul.mubr.f32.gmra.mrb[0].mxu0 %v1904
  %v1972 = vpop.f32.mrb[0].mxu0
  %v1973 = vadd.f32 0.0, %v1972
  %v1974 = vpop.f32.mrb[0].mxu0
  %v1975 = vadd.f32 0.0, %v1974
  %1976 = vdwg.mxu0
  %1977 = vmatprep.subr.mxu0 0.0
  %1978 = vmatpush1.msra.mxu0 %v1480
  %1979 = vmatprep.subr.mxu0 0.0
  %1980 = vmatpush1.msra.mxu0 %v1483
  %1981 = vmatprep.subr.mxu0 0.0
  %1982 = vmatpush1.msra.mxu0 0.0
  %1983 = vmatprep.subr.mxu0 0.0
  %1984 = vmatpush1.msra.mxu0 0.0
  %1985 = vmatprep.subr.mxu0 0.0
  %1986 = vmatpush1.msra.mxu0 0.0
  %1987 = vmatprep.subr.mxu0 0.0
  %1988 = vmatpush1.msra.mxu0 0.0
  %1989 = vmatprep.subr.mxu0 0.0
  %1990 = vmatpush1.msra.mxu0 0.0
  %1991 = vmatprep.subr.mxu0 0.0
  %1992 = vmatpush1.msra.mxu0 0.0
  %1993 = vmatprep.subr.mxu0 0.0
  %1994 = vmatpush1.msra.mxu0 0.0
  %1995 = vmatprep.subr.mxu0 0.0
  %1996 = vmatpush1.msra.mxu0 0.0
  %1997 = vmatprep.subr.mxu0 0.0
  %1998 = vmatpush1.msra.mxu0 0.0
  %1999 = vmatprep.subr.mxu0 0.0
  %2000 = vmatpush1.msra.mxu0 0.0
  %2001 = vmatprep.subr.mxu0 0.0
  %2002 = vmatpush1.msra.mxu0 0.0
  %2003 = vmatprep.subr.mxu0 0.0
  %2004 = vmatpush1.msra.mxu0 0.0
  %2005 = vmatprep.subr.mxu0 0.0
  %2006 = vmatpush1.msra.mxu0 0.0
  %2007 = vmatprep.subr.mxu0 0.0
  %2008 = vmatpush1.msra.mxu0 0.0
  %2009 = vmatprep.subr.mxu0 0.0
  %2010 = vmatpush1.msra.mxu0 0.0
  %2011 = vmatprep.subr.mxu0 0.0
  %2012 = vmatpush1.msra.mxu0 0.0
  %2013 = vmatprep.subr.mxu0 0.0
  %2014 = vmatpush1.msra.mxu0 0.0
  %2015 = vmatprep.subr.mxu0 0.0
  %2016 = vmatpush1.msra.mxu0 0.0
  %2017 = vmatprep.subr.mxu0 0.0
  %2018 = vmatpush1.msra.mxu0 0.0
  %2019 = vmatprep.subr.mxu0 0.0
  %2020 = vmatpush1.msra.mxu0 0.0
  %2021 = vmatprep.subr.mxu0 0.0
  %2022 = vmatpush1.msra.mxu0 0.0
  %2023 = vmatprep.subr.mxu0 0.0
  %2024 = vmatpush1.msra.mxu0 0.0
  %2025 = vmatprep.subr.mxu0 0.0
  %2026 = vmatpush1.msra.mxu0 0.0
  %2027 = vmatprep.subr.mxu0 0.0
  %2028 = vmatpush1.msra.mxu0 0.0
  %2029 = vmatprep.subr.mxu0 0.0
  %2030 = vmatpush1.msra.mxu0 0.0
  %2031 = vmatprep.subr.mxu0 0.0
  %2032 = vmatpush1.msra.mxu0 0.0
  %2033 = vmatprep.subr.mxu0 0.0
  %2034 = vmatpush1.msra.mxu0 0.0
  %2035 = vmatprep.subr.mxu0 0.0
  %2036 = vmatpush1.msra.mxu0 0.0
  %2037 = vmatprep.subr.mxu0 0.0
  %2038 = vmatpush1.msra.mxu0 0.0
  %2039 = vmatprep.subr.mxu0 0.0
  %2040 = vmatpush1.msra.mxu0 0.0
  %2041 = vmatprep.mubr.f32.mxu0 0.0
  %2042 = vmatmul.mubr.f32.gmra.mrb[0].mxu0 %v1904
  %v2043 = vpop.f32.mrb[0].mxu0
  %v2044 = vadd.f32 0.0, %v2043
  %v2045 = vpop.f32.mrb[0].mxu0
  %2046 = vdwg.mxu0
  %v2047 = vadd.f32 %v1600, %v1973
  %v2048 = vxor.u32 %v2047, 2147483648
  %v2049 = vmul.f32 %v2048, 1.442695
  %v2050 = vpow.pop %v2049
  %v2051 = vadd.f32 %v2050, 1.0
  %v2052 = vrcp.pop %v2051
  %v2053 = vmul.f32 1.0, %v2052
  %v2054 = vadd.f32 %v1602, %v1975
  %v2055 = vxor.u32 %v2054, 2147483648
  %v2056 = vmul.f32 %v2055, 1.442695
  %v2057 = vpow.pop %v2056
  %v2058 = vadd.f32 %v2057, 1.0
  %v2059 = vrcp.pop %v2058
  %v2060 = vmul.f32 1.0, %v2059
  %v2061 = vadd.f32 %v2044, %v1490
  %v2062 = vmul.f32 %v2053, %v2061
  %v2063 = vadd.f32 %v1708, %v2062
  %v2064 = vtanh.pop %v2063
  %v2065 = vsub.f32 %v1902, %v2064
  %v2066 = vmul.f32 %v2060, %v2065
  %v2067 = vadd.f32 %v2066, %v2064
  %v2069 = vsel %vm319, %v2067, 0
  %2071 = vmatprep.subr.mxu0 %v1479
  %2072 = vmatpush1.msra.mxu0 %v1478
  %2073 = vmatprep.subr.mxu0 %v1482
  %2074 = vmatpush1.msra.mxu0 %v1481
  %2075 = vmatprep.subr.mxu0 0.0
  %2076 = vmatpush1.msra.mxu0 0.0
  %2077 = vmatprep.subr.mxu0 0.0
  %2078 = vmatpush1.msra.mxu0 0.0
  %2079 = vmatprep.subr.mxu0 0.0
  %2080 = vmatpush1.msra.mxu0 0.0
  %2081 = vmatprep.subr.mxu0 0.0
  %2082 = vmatpush1.msra.mxu0 0.0
  %2083 = vmatprep.subr.mxu0 0.0
  %2084 = vmatpush1.msra.mxu0 0.0
  %2085 = vmatprep.subr.mxu0 0.0
  %2086 = vmatpush1.msra.mxu0 0.0
  %2087 = vmatprep.subr.mxu0 0.0
  %2088 = vmatpush1.msra.mxu0 0.0
  %2089 = vmatprep.subr.mxu0 0.0
  %2090 = vmatpush1.msra.mxu0 0.0
  %2091 = vmatprep.subr.mxu0 0.0
  %2092 = vmatpush1.msra.mxu0 0.0
  %2093 = vmatprep.subr.mxu0 0.0
  %2094 = vmatpush1.msra.mxu0 0.0
  %2095 = vmatprep.subr.mxu0 0.0
  %2096 = vmatpush1.msra.mxu0 0.0
  %2097 = vmatprep.subr.mxu0 0.0
  %2098 = vmatpush1.msra.mxu0 0.0
  %2099 = vmatprep.subr.mxu0 0.0
  %2100 = vmatpush1.msra.mxu0 0.0
  %2101 = vmatprep.subr.mxu0 0.0
  %2102 = vmatpush1.msra.mxu0 0.0
  %2103 = vmatprep.subr.mxu0 0.0
  %2104 = vmatpush1.msra.mxu0 0.0
  %2105 = vmatprep.subr.mxu0 0.0
  %2106 = vmatpush1.msra.mxu0 0.0
  %2107 = vmatprep.subr.mxu0 0.0
  %2108 = vmatpush1.msra.mxu0 0.0
  %2109 = vmatprep.subr.mxu0 0.0
  %2110 = vmatpush1.msra.mxu0 0.0
  %2111 = vmatprep.subr.mxu0 0.0
  %2112 = vmatpush1.msra.mxu0 0.0
  %2113 = vmatprep.subr.mxu0 0.0
  %2114 = vmatpush1.msra.mxu0 0.0
  %2115 = vmatprep.subr.mxu0 0.0
  %2116 = vmatpush1.msra.mxu0 0.0
  %2117 = vmatprep.subr.mxu0 0.0
  %2118 = vmatpush1.msra.mxu0 0.0
  %2119 = vmatprep.subr.mxu0 0.0
  %2120 = vmatpush1.msra.mxu0 0.0
  %2121 = vmatprep.subr.mxu0 0.0
  %2122 = vmatpush1.msra.mxu0 0.0
  %2123 = vmatprep.subr.mxu0 0.0
  %2124 = vmatpush1.msra.mxu0 0.0
  %2125 = vmatprep.subr.mxu0 0.0
  %2126 = vmatpush1.msra.mxu0 0.0
  %2127 = vmatprep.subr.mxu0 0.0
  %2128 = vmatpush1.msra.mxu0 0.0
  %2129 = vmatprep.subr.mxu0 0.0
  %2130 = vmatpush1.msra.mxu0 0.0
  %2131 = vmatprep.subr.mxu0 0.0
  %2132 = vmatpush1.msra.mxu0 0.0
  %2133 = vmatprep.subr.mxu0 0.0
  %2134 = vmatpush1.msra.mxu0 0.0
  %2135 = vmatprep.mubr.f32.mxu0 0.0
  %2136 = vmatmul.mubr.f32.gmra.mrb[0].mxu0 %v2069
  %v2137 = vpop.f32.mrb[0].mxu0
  %v2138 = vadd.f32 0.0, %v2137
  %v2139 = vpop.f32.mrb[0].mxu0
  %v2140 = vadd.f32 0.0, %v2139
  %2141 = vdwg.mxu0
  %2142 = vmatprep.subr.mxu0 0.0
  %2143 = vmatpush1.msra.mxu0 %v1480
  %2144 = vmatprep.subr.mxu0 0.0
  %2145 = vmatpush1.msra.mxu0 %v1483
  %2146 = vmatprep.subr.mxu0 0.0
  %2147 = vmatpush1.msra.mxu0 0.0
  %2148 = vmatprep.subr.mxu0 0.0
  %2149 = vmatpush1.msra.mxu0 0.0
  %2150 = vmatprep.subr.mxu0 0.0
  %2151 = vmatpush1.msra.mxu0 0.0
  %2152 = vmatprep.subr.mxu0 0.0
  %2153 = vmatpush1.msra.mxu0 0.0
  %2154 = vmatprep.subr.mxu0 0.0
  %2155 = vmatpush1.msra.mxu0 0.0
  %2156 = vmatprep.subr.mxu0 0.0
  %2157 = vmatpush1.msra.mxu0 0.0
  %2158 = vmatprep.subr.mxu0 0.0
  %2159 = vmatpush1.msra.mxu0 0.0
  %2160 = vmatprep.subr.mxu0 0.0
  %2161 = vmatpush1.msra.mxu0 0.0
  %2162 = vmatprep.subr.mxu0 0.0
  %2163 = vmatpush1.msra.mxu0 0.0
  %2164 = vmatprep.subr.mxu0 0.0
  %2165 = vmatpush1.msra.mxu0 0.0
  %2166 = vmatprep.subr.mxu0 0.0
  %2167 = vmatpush1.msra.mxu0 0.0
  %2168 = vmatprep.subr.mxu0 0.0
  %2169 = vmatpush1.msra.mxu0 0.0
  %2170 = vmatprep.subr.mxu0 0.0
  %2171 = vmatpush1.msra.mxu0 0.0
  %2172 = vmatprep.subr.mxu0 0.0
  %2173 = vmatpush1.msra.mxu0 0.0
  %2174 = vmatprep.subr.mxu0 0.0
  %2175 = vmatpush1.msra.mxu0 0.0
  %2176 = vmatprep.subr.mxu0 0.0
  %2177 = vmatpush1.msra.mxu0 0.0
  %2178 = vmatprep.subr.mxu0 0.0
  %2179 = vmatpush1.msra.mxu0 0.0
  %2180 = vmatprep.subr.mxu0 0.0
  %2181 = vmatpush1.msra.mxu0 0.0
  %2182 = vmatprep.subr.mxu0 0.0
  %2183 = vmatpush1.msra.mxu0 0.0
  %2184 = vmatprep.subr.mxu0 0.0
  %2185 = vmatpush1.msra.mxu0 0.0
  %2186 = vmatprep.subr.mxu0 0.0
  %2187 = vmatpush1.msra.mxu0 0.0
  %2188 = vmatprep.subr.mxu0 0.0
  %2189 = vmatpush1.msra.mxu0 0.0
  %2190 = vmatprep.subr.mxu0 0.0
  %2191 = vmatpush1.msra.mxu0 0.0
  %2192 = vmatprep.subr.mxu0 0.0
  %2193 = vmatpush1.msra.mxu0 0.0
  %2194 = vmatprep.subr.mxu0 0.0
  %2195 = vmatpush1.msra.mxu0 0.0
  %2196 = vmatprep.subr.mxu0 0.0
  %2197 = vmatpush1.msra.mxu0 0.0
  %2198 = vmatprep.subr.mxu0 0.0
  %2199 = vmatpush1.msra.mxu0 0.0
  %2200 = vmatprep.subr.mxu0 0.0
  %2201 = vmatpush1.msra.mxu0 0.0
  %2202 = vmatprep.subr.mxu0 0.0
  %2203 = vmatpush1.msra.mxu0 0.0
  %2204 = vmatprep.subr.mxu0 0.0
  %2205 = vmatpush1.msra.mxu0 0.0
  %2206 = vmatprep.mubr.f32.mxu0 0.0
  %2207 = vmatmul.mubr.f32.gmra.mrb[0].mxu0 %v2069
  %v2208 = vpop.f32.mrb[0].mxu0
  %v2209 = vadd.f32 0.0, %v2208
  %v2210 = vpop.f32.mrb[0].mxu0
  %2211 = vdwg.mxu0
  %v2212 = vadd.f32 %v1594, %v2138
  %v2213 = vxor.u32 %v2212, 2147483648
  %v2214 = vmul.f32 %v2213, 1.442695
  %v2215 = vpow.pop %v2214
  %v2216 = vadd.f32 %v2215, 1.0
  %v2217 = vrcp.pop %v2216
  %v2218 = vmul.f32 1.0, %v2217
  %v2219 = vadd.f32 %v1596, %v2140
  %v2220 = vxor.u32 %v2219, 2147483648
  %v2221 = vmul.f32 %v2220, 1.442695
  %v2222 = vpow.pop %v2221
  %v2223 = vadd.f32 %v2222, 1.0
  %v2224 = vrcp.pop %v2223
  %v2225 = vmul.f32 1.0, %v2224
  %v2226 = vadd.f32 %v2209, %v1490
  %v2227 = vmul.f32 %v2218, %v2226
  %v2228 = vadd.f32 %v1703, %v2227
  %v2229 = vtanh.pop %v2228
  %v2230 = vsub.f32 %v2067, %v2229
  %v2231 = vmul.f32 %v2225, %v2230
  %v2232 = vadd.f32 %v2231, %v2229
  %v2234 = vsel %vm319, %v2232, 0
  %2236 = vmatprep.subr.mxu0 %v1479
  %2237 = vmatpush1.msra.mxu0 %v1478
  %2238 = vmatprep.subr.mxu0 %v1482
  %2239 = vmatpush1.msra.mxu0 %v1481
  %2240 = vmatprep.subr.mxu0 0.0
  %2241 = vmatpush1.msra.mxu0 0.0
  %2242 = vmatprep.subr.mxu0 0.0
  %2243 = vmatpush1.msra.mxu0 0.0
  %2244 = vmatprep.subr.mxu0 0.0
  %2245 = vmatpush1.msra.mxu0 0.0
  %2246 = vmatprep.subr.mxu0 0.0
  %2247 = vmatpush1.msra.mxu0 0.0
  %2248 = vmatprep.subr.mxu0 0.0
  %2249 = vmatpush1.msra.mxu0 0.0
  %2250 = vmatprep.subr.mxu0 0.0
  %2251 = vmatpush1.msra.mxu0 0.0
  %2252 = vmatprep.subr.mxu0 0.0
  %2253 = vmatpush1.msra.mxu0 0.0
  %2254 = vmatprep.subr.mxu0 0.0
  %2255 = vmatpush1.msra.mxu0 0.0
  %2256 = vmatprep.subr.mxu0 0.0
  %2257 = vmatpush1.msra.mxu0 0.0
  %2258 = vmatprep.subr.mxu0 0.0
  %2259 = vmatpush1.msra.mxu0 0.0
  %2260 = vmatprep.subr.mxu0 0.0
  %2261 = vmatpush1.msra.mxu0 0.0
  %2262 = vmatprep.subr.mxu0 0.0
  %2263 = vmatpush1.msra.mxu0 0.0
  %2264 = vmatprep.subr.mxu0 0.0
  %2265 = vmatpush1.msra.mxu0 0.0
  %2266 = vmatprep.subr.mxu0 0.0
  %2267 = vmatpush1.msra.mxu0 0.0
  %2268 = vmatprep.subr.mxu0 0.0
  %2269 = vmatpush1.msra.mxu0 0.0
  %2270 = vmatprep.subr.mxu0 0.0
  %2271 = vmatpush1.msra.mxu0 0.0
  %2272 = vmatprep.subr.mxu0 0.0
  %2273 = vmatpush1.msra.mxu0 0.0
  %2274 = vmatprep.subr.mxu0 0.0
  %2275 = vmatpush1.msra.mxu0 0.0
  %2276 = vmatprep.subr.mxu0 0.0
  %2277 = vmatpush1.msra.mxu0 0.0
  %2278 = vmatprep.subr.mxu0 0.0
  %2279 = vmatpush1.msra.mxu0 0.0
  %2280 = vmatprep.subr.mxu0 0.0
  %2281 = vmatpush1.msra.mxu0 0.0
  %2282 = vmatprep.subr.mxu0 0.0
  %2283 = vmatpush1.msra.mxu0 0.0
  %2284 = vmatprep.subr.mxu0 0.0
  %2285 = vmatpush1.msra.mxu0 0.0
  %2286 = vmatprep.subr.mxu0 0.0
  %2287 = vmatpush1.msra.mxu0 0.0
  %2288 = vmatprep.subr.mxu0 0.0
  %2289 = vmatpush1.msra.mxu0 0.0
  %2290 = vmatprep.subr.mxu0 0.0
  %2291 = vmatpush1.msra.mxu0 0.0
  %2292 = vmatprep.subr.mxu0 0.0
  %2293 = vmatpush1.msra.mxu0 0.0
  %2294 = vmatprep.subr.mxu0 0.0
  %2295 = vmatpush1.msra.mxu0 0.0
  %2296 = vmatprep.subr.mxu0 0.0
  %2297 = vmatpush1.msra.mxu0 0.0
  %2298 = vmatprep.subr.mxu0 0.0
  %2299 = vmatpush1.msra.mxu0 0.0
  %2300 = vmatprep.mubr.f32.mxu0 0.0
  %2301 = vmatmul.mubr.f32.gmra.mrb[0].mxu0 %v2234
  %v2302 = vpop.f32.mrb[0].mxu0
  %v2303 = vadd.f32 0.0, %v2302
  %v2304 = vpop.f32.mrb[0].mxu0
  %v2305 = vadd.f32 0.0, %v2304
  %2306 = vdwg.mxu0
  %2307 = vmatprep.subr.mxu0 0.0
  %2308 = vmatpush1.msra.mxu0 %v1480
  %2309 = vmatprep.subr.mxu0 0.0
  %2310 = vmatpush1.msra.mxu0 %v1483
  %2311 = vmatprep.subr.mxu0 0.0
  %2312 = vmatpush1.msra.mxu0 0.0
  %2313 = vmatprep.subr.mxu0 0.0
  %2314 = vmatpush1.msra.mxu0 0.0
  %2315 = vmatprep.subr.mxu0 0.0
  %2316 = vmatpush1.msra.mxu0 0.0
  %2317 = vmatprep.subr.mxu0 0.0
  %2318 = vmatpush1.msra.mxu0 0.0
  %2319 = vmatprep.subr.mxu0 0.0
  %2320 = vmatpush1.msra.mxu0 0.0
  %2321 = vmatprep.subr.mxu0 0.0
  %2322 = vmatpush1.msra.mxu0 0.0
  %2323 = vmatprep.subr.mxu0 0.0
  %2324 = vmatpush1.msra.mxu0 0.0
  %2325 = vmatprep.subr.mxu0 0.0
  %2326 = vmatpush1.msra.mxu0 0.0
  %2327 = vmatprep.subr.mxu0 0.0
  %2328 = vmatpush1.msra.mxu0 0.0
  %2329 = vmatprep.subr.mxu0 0.0
  %2330 = vmatpush1.msra.mxu0 0.0
  %2331 = vmatprep.subr.mxu0 0.0
  %2332 = vmatpush1.msra.mxu0 0.0
  %2333 = vmatprep.subr.mxu0 0.0
  %2334 = vmatpush1.msra.mxu0 0.0
  %2335 = vmatprep.subr.mxu0 0.0
  %2336 = vmatpush1.msra.mxu0 0.0
  %2337 = vmatprep.subr.mxu0 0.0
  %2338 = vmatpush1.msra.mxu0 0.0
  %2339 = vmatprep.subr.mxu0 0.0
  %2340 = vmatpush1.msra.mxu0 0.0
  %2341 = vmatprep.subr.mxu0 0.0
  %2342 = vmatpush1.msra.mxu0 0.0
  %2343 = vmatprep.subr.mxu0 0.0
  %2344 = vmatpush1.msra.mxu0 0.0
  %2345 = vmatprep.subr.mxu0 0.0
  %2346 = vmatpush1.msra.mxu0 0.0
  %2347 = vmatprep.subr.mxu0 0.0
  %2348 = vmatpush1.msra.mxu0 0.0
  %2349 = vmatprep.subr.mxu0 0.0
  %2350 = vmatpush1.msra.mxu0 0.0
  %2351 = vmatprep.subr.mxu0 0.0
  %2352 = vmatpush1.msra.mxu0 0.0
  %2353 = vmatprep.subr.mxu0 0.0
  %2354 = vmatpush1.msra.mxu0 0.0
  %2355 = vmatprep.subr.mxu0 0.0
  %2356 = vmatpush1.msra.mxu0 0.0
  %2357 = vmatprep.subr.mxu0 0.0
  %2358 = vmatpush1.msra.mxu0 0.0
  %2359 = vmatprep.subr.mxu0 0.0
  %2360 = vmatpush1.msra.mxu0 0.0
  %2361 = vmatprep.subr.mxu0 0.0
  %2362 = vmatpush1.msra.mxu0 0.0
  %2363 = vmatprep.subr.mxu0 0.0
  %2364 = vmatpush1.msra.mxu0 0.0
  %2365 = vmatprep.subr.mxu0 0.0
  %2366 = vmatpush1.msra.mxu0 0.0
  %2367 = vmatprep.subr.mxu0 0.0
  %2368 = vmatpush1.msra.mxu0 0.0
  %2369 = vmatprep.subr.mxu0 0.0
  %2370 = vmatpush1.msra.mxu0 0.0
  %2371 = vmatprep.mubr.f32.mxu0 0.0
  %2372 = vmatmul.mubr.f32.gmra.mrb[0].mxu0 %v2234
  %v2373 = vpop.f32.mrb[0].mxu0
  %v2374 = vadd.f32 0.0, %v2373
  %v2375 = vpop.f32.mrb[0].mxu0
  %2376 = vdwg.mxu0
  %v2377 = vadd.f32 %v1588, %v2303
  %v2378 = vxor.u32 %v2377, 2147483648
  %v2379 = vmul.f32 %v2378, 1.442695
  %v2380 = vpow.pop %v2379
  %v2381 = vadd.f32 %v2380, 1.0
  %v2382 = vrcp.pop %v2381
  %v2383 = vmul.f32 1.0, %v2382
  %v2384 = vadd.f32 %v1590, %v2305
  %v2385 = vxor.u32 %v2384, 2147483648
  %v2386 = vmul.f32 %v2385, 1.442695
  %v2387 = vpow.pop %v2386
  %v2388 = vadd.f32 %v2387, 1.0
  %v2389 = vrcp.pop %v2388
  %v2390 = vmul.f32 1.0, %v2389
  %v2391 = vadd.f32 %v2374, %v1490
  %v2392 = vmul.f32 %v2383, %v2391
  %v2393 = vadd.f32 %v1698, %v2392
  %v2394 = vtanh.pop %v2393
  %v2395 = vsub.f32 %v2232, %v2394
  %v2396 = vmul.f32 %v2390, %v2395
  %v2397 = vadd.f32 %v2396, %v2394
  %v2399 = vsel %vm319, %v2397, 0
  %2401 = vmatprep.subr.mxu0 %v1479
  %2402 = vmatpush1.msra.mxu0 %v1478
  %2403 = vmatprep.subr.mxu0 %v1482
  %2404 = vmatpush1.msra.mxu0 %v1481
  %2405 = vmatprep.subr.mxu0 0.0
  %2406 = vmatpush1.msra.mxu0 0.0
  %2407 = vmatprep.subr.mxu0 0.0
  %2408 = vmatpush1.msra.mxu0 0.0
  %2409 = vmatprep.subr.mxu0 0.0
  %2410 = vmatpush1.msra.mxu0 0.0
  %2411 = vmatprep.subr.mxu0 0.0
  %2412 = vmatpush1.msra.mxu0 0.0
  %2413 = vmatprep.subr.mxu0 0.0
  %2414 = vmatpush1.msra.mxu0 0.0
  %2415 = vmatprep.subr.mxu0 0.0
  %2416 = vmatpush1.msra.mxu0 0.0
  %2417 = vmatprep.subr.mxu0 0.0
  %2418 = vmatpush1.msra.mxu0 0.0
  %2419 = vmatprep.subr.mxu0 0.0
  %2420 = vmatpush1.msra.mxu0 0.0
  %2421 = vmatprep.subr.mxu0 0.0
  %2422 = vmatpush1.msra.mxu0 0.0
  %2423 = vmatprep.subr.mxu0 0.0
  %2424 = vmatpush1.msra.mxu0 0.0
  %2425 = vmatprep.subr.mxu0 0.0
  %2426 = vmatpush1.msra.mxu0 0.0
  %2427 = vmatprep.subr.mxu0 0.0
  %2428 = vmatpush1.msra.mxu0 0.0
  %2429 = vmatprep.subr.mxu0 0.0
  %2430 = vmatpush1.msra.mxu0 0.0
  %2431 = vmatprep.subr.mxu0 0.0
  %2432 = vmatpush1.msra.mxu0 0.0
  %2433 = vmatprep.subr.mxu0 0.0
  %2434 = vmatpush1.msra.mxu0 0.0
  %2435 = vmatprep.subr.mxu0 0.0
  %2436 = vmatpush1.msra.mxu0 0.0
  %2437 = vmatprep.subr.mxu0 0.0
  %2438 = vmatpush1.msra.mxu0 0.0
  %2439 = vmatprep.subr.mxu0 0.0
  %2440 = vmatpush1.msra.mxu0 0.0
  %2441 = vmatprep.subr.mxu0 0.0
  %2442 = vmatpush1.msra.mxu0 0.0
  %2443 = vmatprep.subr.mxu0 0.0
  %2444 = vmatpush1.msra.mxu0 0.0
  %2445 = vmatprep.subr.mxu0 0.0
  %2446 = vmatpush1.msra.mxu0 0.0
  %2447 = vmatprep.subr.mxu0 0.0
  %2448 = vmatpush1.msra.mxu0 0.0
  %2449 = vmatprep.subr.mxu0 0.0
  %2450 = vmatpush1.msra.mxu0 0.0
  %2451 = vmatprep.subr.mxu0 0.0
  %2452 = vmatpush1.msra.mxu0 0.0
  %2453 = vmatprep.subr.mxu0 0.0
  %2454 = vmatpush1.msra.mxu0 0.0
  %2455 = vmatprep.subr.mxu0 0.0
  %2456 = vmatpush1.msra.mxu0 0.0
  %2457 = vmatprep.subr.mxu0 0.0
  %2458 = vmatpush1.msra.mxu0 0.0
  %2459 = vmatprep.subr.mxu0 0.0
  %2460 = vmatpush1.msra.mxu0 0.0
  %2461 = vmatprep.subr.mxu0 0.0
  %2462 = vmatpush1.msra.mxu0 0.0
  %2463 = vmatprep.subr.mxu0 0.0
  %2464 = vmatpush1.msra.mxu0 0.0
  %2465 = vmatprep.mubr.f32.mxu0 0.0
  %2466 = vmatmul.mubr.f32.gmra.mrb[0].mxu0 %v2399
  %v2467 = vpop.f32.mrb[0].mxu0
  %v2468 = vadd.f32 0.0, %v2467
  %v2469 = vpop.f32.mrb[0].mxu0
  %v2470 = vadd.f32 0.0, %v2469
  %2471 = vdwg.mxu0
  %2472 = vmatprep.subr.mxu0 0.0
  %2473 = vmatpush1.msra.mxu0 %v1480
  %2474 = vmatprep.subr.mxu0 0.0
  %2475 = vmatpush1.msra.mxu0 %v1483
  %2476 = vmatprep.subr.mxu0 0.0
  %2477 = vmatpush1.msra.mxu0 0.0
  %2478 = vmatprep.subr.mxu0 0.0
  %2479 = vmatpush1.msra.mxu0 0.0
  %2480 = vmatprep.subr.mxu0 0.0
  %2481 = vmatpush1.msra.mxu0 0.0
  %2482 = vmatprep.subr.mxu0 0.0
  %2483 = vmatpush1.msra.mxu0 0.0
  %2484 = vmatprep.subr.mxu0 0.0
  %2485 = vmatpush1.msra.mxu0 0.0
  %2486 = vmatprep.subr.mxu0 0.0
  %2487 = vmatpush1.msra.mxu0 0.0
  %2488 = vmatprep.subr.mxu0 0.0
  %2489 = vmatpush1.msra.mxu0 0.0
  %2490 = vmatprep.subr.mxu0 0.0
  %2491 = vmatpush1.msra.mxu0 0.0
  %2492 = vmatprep.subr.mxu0 0.0
  %2493 = vmatpush1.msra.mxu0 0.0
  %2494 = vmatprep.subr.mxu0 0.0
  %2495 = vmatpush1.msra.mxu0 0.0
  %2496 = vmatprep.subr.mxu0 0.0
  %2497 = vmatpush1.msra.mxu0 0.0
  %2498 = vmatprep.subr.mxu0 0.0
  %2499 = vmatpush1.msra.mxu0 0.0
  %2500 = vmatprep.subr.mxu0 0.0
  %2501 = vmatpush1.msra.mxu0 0.0
  %2502 = vmatprep.subr.mxu0 0.0
  %2503 = vmatpush1.msra.mxu0 0.0
  %2504 = vmatprep.subr.mxu0 0.0
  %2505 = vmatpush1.msra.mxu0 0.0
  %2506 = vmatprep.subr.mxu0 0.0
  %2507 = vmatpush1.msra.mxu0 0.0
  %2508 = vmatprep.subr.mxu0 0.0
  %2509 = vmatpush1.msra.mxu0 0.0
  %2510 = vmatprep.subr.mxu0 0.0
  %2511 = vmatpush1.msra.mxu0 0.0
  %2512 = vmatprep.subr.mxu0 0.0
  %2513 = vmatpush1.msra.mxu0 0.0
  %2514 = vmatprep.subr.mxu0 0.0
  %2515 = vmatpush1.msra.mxu0 0.0
  %2516 = vmatprep.subr.mxu0 0.0
  %2517 = vmatpush1.msra.mxu0 0.0
  %2518 = vmatprep.subr.mxu0 0.0
  %2519 = vmatpush1.msra.mxu0 0.0
  %2520 = vmatprep.subr.mxu0 0.0
  %2521 = vmatpush1.msra.mxu0 0.0
  %2522 = vmatprep.subr.mxu0 0.0
  %2523 = vmatpush1.msra.mxu0 0.0
  %2524 = vmatprep.subr.mxu0 0.0
  %2525 = vmatpush1.msra.mxu0 0.0
  %2526 = vmatprep.subr.mxu0 0.0
  %2527 = vmatpush1.msra.mxu0 0.0
  %2528 = vmatprep.subr.mxu0 0.0
  %2529 = vmatpush1.msra.mxu0 0.0
  %2530 = vmatprep.subr.mxu0 0.0
  %2531 = vmatpush1.msra.mxu0 0.0
  %2532 = vmatprep.subr.mxu0 0.0
  %2533 = vmatpush1.msra.mxu0 0.0
  %2534 = vmatprep.subr.mxu0 0.0
  %2535 = vmatpush1.msra.mxu0 0.0
  %2536 = vmatprep.mubr.f32.mxu0 0.0
  %2537 = vmatmul.mubr.f32.gmra.mrb[0].mxu0 %v2399
  %v2538 = vpop.f32.mrb[0].mxu0
  %v2539 = vadd.f32 0.0, %v2538
  %v2540 = vpop.f32.mrb[0].mxu0
  %2541 = vdwg.mxu0
  %v2542 = vadd.f32 %v1582, %v2468
  %v2543 = vxor.u32 %v2542, 2147483648
  %v2544 = vmul.f32 %v2543, 1.442695
  %v2545 = vpow.pop %v2544
  %v2546 = vadd.f32 %v2545, 1.0
  %v2547 = vrcp.pop %v2546
  %v2548 = vmul.f32 1.0, %v2547
  %v2549 = vadd.f32 %v1584, %v2470
  %v2550 = vxor.u32 %v2549, 2147483648
  %v2551 = vmul.f32 %v2550, 1.442695
  %v2552 = vpow.pop %v2551
  %v2553 = vadd.f32 %v2552, 1.0
  %v2554 = vrcp.pop %v2553
  %v2555 = vmul.f32 1.0, %v2554
  %v2556 = vadd.f32 %v2539, %v1490
  %v2557 = vmul.f32 %v2548, %v2556
  %v2558 = vadd.f32 %v1693, %v2557
  %v2559 = vtanh.pop %v2558
  %v2560 = vsub.f32 %v2397, %v2559
  %v2561 = vmul.f32 %v2555, %v2560
  %v2562 = vadd.f32 %v2561, %v2559
  %v2564 = vsel %vm319, %v2562, 0
  %2566 = vmatprep.subr.mxu0 %v1479
  %2567 = vmatpush1.msra.mxu0 %v1478
  %2568 = vmatprep.subr.mxu0 %v1482
  %2569 = vmatpush1.msra.mxu0 %v1481
  %2570 = vmatprep.subr.mxu0 0.0
  %2571 = vmatpush1.msra.mxu0 0.0
  %2572 = vmatprep.subr.mxu0 0.0
  %2573 = vmatpush1.msra.mxu0 0.0
  %2574 = vmatprep.subr.mxu0 0.0
  %2575 = vmatpush1.msra.mxu0 0.0
  %2576 = vmatprep.subr.mxu0 0.0
  %2577 = vmatpush1.msra.mxu0 0.0
  %2578 = vmatprep.subr.mxu0 0.0
  %2579 = vmatpush1.msra.mxu0 0.0
  %2580 = vmatprep.subr.mxu0 0.0
  %2581 = vmatpush1.msra.mxu0 0.0
  %2582 = vmatprep.subr.mxu0 0.0
  %2583 = vmatpush1.msra.mxu0 0.0
  %2584 = vmatprep.subr.mxu0 0.0
  %2585 = vmatpush1.msra.mxu0 0.0
  %2586 = vmatprep.subr.mxu0 0.0
  %2587 = vmatpush1.msra.mxu0 0.0
  %2588 = vmatprep.subr.mxu0 0.0
  %2589 = vmatpush1.msra.mxu0 0.0
  %2590 = vmatprep.subr.mxu0 0.0
  %2591 = vmatpush1.msra.mxu0 0.0
  %2592 = vmatprep.subr.mxu0 0.0
  %2593 = vmatpush1.msra.mxu0 0.0
  %2594 = vmatprep.subr.mxu0 0.0
  %2595 = vmatpush1.msra.mxu0 0.0
  %2596 = vmatprep.subr.mxu0 0.0
  %2597 = vmatpush1.msra.mxu0 0.0
  %2598 = vmatprep.subr.mxu0 0.0
  %2599 = vmatpush1.msra.mxu0 0.0
  %2600 = vmatprep.subr.mxu0 0.0
  %2601 = vmatpush1.msra.mxu0 0.0
  %2602 = vmatprep.subr.mxu0 0.0
  %2603 = vmatpush1.msra.mxu0 0.0
  %2604 = vmatprep.subr.mxu0 0.0
  %2605 = vmatpush1.msra.mxu0 0.0
  %2606 = vmatprep.subr.mxu0 0.0
  %2607 = vmatpush1.msra.mxu0 0.0
  %2608 = vmatprep.subr.mxu0 0.0
  %2609 = vmatpush1.msra.mxu0 0.0
  %2610 = vmatprep.subr.mxu0 0.0
  %2611 = vmatpush1.msra.mxu0 0.0
  %2612 = vmatprep.subr.mxu0 0.0
  %2613 = vmatpush1.msra.mxu0 0.0
  %2614 = vmatprep.subr.mxu0 0.0
  %2615 = vmatpush1.msra.mxu0 0.0
  %2616 = vmatprep.subr.mxu0 0.0
  %2617 = vmatpush1.msra.mxu0 0.0
  %2618 = vmatprep.subr.mxu0 0.0
  %2619 = vmatpush1.msra.mxu0 0.0
  %2620 = vmatprep.subr.mxu0 0.0
  %2621 = vmatpush1.msra.mxu0 0.0
  %2622 = vmatprep.subr.mxu0 0.0
  %2623 = vmatpush1.msra.mxu0 0.0
  %2624 = vmatprep.subr.mxu0 0.0
  %2625 = vmatpush1.msra.mxu0 0.0
  %2626 = vmatprep.subr.mxu0 0.0
  %2627 = vmatpush1.msra.mxu0 0.0
  %2628 = vmatprep.subr.mxu0 0.0
  %2629 = vmatpush1.msra.mxu0 0.0
  %2630 = vmatprep.mubr.f32.mxu0 0.0
  %2631 = vmatmul.mubr.f32.gmra.mrb[0].mxu0 %v2564
  %v2632 = vpop.f32.mrb[0].mxu0
  %v2633 = vadd.f32 0.0, %v2632
  %v2634 = vpop.f32.mrb[0].mxu0
  %v2635 = vadd.f32 0.0, %v2634
  %2636 = vdwg.mxu0
  %2637 = vmatprep.subr.mxu0 0.0
  %2638 = vmatpush1.msra.mxu0 %v1480
  %2639 = vmatprep.subr.mxu0 0.0
  %2640 = vmatpush1.msra.mxu0 %v1483
  %2641 = vmatprep.subr.mxu0 0.0
  %2642 = vmatpush1.msra.mxu0 0.0
  %2643 = vmatprep.subr.mxu0 0.0
  %2644 = vmatpush1.msra.mxu0 0.0
  %2645 = vmatprep.subr.mxu0 0.0
  %2646 = vmatpush1.msra.mxu0 0.0
  %2647 = vmatprep.subr.mxu0 0.0
  %2648 = vmatpush1.msra.mxu0 0.0
  %2649 = vmatprep.subr.mxu0 0.0
  %2650 = vmatpush1.msra.mxu0 0.0
  %2651 = vmatprep.subr.mxu0 0.0
  %2652 = vmatpush1.msra.mxu0 0.0
  %2653 = vmatprep.subr.mxu0 0.0
  %2654 = vmatpush1.msra.mxu0 0.0
  %2655 = vmatprep.subr.mxu0 0.0
  %2656 = vmatpush1.msra.mxu0 0.0
  %2657 = vmatprep.subr.mxu0 0.0
  %2658 = vmatpush1.msra.mxu0 0.0
  %2659 = vmatprep.subr.mxu0 0.0
  %2660 = vmatpush1.msra.mxu0 0.0
  %2661 = vmatprep.subr.mxu0 0.0
  %2662 = vmatpush1.msra.mxu0 0.0
  %2663 = vmatprep.subr.mxu0 0.0
  %2664 = vmatpush1.msra.mxu0 0.0
  %2665 = vmatprep.subr.mxu0 0.0
  %2666 = vmatpush1.msra.mxu0 0.0
  %2667 = vmatprep.subr.mxu0 0.0
  %2668 = vmatpush1.msra.mxu0 0.0
  %2669 = vmatprep.subr.mxu0 0.0
  %2670 = vmatpush1.msra.mxu0 0.0
  %2671 = vmatprep.subr.mxu0 0.0
  %2672 = vmatpush1.msra.mxu0 0.0
  %2673 = vmatprep.subr.mxu0 0.0
  %2674 = vmatpush1.msra.mxu0 0.0
  %2675 = vmatprep.subr.mxu0 0.0
  %2676 = vmatpush1.msra.mxu0 0.0
  %2677 = vmatprep.subr.mxu0 0.0
  %2678 = vmatpush1.msra.mxu0 0.0
  %2679 = vmatprep.subr.mxu0 0.0
  %2680 = vmatpush1.msra.mxu0 0.0
  %2681 = vmatprep.subr.mxu0 0.0
  %2682 = vmatpush1.msra.mxu0 0.0
  %2683 = vmatprep.subr.mxu0 0.0
  %2684 = vmatpush1.msra.mxu0 0.0
  %2685 = vmatprep.subr.mxu0 0.0
  %2686 = vmatpush1.msra.mxu0 0.0
  %2687 = vmatprep.subr.mxu0 0.0
  %2688 = vmatpush1.msra.mxu0 0.0
  %2689 = vmatprep.subr.mxu0 0.0
  %2690 = vmatpush1.msra.mxu0 0.0
  %2691 = vmatprep.subr.mxu0 0.0
  %2692 = vmatpush1.msra.mxu0 0.0
  %2693 = vmatprep.subr.mxu0 0.0
  %2694 = vmatpush1.msra.mxu0 0.0
  %2695 = vmatprep.subr.mxu0 0.0
  %2696 = vmatpush1.msra.mxu0 0.0
  %2697 = vmatprep.subr.mxu0 0.0
  %2698 = vmatpush1.msra.mxu0 0.0
  %2699 = vmatprep.subr.mxu0 0.0
  %2700 = vmatpush1.msra.mxu0 0.0
  %2701 = vmatprep.mubr.f32.mxu0 0.0
  %2702 = vmatmul.mubr.f32.gmra.mrb[0].mxu0 %v2564
  %v2703 = vpop.f32.mrb[0].mxu0
  %v2704 = vadd.f32 0.0, %v2703
  %v2705 = vpop.f32.mrb[0].mxu0
  %2706 = vdwg.mxu0
  %v2707 = vadd.f32 %v1576, %v2633
  %v2708 = vxor.u32 %v2707, 2147483648
  %v2709 = vmul.f32 %v2708, 1.442695
  %v2710 = vpow.pop %v2709
  %v2711 = vadd.f32 %v2710, 1.0
  %v2712 = vrcp.pop %v2711
  %v2713 = vmul.f32 1.0, %v2712
  %v2714 = vadd.f32 %v1578, %v2635
  %v2715 = vxor.u32 %v2714, 2147483648
  %v2716 = vmul.f32 %v2715, 1.442695
  %v2717 = vpow.pop %v2716
  %v2718 = vadd.f32 %v2717, 1.0
  %v2719 = vrcp.pop %v2718
  %v2720 = vmul.f32 1.0, %v2719
  %v2721 = vadd.f32 %v2704, %v1490
  %v2722 = vmul.f32 %v2713, %v2721
  %v2723 = vadd.f32 %v1688, %v2722
  %v2724 = vtanh.pop %v2723
  %v2725 = vsub.f32 %v2562, %v2724
  %v2726 = vmul.f32 %v2720, %v2725
  %v2727 = vadd.f32 %v2726, %v2724
  %v2729 = vsel %vm319, %v2727, 0
  %2731 = vmatprep.subr.mxu0 %v1479
  %2732 = vmatpush1.msra.mxu0 %v1478
  %2733 = vmatprep.subr.mxu0 %v1482
  %2734 = vmatpush1.msra.mxu0 %v1481
  %2735 = vmatprep.subr.mxu0 0.0
  %2736 = vmatpush1.msra.mxu0 0.0
  %2737 = vmatprep.subr.mxu0 0.0
  %2738 = vmatpush1.msra.mxu0 0.0
  %2739 = vmatprep.subr.mxu0 0.0
  %2740 = vmatpush1.msra.mxu0 0.0
  %2741 = vmatprep.subr.mxu0 0.0
  %2742 = vmatpush1.msra.mxu0 0.0
  %2743 = vmatprep.subr.mxu0 0.0
  %2744 = vmatpush1.msra.mxu0 0.0
  %2745 = vmatprep.subr.mxu0 0.0
  %2746 = vmatpush1.msra.mxu0 0.0
  %2747 = vmatprep.subr.mxu0 0.0
  %2748 = vmatpush1.msra.mxu0 0.0
  %2749 = vmatprep.subr.mxu0 0.0
  %2750 = vmatpush1.msra.mxu0 0.0
  %2751 = vmatprep.subr.mxu0 0.0
  %2752 = vmatpush1.msra.mxu0 0.0
  %2753 = vmatprep.subr.mxu0 0.0
  %2754 = vmatpush1.msra.mxu0 0.0
  %2755 = vmatprep.subr.mxu0 0.0
  %2756 = vmatpush1.msra.mxu0 0.0
  %2757 = vmatprep.subr.mxu0 0.0
  %2758 = vmatpush1.msra.mxu0 0.0
  %2759 = vmatprep.subr.mxu0 0.0
  %2760 = vmatpush1.msra.mxu0 0.0
  %2761 = vmatprep.subr.mxu0 0.0
  %2762 = vmatpush1.msra.mxu0 0.0
  %2763 = vmatprep.subr.mxu0 0.0
  %2764 = vmatpush1.msra.mxu0 0.0
  %2765 = vmatprep.subr.mxu0 0.0
  %2766 = vmatpush1.msra.mxu0 0.0
  %2767 = vmatprep.subr.mxu0 0.0
  %2768 = vmatpush1.msra.mxu0 0.0
  %2769 = vmatprep.subr.mxu0 0.0
  %2770 = vmatpush1.msra.mxu0 0.0
  %2771 = vmatprep.subr.mxu0 0.0
  %2772 = vmatpush1.msra.mxu0 0.0
  %2773 = vmatprep.subr.mxu0 0.0
  %2774 = vmatpush1.msra.mxu0 0.0
  %2775 = vmatprep.subr.mxu0 0.0
  %2776 = vmatpush1.msra.mxu0 0.0
  %2777 = vmatprep.subr.mxu0 0.0
  %2778 = vmatpush1.msra.mxu0 0.0
  %2779 = vmatprep.subr.mxu0 0.0
  %2780 = vmatpush1.msra.mxu0 0.0
  %2781 = vmatprep.subr.mxu0 0.0
  %2782 = vmatpush1.msra.mxu0 0.0
  %2783 = vmatprep.subr.mxu0 0.0
  %2784 = vmatpush1.msra.mxu0 0.0
  %2785 = vmatprep.subr.mxu0 0.0
  %2786 = vmatpush1.msra.mxu0 0.0
  %2787 = vmatprep.subr.mxu0 0.0
  %2788 = vmatpush1.msra.mxu0 0.0
  %2789 = vmatprep.subr.mxu0 0.0
  %2790 = vmatpush1.msra.mxu0 0.0
  %2791 = vmatprep.subr.mxu0 0.0
  %2792 = vmatpush1.msra.mxu0 0.0
  %2793 = vmatprep.subr.mxu0 0.0
  %2794 = vmatpush1.msra.mxu0 0.0
  %2795 = vmatprep.mubr.f32.mxu0 0.0
  %2796 = vmatmul.mubr.f32.gmra.mrb[0].mxu0 %v2729
  %v2797 = vpop.f32.mrb[0].mxu0
  %v2798 = vadd.f32 0.0, %v2797
  %v2799 = vpop.f32.mrb[0].mxu0
  %v2800 = vadd.f32 0.0, %v2799
  %2801 = vdwg.mxu0
  %2802 = vmatprep.subr.mxu0 0.0
  %2803 = vmatpush1.msra.mxu0 %v1480
  %2804 = vmatprep.subr.mxu0 0.0
  %2805 = vmatpush1.msra.mxu0 %v1483
  %2806 = vmatprep.subr.mxu0 0.0
  %2807 = vmatpush1.msra.mxu0 0.0
  %2808 = vmatprep.subr.mxu0 0.0
  %2809 = vmatpush1.msra.mxu0 0.0
  %2810 = vmatprep.subr.mxu0 0.0
  %2811 = vmatpush1.msra.mxu0 0.0
  %2812 = vmatprep.subr.mxu0 0.0
  %2813 = vmatpush1.msra.mxu0 0.0
  %2814 = vmatprep.subr.mxu0 0.0
  %2815 = vmatpush1.msra.mxu0 0.0
  %2816 = vmatprep.subr.mxu0 0.0
  %2817 = vmatpush1.msra.mxu0 0.0
  %2818 = vmatprep.subr.mxu0 0.0
  %2819 = vmatpush1.msra.mxu0 0.0
  %2820 = vmatprep.subr.mxu0 0.0
  %2821 = vmatpush1.msra.mxu0 0.0
  %2822 = vmatprep.subr.mxu0 0.0
  %2823 = vmatpush1.msra.mxu0 0.0
  %2824 = vmatprep.subr.mxu0 0.0
  %2825 = vmatpush1.msra.mxu0 0.0
  %2826 = vmatprep.subr.mxu0 0.0
  %2827 = vmatpush1.msra.mxu0 0.0
  %2828 = vmatprep.subr.mxu0 0.0
  %2829 = vmatpush1.msra.mxu0 0.0
  %2830 = vmatprep.subr.mxu0 0.0
  %2831 = vmatpush1.msra.mxu0 0.0
  %2832 = vmatprep.subr.mxu0 0.0
  %2833 = vmatpush1.msra.mxu0 0.0
  %2834 = vmatprep.subr.mxu0 0.0
  %2835 = vmatpush1.msra.mxu0 0.0
  %2836 = vmatprep.subr.mxu0 0.0
  %2837 = vmatpush1.msra.mxu0 0.0
  %2838 = vmatprep.subr.mxu0 0.0
  %2839 = vmatpush1.msra.mxu0 0.0
  %2840 = vmatprep.subr.mxu0 0.0
  %2841 = vmatpush1.msra.mxu0 0.0
  %2842 = vmatprep.subr.mxu0 0.0
  %2843 = vmatpush1.msra.mxu0 0.0
  %2844 = vmatprep.subr.mxu0 0.0
  %2845 = vmatpush1.msra.mxu0 0.0
  %2846 = vmatprep.subr.mxu0 0.0
  %2847 = vmatpush1.msra.mxu0 0.0
  %2848 = vmatprep.subr.mxu0 0.0
  %2849 = vmatpush1.msra.mxu0 0.0
  %2850 = vmatprep.subr.mxu0 0.0
  %2851 = vmatpush1.msra.mxu0 0.0
  %2852 = vmatprep.subr.mxu0 0.0
  %2853 = vmatpush1.msra.mxu0 0.0
  %2854 = vmatprep.subr.mxu0 0.0
  %2855 = vmatpush1.msra.mxu0 0.0
  %2856 = vmatprep.subr.mxu0 0.0
  %2857 = vmatpush1.msra.mxu0 0.0
  %2858 = vmatprep.subr.mxu0 0.0
  %2859 = vmatpush1.msra.mxu0 0.0
  %2860 = vmatprep.subr.mxu0 0.0
  %2861 = vmatpush1.msra.mxu0 0.0
  %2862 = vmatprep.subr.mxu0 0.0
  %2863 = vmatpush1.msra.mxu0 0.0
  %2864 = vmatprep.subr.mxu0 0.0
  %2865 = vmatpush1.msra.mxu0 0.0
  %2866 = vmatprep.mubr.f32.mxu0 0.0
  %2867 = vmatmul.mubr.f32.gmra.mrb[0].mxu0 %v2729
  %v2868 = vpop.f32.mrb[0].mxu0
  %v2869 = vadd.f32 0.0, %v2868
  %v2870 = vpop.f32.mrb[0].mxu0
  %2871 = vdwg.mxu0
  %v2872 = vadd.f32 %v1570, %v2798
  %v2873 = vxor.u32 %v2872, 2147483648
  %v2874 = vmul.f32 %v2873, 1.442695
  %v2875 = vpow.pop %v2874
  %v2876 = vadd.f32 %v2875, 1.0
  %v2877 = vrcp.pop %v2876
  %v2878 = vmul.f32 1.0, %v2877
  %v2879 = vadd.f32 %v1572, %v2800
  %v2880 = vxor.u32 %v2879, 2147483648
  %v2881 = vmul.f32 %v2880, 1.442695
  %v2882 = vpow.pop %v2881
  %v2883 = vadd.f32 %v2882, 1.0
  %v2884 = vrcp.pop %v2883
  %v2885 = vmul.f32 1.0, %v2884
  %v2886 = vadd.f32 %v2869, %v1490
  %v2887 = vmul.f32 %v2878, %v2886
  %v2888 = vadd.f32 %v1683, %v2887
  %v2889 = vtanh.pop %v2888
  %v2890 = vsub.f32 %v2727, %v2889
  %v2891 = vmul.f32 %v2885, %v2890
  %v2892 = vadd.f32 %v2891, %v2889
  %v2893 = vld [vmem:[%s5 + $0x78] sm:$0xff]
  %v2894 = vld [vmem:[%s5] sm:$0xff]
  %v2895 = vld [vmem:[%s5 + $0x8] sm:$0xff]
  %v2896 = vld [vmem:[%s5 + $0x10] sm:$0xff]
  %v2897 = vld [vmem:[%s5 + $0x18] sm:$0xff]
  %v2898 = vld [vmem:[%s5 + $0x20] sm:$0xff]
  %v2899 = vld [vmem:[%s5 + $0x28] sm:$0xff]
  %v2900 = vld [vmem:[%s5 + $0x30] sm:$0xff]
  %v2901 = vld [vmem:[%s5 + $0x38] sm:$0xff]
  %v2902 = vld [vmem:[%s5 + $0x40] sm:$0xff]
  %v2903 = vld [vmem:[%s5 + $0x48] sm:$0xff]
  %v2904 = vld [vmem:[%s5 + $0x50] sm:$0xff]
  %v2905 = vld [vmem:[%s5 + $0x58] sm:$0xff]
  %v2906 = vld [vmem:[%s5 + $0x60] sm:$0xff]
  %v2907 = vld [vmem:[%s5 + $0x68] sm:$0xff]
  %v2908 = vld [vmem:[%s5 + $0x70] sm:$0xff]
  %v2910 = vsel %vm319, %v2892, 0
  %2912 = vmatprep.subr.mxu0 0.0
  %2913 = vmatpush1.msra.mxu0 %v2896
  %2914 = vmatprep.subr.mxu0 0.0
  %2915 = vmatpush1.msra.mxu0 %v2897
  %2916 = vmatprep.subr.mxu0 0.0
  %2917 = vmatpush1.msra.mxu0 0.0
  %2918 = vmatprep.subr.mxu0 0.0
  %2919 = vmatpush1.msra.mxu0 0.0
  %2920 = vmatprep.subr.mxu0 0.0
  %2921 = vmatpush1.msra.mxu0 0.0
  %2922 = vmatprep.subr.mxu0 0.0
  %2923 = vmatpush1.msra.mxu0 0.0
  %2924 = vmatprep.subr.mxu0 0.0
  %2925 = vmatpush1.msra.mxu0 0.0
  %2926 = vmatprep.subr.mxu0 0.0
  %2927 = vmatpush1.msra.mxu0 0.0
  %2928 = vmatprep.subr.mxu0 0.0
  %2929 = vmatpush1.msra.mxu0 0.0
  %2930 = vmatprep.subr.mxu0 0.0
  %2931 = vmatpush1.msra.mxu0 0.0
  %2932 = vmatprep.subr.mxu0 0.0
  %2933 = vmatpush1.msra.mxu0 0.0
  %2934 = vmatprep.subr.mxu0 0.0
  %2935 = vmatpush1.msra.mxu0 0.0
  %2936 = vmatprep.subr.mxu0 0.0
  %2937 = vmatpush1.msra.mxu0 0.0
  %2938 = vmatprep.subr.mxu0 0.0
  %2939 = vmatpush1.msra.mxu0 0.0
  %2940 = vmatprep.subr.mxu0 0.0
  %2941 = vmatpush1.msra.mxu0 0.0
  %2942 = vmatprep.subr.mxu0 0.0
  %2943 = vmatpush1.msra.mxu0 0.0
  %2944 = vmatprep.subr.mxu0 0.0
  %2945 = vmatpush1.msra.mxu0 0.0
  %2946 = vmatprep.subr.mxu0 0.0
  %2947 = vmatpush1.msra.mxu0 0.0
  %2948 = vmatprep.subr.mxu0 0.0
  %2949 = vmatpush1.msra.mxu0 0.0
  %2950 = vmatprep.subr.mxu0 0.0
  %2951 = vmatpush1.msra.mxu0 0.0
  %2952 = vmatprep.subr.mxu0 0.0
  %2953 = vmatpush1.msra.mxu0 0.0
  %2954 = vmatprep.subr.mxu0 0.0
  %2955 = vmatpush1.msra.mxu0 0.0
  %2956 = vmatprep.subr.mxu0 0.0
  %2957 = vmatpush1.msra.mxu0 0.0
  %2958 = vmatprep.subr.mxu0 0.0
  %2959 = vmatpush1.msra.mxu0 0.0
  %2960 = vmatprep.subr.mxu0 0.0
  %2961 = vmatpush1.msra.mxu0 0.0
  %2962 = vmatprep.subr.mxu0 0.0
  %2963 = vmatpush1.msra.mxu0 0.0
  %2964 = vmatprep.subr.mxu0 0.0
  %2965 = vmatpush1.msra.mxu0 0.0
  %2966 = vmatprep.subr.mxu0 0.0
  %2967 = vmatpush1.msra.mxu0 0.0
  %2968 = vmatprep.subr.mxu0 0.0
  %2969 = vmatpush1.msra.mxu0 0.0
  %2970 = vmatprep.subr.mxu0 0.0
  %2971 = vmatpush1.msra.mxu0 0.0
  %2972 = vmatprep.subr.mxu0 0.0
  %2973 = vmatpush1.msra.mxu0 0.0
  %2974 = vmatprep.subr.mxu0 0.0
  %2975 = vmatpush1.msra.mxu0 0.0
  %2976 = vmatprep.mubr.f32.mxu0 0.0
  %2977 = vmatmul.mubr.f32.gmra.mrb[0].mxu0 %v2910
  %v2978 = vpop.f32.mrb[0].mxu0
  %v2979 = vadd.f32 0.0, %v2978
  %v2980 = vpop.f32.mrb[0].mxu0
  %2981 = vmatprep.mubr.f32.mxu0 0.0
  %2982 = vmatmul.mubr.f32.gmra.mrb[0].mxu0 %v2729
  %v2983 = vpop.f32.mrb[0].mxu0
  %v2984 = vadd.f32 0.0, %v2983
  %v2985 = vpop.f32.mrb[0].mxu0
  %2986 = vmatprep.mubr.f32.mxu0 0.0
  %2987 = vmatmul.mubr.f32.gmra.mrb[0].mxu0 %v2564
  %v2988 = vpop.f32.mrb[0].mxu0
  %v2989 = vadd.f32 0.0, %v2988
  %v2990 = vpop.f32.mrb[0].mxu0
  %2991 = vmatprep.mubr.f32.mxu0 0.0
  %2992 = vmatmul.mubr.f32.gmra.mrb[0].mxu0 %v2399
  %v2993 = vpop.f32.mrb[0].mxu0
  %v2994 = vadd.f32 0.0, %v2993
  %v2995 = vpop.f32.mrb[0].mxu0
  %2996 = vmatprep.mubr.f32.mxu0 0.0
  %2997 = vmatmul.mubr.f32.gmra.mrb[0].mxu0 %v2234
  %v2998 = vpop.f32.mrb[0].mxu0
  %v2999 = vadd.f32 0.0, %v2998
  %v3000 = vpop.f32.mrb[0].mxu0
  %3001 = vmatprep.mubr.f32.mxu0 0.0
  %3002 = vmatmul.mubr.f32.gmra.mrb[0].mxu0 %v2069
  %v3003 = vpop.f32.mrb[0].mxu0
  %v3004 = vadd.f32 0.0, %v3003
  %v3005 = vpop.f32.mrb[0].mxu0
  %3006 = vmatprep.mubr.f32.mxu0 0.0
  %3007 = vmatmul.mubr.f32.gmra.mrb[0].mxu0 %v1904
  %v3008 = vpop.f32.mrb[0].mxu0
  %v3009 = vadd.f32 0.0, %v3008
  %v3010 = vpop.f32.mrb[0].mxu0
  %3011 = vmatprep.mubr.f32.mxu0 0.0
  %3012 = vmatmul.mubr.f32.gmra.mrb[0].mxu0 %v1739
  %v3013 = vpop.f32.mrb[0].mxu0
  %v3014 = vadd.f32 0.0, %v3013
  %v3015 = vpop.f32.mrb[0].mxu0
  %3016 = vdwg.mxu0
  %v3018 = vsel %vm319, %v1474, 0
  %3020 = vmatprep.subr.mxu0 0.0
  %3021 = vmatpush1.msra.mxu0 %v2894
  %3022 = vmatprep.subr.mxu0 0.0
  %3023 = vmatpush1.msra.mxu0 %v2895
  %3024 = vmatprep.subr.mxu0 0.0
  %3025 = vmatpush1.msra.mxu0 0.0
  %3026 = vmatprep.subr.mxu0 0.0
  %3027 = vmatpush1.msra.mxu0 0.0
  %3028 = vmatprep.subr.mxu0 0.0
  %3029 = vmatpush1.msra.mxu0 0.0
  %3030 = vmatprep.subr.mxu0 0.0
  %3031 = vmatpush1.msra.mxu0 0.0
  %3032 = vmatprep.subr.mxu0 0.0
  %3033 = vmatpush1.msra.mxu0 0.0
  %3034 = vmatprep.subr.mxu0 0.0
  %3035 = vmatpush1.msra.mxu0 0.0
  %3036 = vmatprep.subr.mxu0 0.0
  %3037 = vmatpush1.msra.mxu0 0.0
  %3038 = vmatprep.subr.mxu0 0.0
  %3039 = vmatpush1.msra.mxu0 0.0
  %3040 = vmatprep.subr.mxu0 0.0
  %3041 = vmatpush1.msra.mxu0 0.0
  %3042 = vmatprep.subr.mxu0 0.0
  %3043 = vmatpush1.msra.mxu0 0.0
  %3044 = vmatprep.subr.mxu0 0.0
  %3045 = vmatpush1.msra.mxu0 0.0
  %3046 = vmatprep.subr.mxu0 0.0
  %3047 = vmatpush1.msra.mxu0 0.0
  %3048 = vmatprep.subr.mxu0 0.0
  %3049 = vmatpush1.msra.mxu0 0.0
  %3050 = vmatprep.subr.mxu0 0.0
  %3051 = vmatpush1.msra.mxu0 0.0
  %3052 = vmatprep.subr.mxu0 0.0
  %3053 = vmatpush1.msra.mxu0 0.0
  %3054 = vmatprep.subr.mxu0 0.0
  %3055 = vmatpush1.msra.mxu0 0.0
  %3056 = vmatprep.subr.mxu0 0.0
  %3057 = vmatpush1.msra.mxu0 0.0
  %3058 = vmatprep.subr.mxu0 0.0
  %3059 = vmatpush1.msra.mxu0 0.0
  %3060 = vmatprep.subr.mxu0 0.0
  %3061 = vmatpush1.msra.mxu0 0.0
  %3062 = vmatprep.subr.mxu0 0.0
  %3063 = vmatpush1.msra.mxu0 0.0
  %3064 = vmatprep.subr.mxu0 0.0
  %3065 = vmatpush1.msra.mxu0 0.0
  %3066 = vmatprep.subr.mxu0 0.0
  %3067 = vmatpush1.msra.mxu0 0.0
  %3068 = vmatprep.subr.mxu0 0.0
  %3069 = vmatpush1.msra.mxu0 0.0
  %3070 = vmatprep.subr.mxu0 0.0
  %3071 = vmatpush1.msra.mxu0 0.0
  %3072 = vmatprep.subr.mxu0 0.0
  %3073 = vmatpush1.msra.mxu0 0.0
  %3074 = vmatprep.subr.mxu0 0.0
  %3075 = vmatpush1.msra.mxu0 0.0
  %3076 = vmatprep.subr.mxu0 0.0
  %3077 = vmatpush1.msra.mxu0 0.0
  %3078 = vmatprep.subr.mxu0 0.0
  %3079 = vmatpush1.msra.mxu0 0.0
  %3080 = vmatprep.subr.mxu0 0.0
  %3081 = vmatpush1.msra.mxu0 0.0
  %3082 = vmatprep.subr.mxu0 0.0
  %3083 = vmatpush1.msra.mxu0 0.0
  %3084 = vmatprep.mubr.f32.mxu0 0.0
  %3085 = vmatmul.mubr.f32.gmra.mrb[0].mxu0 %v321
  %v3086 = vpop.f32.mrb[0].mxu0
  %v3087 = vadd.f32 %v2979, %v3086
  %v3088 = vpop.f32.mrb[0].mxu0
  %3089 = vmatprep.mubr.f32.mxu0 0.0
  %3090 = vmatmul.mubr.f32.gmra.mrb[0].mxu0 %v486
  %v3091 = vpop.f32.mrb[0].mxu0
  %v3092 = vadd.f32 %v2984, %v3091
  %v3093 = vpop.f32.mrb[0].mxu0
  %3094 = vmatprep.mubr.f32.mxu0 0.0
  %3095 = vmatmul.mubr.f32.gmra.mrb[0].mxu0 %v651
  %v3096 = vpop.f32.mrb[0].mxu0
  %v3097 = vadd.f32 %v2989, %v3096
  %v3098 = vpop.f32.mrb[0].mxu0
  %3099 = vmatprep.mubr.f32.mxu0 0.0
  %3100 = vmatmul.mubr.f32.gmra.mrb[0].mxu0 %v816
  %v3101 = vpop.f32.mrb[0].mxu0
  %v3102 = vadd.f32 %v2994, %v3101
  %v3103 = vpop.f32.mrb[0].mxu0
  %3104 = vmatprep.mubr.f32.mxu0 0.0
  %3105 = vmatmul.mubr.f32.gmra.mrb[0].mxu0 %v981
  %v3106 = vpop.f32.mrb[0].mxu0
  %v3107 = vadd.f32 %v2999, %v3106
  %v3108 = vpop.f32.mrb[0].mxu0
  %3109 = vmatprep.mubr.f32.mxu0 0.0
  %3110 = vmatmul.mubr.f32.gmra.mrb[0].mxu0 %v1146
  %v3111 = vpop.f32.mrb[0].mxu0
  %v3112 = vadd.f32 %v3004, %v3111
  %v3113 = vpop.f32.mrb[0].mxu0
  %3114 = vmatprep.mubr.f32.mxu0 0.0
  %3115 = vmatmul.mubr.f32.gmra.mrb[0].mxu0 %v1311
  %v3116 = vpop.f32.mrb[0].mxu0
  %v3117 = vadd.f32 %v3009, %v3116
  %v3118 = vpop.f32.mrb[0].mxu0
  %3119 = vmatprep.mubr.f32.mxu0 0.0
  %3120 = vmatmul.mubr.f32.gmra.mrb[0].mxu0 %v3018
  %v3121 = vpop.f32.mrb[0].mxu0
  %v3122 = vadd.f32 %v3014, %v3121
  %v3123 = vpop.f32.mrb[0].mxu0
  %3124 = vdwg.mxu0
  %v3125 = vlaneseq
  %v3126 = vshrl.u32 %v3125, 7
  %v3127 = vsub.s32 0, %v3126
  %v3128 = vrot.slane %v2893, %v3127
  %v3129 = vadd.f32 %v3087, %v3128
  %v3130 = vadd.f32 %v3092, %v3128
  %v3131 = vadd.f32 %v3097, %v3128
  %v3132 = vadd.f32 %v3102, %v3128
  %v3133 = vadd.f32 %v3107, %v3128
  %v3134 = vadd.f32 %v3112, %v3128
  %v3135 = vadd.f32 %v3117, %v3128
  %v3136 = vadd.f32 %v3122, %v3128
  %3137 = vmatprep.subr.mxu0 0.0
  %3138 = vmatpush1.msra.mxu0 %v2900
  %3139 = vmatprep.subr.mxu0 0.0
  %3140 = vmatpush1.msra.mxu0 %v2901
  %3141 = vmatprep.subr.mxu0 0.0
  %3142 = vmatpush1.msra.mxu0 0.0
  %3143 = vmatprep.subr.mxu0 0.0
  %3144 = vmatpush1.msra.mxu0 0.0
  %3145 = vmatprep.subr.mxu0 0.0
  %3146 = vmatpush1.msra.mxu0 0.0
  %3147 = vmatprep.subr.mxu0 0.0
  %3148 = vmatpush1.msra.mxu0 0.0
  %3149 = vmatprep.subr.mxu0 0.0
  %3150 = vmatpush1.msra.mxu0 0.0
  %3151 = vmatprep.subr.mxu0 0.0
  %3152 = vmatpush1.msra.mxu0 0.0
  %3153 = vmatprep.subr.mxu0 0.0
  %3154 = vmatpush1.msra.mxu0 0.0
  %3155 = vmatprep.subr.mxu0 0.0
  %3156 = vmatpush1.msra.mxu0 0.0
  %3157 = vmatprep.subr.mxu0 0.0
  %3158 = vmatpush1.msra.mxu0 0.0
  %3159 = vmatprep.subr.mxu0 0.0
  %3160 = vmatpush1.msra.mxu0 0.0
  %3161 = vmatprep.subr.mxu0 0.0
  %3162 = vmatpush1.msra.mxu0 0.0
  %3163 = vmatprep.subr.mxu0 0.0
  %3164 = vmatpush1.msra.mxu0 0.0
  %3165 = vmatprep.subr.mxu0 0.0
  %3166 = vmatpush1.msra.mxu0 0.0
  %3167 = vmatprep.subr.mxu0 0.0
  %3168 = vmatpush1.msra.mxu0 0.0
  %3169 = vmatprep.subr.mxu0 0.0
  %3170 = vmatpush1.msra.mxu0 0.0
  %3171 = vmatprep.subr.mxu0 0.0
  %3172 = vmatpush1.msra.mxu0 0.0
  %3173 = vmatprep.subr.mxu0 0.0
  %3174 = vmatpush1.msra.mxu0 0.0
  %3175 = vmatprep.subr.mxu0 0.0
  %3176 = vmatpush1.msra.mxu0 0.0
  %3177 = vmatprep.subr.mxu0 0.0
  %3178 = vmatpush1.msra.mxu0 0.0
  %3179 = vmatprep.subr.mxu0 0.0
  %3180 = vmatpush1.msra.mxu0 0.0
  %3181 = vmatprep.subr.mxu0 0.0
  %3182 = vmatpush1.msra.mxu0 0.0
  %3183 = vmatprep.subr.mxu0 0.0
  %3184 = vmatpush1.msra.mxu0 0.0
  %3185 = vmatprep.subr.mxu0 0.0
  %3186 = vmatpush1.msra.mxu0 0.0
  %3187 = vmatprep.subr.mxu0 0.0
  %3188 = vmatpush1.msra.mxu0 0.0
  %3189 = vmatprep.subr.mxu0 0.0
  %3190 = vmatpush1.msra.mxu0 0.0
  %3191 = vmatprep.subr.mxu0 0.0
  %3192 = vmatpush1.msra.mxu0 0.0
  %3193 = vmatprep.subr.mxu0 0.0
  %3194 = vmatpush1.msra.mxu0 0.0
  %3195 = vmatprep.subr.mxu0 0.0
  %3196 = vmatpush1.msra.mxu0 0.0
  %3197 = vmatprep.subr.mxu0 0.0
  %3198 = vmatpush1.msra.mxu0 0.0
  %3199 = vmatprep.subr.mxu0 0.0
  %3200 = vmatpush1.msra.mxu0 0.0
  %3201 = vmatprep.mubr.f32.mxu0 0.0
  %3202 = vmatmul.mubr.f32.gmra.mrb[0].mxu0 %v2910
  %v3203 = vpop.f32.mrb[0].mxu0
  %v3204 = vadd.f32 0.0, %v3203
  %v3205 = vpop.f32.mrb[0].mxu0
  %3206 = vmatprep.mubr.f32.mxu0 0.0
  %3207 = vmatmul.mubr.f32.gmra.mrb[0].mxu0 %v2729
  %v3208 = vpop.f32.mrb[0].mxu0
  %v3209 = vadd.f32 0.0, %v3208
  %v3210 = vpop.f32.mrb[0].mxu0
  %3211 = vmatprep.mubr.f32.mxu0 0.0
  %3212 = vmatmul.mubr.f32.gmra.mrb[0].mxu0 %v2564
  %v3213 = vpop.f32.mrb[0].mxu0
  %v3214 = vadd.f32 0.0, %v3213
  %v3215 = vpop.f32.mrb[0].mxu0
  %3216 = vmatprep.mubr.f32.mxu0 0.0
  %3217 = vmatmul.mubr.f32.gmra.mrb[0].mxu0 %v2399
  %v3218 = vpop.f32.mrb[0].mxu0
  %v3219 = vadd.f32 0.0, %v3218
  %v3220 = vpop.f32.mrb[0].mxu0
  %3221 = vmatprep.mubr.f32.mxu0 0.0
  %3222 = vmatmul.mubr.f32.gmra.mrb[0].mxu0 %v2234
  %v3223 = vpop.f32.mrb[0].mxu0
  %v3224 = vadd.f32 0.0, %v3223
  %v3225 = vpop.f32.mrb[0].mxu0
  %3226 = vmatprep.mubr.f32.mxu0 0.0
  %3227 = vmatmul.mubr.f32.gmra.mrb[0].mxu0 %v2069
  %v3228 = vpop.f32.mrb[0].mxu0
  %v3229 = vadd.f32 0.0, %v3228
  %v3230 = vpop.f32.mrb[0].mxu0
  %3231 = vmatprep.mubr.f32.mxu0 0.0
  %3232 = vmatmul.mubr.f32.gmra.mrb[0].mxu0 %v1904
  %v3233 = vpop.f32.mrb[0].mxu0
  %v3234 = vadd.f32 0.0, %v3233
  %v3235 = vpop.f32.mrb[0].mxu0
  %3236 = vmatprep.mubr.f32.mxu0 0.0
  %3237 = vmatmul.mubr.f32.gmra.mrb[0].mxu0 %v1739
  %v3238 = vpop.f32.mrb[0].mxu0
  %v3239 = vadd.f32 0.0, %v3238
  %v3240 = vpop.f32.mrb[0].mxu0
  %3241 = vdwg.mxu0
  %3242 = vmatprep.subr.mxu0 0.0
  %3243 = vmatpush1.msra.mxu0 %v2898
  %3244 = vmatprep.subr.mxu0 0.0
  %3245 = vmatpush1.msra.mxu0 %v2899
  %3246 = vmatprep.subr.mxu0 0.0
  %3247 = vmatpush1.msra.mxu0 0.0
  %3248 = vmatprep.subr.mxu0 0.0
  %3249 = vmatpush1.msra.mxu0 0.0
  %3250 = vmatprep.subr.mxu0 0.0
  %3251 = vmatpush1.msra.mxu0 0.0
  %3252 = vmatprep.subr.mxu0 0.0
  %3253 = vmatpush1.msra.mxu0 0.0
  %3254 = vmatprep.subr.mxu0 0.0
  %3255 = vmatpush1.msra.mxu0 0.0
  %3256 = vmatprep.subr.mxu0 0.0
  %3257 = vmatpush1.msra.mxu0 0.0
  %3258 = vmatprep.subr.mxu0 0.0
  %3259 = vmatpush1.msra.mxu0 0.0
  %3260 = vmatprep.subr.mxu0 0.0
  %3261 = vmatpush1.msra.mxu0 0.0
  %3262 = vmatprep.subr.mxu0 0.0
  %3263 = vmatpush1.msra.mxu0 0.0
  %3264 = vmatprep.subr.mxu0 0.0
  %3265 = vmatpush1.msra.mxu0 0.0
  %3266 = vmatprep.subr.mxu0 0.0
  %3267 = vmatpush1.msra.mxu0 0.0
  %3268 = vmatprep.subr.mxu0 0.0
  %3269 = vmatpush1.msra.mxu0 0.0
  %3270 = vmatprep.subr.mxu0 0.0
  %3271 = vmatpush1.msra.mxu0 0.0
  %3272 = vmatprep.subr.mxu0 0.0
  %3273 = vmatpush1.msra.mxu0 0.0
  %3274 = vmatprep.subr.mxu0 0.0
  %3275 = vmatpush1.msra.mxu0 0.0
  %3276 = vmatprep.subr.mxu0 0.0
  %3277 = vmatpush1.msra.mxu0 0.0
  %3278 = vmatprep.subr.mxu0 0.0
  %3279 = vmatpush1.msra.mxu0 0.0
  %3280 = vmatprep.subr.mxu0 0.0
  %3281 = vmatpush1.msra.mxu0 0.0
  %3282 = vmatprep.subr.mxu0 0.0
  %3283 = vmatpush1.msra.mxu0 0.0
  %3284 = vmatprep.subr.mxu0 0.0
  %3285 = vmatpush1.msra.mxu0 0.0
  %3286 = vmatprep.subr.mxu0 0.0
  %3287 = vmatpush1.msra.mxu0 0.0
  %3288 = vmatprep.subr.mxu0 0.0
  %3289 = vmatpush1.msra.mxu0 0.0
  %3290 = vmatprep.subr.mxu0 0.0
  %3291 = vmatpush1.msra.mxu0 0.0
  %3292 = vmatprep.subr.mxu0 0.0
  %3293 = vmatpush1.msra.mxu0 0.0
  %3294 = vmatprep.subr.mxu0 0.0
  %3295 = vmatpush1.msra.mxu0 0.0
  %3296 = vmatprep.subr.mxu0 0.0
  %3297 = vmatpush1.msra.mxu0 0.0
  %3298 = vmatprep.subr.mxu0 0.0
  %3299 = vmatpush1.msra.mxu0 0.0
  %3300 = vmatprep.subr.mxu0 0.0
  %3301 = vmatpush1.msra.mxu0 0.0
  %3302 = vmatprep.subr.mxu0 0.0
  %3303 = vmatpush1.msra.mxu0 0.0
  %3304 = vmatprep.subr.mxu0 0.0
  %3305 = vmatpush1.msra.mxu0 0.0
  %3306 = vmatprep.mubr.f32.mxu0 0.0
  %3307 = vmatmul.mubr.f32.gmra.mrb[0].mxu0 %v321
  %v3308 = vpop.f32.mrb[0].mxu0
  %v3309 = vadd.f32 %v3204, %v3308
  %v3310 = vpop.f32.mrb[0].mxu0
  %3311 = vmatprep.mubr.f32.mxu0 0.0
  %3312 = vmatmul.mubr.f32.gmra.mrb[0].mxu0 %v486
  %v3313 = vpop.f32.mrb[0].mxu0
  %v3314 = vadd.f32 %v3209, %v3313
  %v3315 = vpop.f32.mrb[0].mxu0
  %3316 = vmatprep.mubr.f32.mxu0 0.0
  %3317 = vmatmul.mubr.f32.gmra.mrb[0].mxu0 %v651
  %v3318 = vpop.f32.mrb[0].mxu0
  %v3319 = vadd.f32 %v3214, %v3318
  %v3320 = vpop.f32.mrb[0].mxu0
  %3321 = vmatprep.mubr.f32.mxu0 0.0
  %3322 = vmatmul.mubr.f32.gmra.mrb[0].mxu0 %v816
  %v3323 = vpop.f32.mrb[0].mxu0
  %v3324 = vadd.f32 %v3219, %v3323
  %v3325 = vpop.f32.mrb[0].mxu0
  %3326 = vmatprep.mubr.f32.mxu0 0.0
  %3327 = vmatmul.mubr.f32.gmra.mrb[0].mxu0 %v981
  %v3328 = vpop.f32.mrb[0].mxu0
  %v3329 = vadd.f32 %v3224, %v3328
  %v3330 = vpop.f32.mrb[0].mxu0
  %3331 = vmatprep.mubr.f32.mxu0 0.0
  %3332 = vmatmul.mubr.f32.gmra.mrb[0].mxu0 %v1146
  %v3333 = vpop.f32.mrb[0].mxu0
  %v3334 = vadd.f32 %v3229, %v3333
  %v3335 = vpop.f32.mrb[0].mxu0
  %3336 = vmatprep.mubr.f32.mxu0 0.0
  %3337 = vmatmul.mubr.f32.gmra.mrb[0].mxu0 %v1311
  %v3338 = vpop.f32.mrb[0].mxu0
  %v3339 = vadd.f32 %v3234, %v3338
  %v3340 = vpop.f32.mrb[0].mxu0
  %3341 = vmatprep.mubr.f32.mxu0 0.0
  %3342 = vmatmul.mubr.f32.gmra.mrb[0].mxu0 %v3018
  %v3343 = vpop.f32.mrb[0].mxu0
  %v3344 = vadd.f32 %v3239, %v3343
  %v3345 = vpop.f32.mrb[0].mxu0
  %3346 = vdwg.mxu0
  %v3347 = vlaneseq
  %v3348 = vshrl.u32 %v3347, 7
  %v3349 = vsub.s32 1, %v3348
  %v3350 = vrot.slane %v2893, %v3349
  %v3351 = vadd.f32 %v3309, %v3350
  %v3352 = vadd.f32 %v3314, %v3350
  %v3353 = vadd.f32 %v3319, %v3350
  %v3354 = vadd.f32 %v3324, %v3350
  %v3355 = vadd.f32 %v3329, %v3350
  %v3356 = vadd.f32 %v3334, %v3350
  %v3357 = vadd.f32 %v3339, %v3350
  %v3358 = vadd.f32 %v3344, %v3350
  %v3359 = vld [vmem:[%s1] sm:$0xff]
  %v3360 = vld [vmem:[%s1 + $0x8] sm:$0xff]
  %v3361 = vld [vmem:[%s1 + $0x10] sm:$0xff]
  %v3362 = vld [vmem:[%s1 + $0x18] sm:$0xff]
  %v3363 = vld [vmem:[%s1 + $0x20] sm:$0xff]
  %v3364 = vld [vmem:[%s1 + $0x28] sm:$0xff]
  %v3365 = vld [vmem:[%s1 + $0x30] sm:$0xff]
  %v3366 = vld [vmem:[%s1 + $0x38] sm:$0xff]
  %v3367 = vmul.f32 %v3351, 0.5
  %v3368 = vmul.f32 %v3352, 0.5
  %v3369 = vmul.f32 %v3353, 0.5
  %v3370 = vmul.f32 %v3354, 0.5
  %v3371 = vmul.f32 %v3355, 0.5
  %v3372 = vmul.f32 %v3356, 0.5
  %v3373 = vmul.f32 %v3357, 0.5
  %v3374 = vmul.f32 %v3358, 0.5
  %v3375 = vmul.f32 %v3367, 1.442695
  %v3376 = vpow.pop %v3375
  %v3377 = vmul.f32 %v3368, 1.442695
  %v3378 = vpow.pop %v3377
  %v3379 = vmul.f32 %v3369, 1.442695
  %v3380 = vpow.pop %v3379
  %v3381 = vmul.f32 %v3370, 1.442695
  %v3382 = vpow.pop %v3381
  %v3383 = vmul.f32 %v3371, 1.442695
  %v3384 = vpow.pop %v3383
  %v3385 = vmul.f32 %v3372, 1.442695
  %v3386 = vpow.pop %v3385
  %v3387 = vmul.f32 %v3373, 1.442695
  %v3388 = vpow.pop %v3387
  %v3389 = vmul.f32 %v3374, 1.442695
  %v3390 = vpow.pop %v3389
  %v3391 = vmul.f32 %v3359, %v3376
  %v3392 = vmul.f32 %v3360, %v3378
  %v3393 = vmul.f32 %v3361, %v3380
  %v3394 = vmul.f32 %v3362, %v3382
  %v3395 = vmul.f32 %v3363, %v3384
  %v3396 = vmul.f32 %v3364, %v3386
  %v3397 = vmul.f32 %v3365, %v3388
  %v3398 = vmul.f32 %v3366, %v3390
  %v3399 = vadd.f32 %v3391, %v3129
  %v3400 = vadd.f32 %v3392, %v3130
  %v3401 = vadd.f32 %v3393, %v3131
  %v3402 = vadd.f32 %v3394, %v3132
  %v3403 = vadd.f32 %v3395, %v3133
  %v3404 = vadd.f32 %v3396, %v3134
  %v3405 = vadd.f32 %v3397, %v3135
  %v3406 = vadd.f32 %v3398, %v3136
  %v3407 = vlaneseq
  %v3408 = vshrl.u32 %v3407, 7
  %v3409 = vsub.s32 2, %v3408
  %v3410 = vrot.slane %v2893, %v3409
  %v3412 = vsel %vm59, %v3399, 0
  %v3415 = vsel %vm59, %v3400, 0
  %v3418 = vsel %vm59, %v3401, 0
  %v3421 = vsel %vm59, %v3402, 0
  %v3424 = vsel %vm59, %v3403, 0
  %v3427 = vsel %vm59, %v3404, 0
  %v3430 = vsel %vm59, %v3405, 0
  %v3433 = vsel %vm59, %v3406, 0
  %3435 = vmatprep.subr.mxu0 0.0
  %3436 = vmatpush1.msra.mxu0 %v2902
  %3437 = vmatprep.subr.mxu0 0.0
  %3438 = vmatpush1.msra.mxu0 0.0
  %3439 = vmatprep.subr.mxu0 0.0
  %3440 = vmatpush1.msra.mxu0 0.0
  %3441 = vmatprep.subr.mxu0 0.0
  %3442 = vmatpush1.msra.mxu0 0.0
  %3443 = vmatprep.subr.mxu0 0.0
  %3444 = vmatpush1.msra.mxu0 0.0
  %3445 = vmatprep.subr.mxu0 0.0
  %3446 = vmatpush1.msra.mxu0 0.0
  %3447 = vmatprep.subr.mxu0 0.0
  %3448 = vmatpush1.msra.mxu0 0.0
  %3449 = vmatprep.subr.mxu0 0.0
  %3450 = vmatpush1.msra.mxu0 0.0
  %3451 = vmatprep.subr.mxu0 0.0
  %3452 = vmatpush1.msra.mxu0 0.0
  %3453 = vmatprep.subr.mxu0 0.0
  %3454 = vmatpush1.msra.mxu0 0.0
  %3455 = vmatprep.subr.mxu0 0.0
  %3456 = vmatpush1.msra.mxu0 0.0
  %3457 = vmatprep.subr.mxu0 0.0
  %3458 = vmatpush1.msra.mxu0 0.0
  %3459 = vmatprep.subr.mxu0 0.0
  %3460 = vmatpush1.msra.mxu0 0.0
  %3461 = vmatprep.subr.mxu0 0.0
  %3462 = vmatpush1.msra.mxu0 0.0
  %3463 = vmatprep.subr.mxu0 0.0
  %3464 = vmatpush1.msra.mxu0 0.0
  %3465 = vmatprep.subr.mxu0 0.0
  %3466 = vmatpush1.msra.mxu0 0.0
  %3467 = vmatprep.subr.mxu0 0.0
  %3468 = vmatpush1.msra.mxu0 0.0
  %3469 = vmatprep.subr.mxu0 0.0
  %3470 = vmatpush1.msra.mxu0 0.0
  %3471 = vmatprep.subr.mxu0 0.0
  %3472 = vmatpush1.msra.mxu0 0.0
  %3473 = vmatprep.subr.mxu0 0.0
  %3474 = vmatpush1.msra.mxu0 0.0
  %3475 = vmatprep.subr.mxu0 0.0
  %3476 = vmatpush1.msra.mxu0 0.0
  %3477 = vmatprep.subr.mxu0 0.0
  %3478 = vmatpush1.msra.mxu0 0.0
  %3479 = vmatprep.subr.mxu0 0.0
  %3480 = vmatpush1.msra.mxu0 0.0
  %3481 = vmatprep.subr.mxu0 0.0
  %3482 = vmatpush1.msra.mxu0 0.0
  %3483 = vmatprep.subr.mxu0 0.0
  %3484 = vmatpush1.msra.mxu0 0.0
  %3485 = vmatprep.subr.mxu0 0.0
  %3486 = vmatpush1.msra.mxu0 0.0
  %3487 = vmatprep.subr.mxu0 0.0
  %3488 = vmatpush1.msra.mxu0 0.0
  %3489 = vmatprep.subr.mxu0 0.0
  %3490 = vmatpush1.msra.mxu0 0.0
  %3491 = vmatprep.subr.mxu0 0.0
  %3492 = vmatpush1.msra.mxu0 0.0
  %3493 = vmatprep.subr.mxu0 0.0
  %3494 = vmatpush1.msra.mxu0 0.0
  %3495 = vmatprep.subr.mxu0 0.0
  %3496 = vmatpush1.msra.mxu0 0.0
  %3497 = vmatprep.subr.mxu0 0.0
  %3498 = vmatpush1.msra.mxu0 0.0
  %3499 = vmatprep.mubr.f32.mxu0 0.0
  %3500 = vmatmul.mubr.f32.gmra.mrb[0].mxu0 %v3412
  %v3501 = vpop.f32.mrb[0].mxu0
  %v3502 = vadd.f32 %v3410, %v3501
  %v3503 = vpop.f32.mrb[0].mxu0
  %3504 = vmatprep.mubr.f32.mxu0 0.0
  %3505 = vmatmul.mubr.f32.gmra.mrb[0].mxu0 %v3415
  %v3506 = vpop.f32.mrb[0].mxu0
  %v3507 = vadd.f32 %v3410, %v3506
  %v3508 = vpop.f32.mrb[0].mxu0
  %3509 = vmatprep.mubr.f32.mxu0 0.0
  %3510 = vmatmul.mubr.f32.gmra.mrb[0].mxu0 %v3418
  %v3511 = vpop.f32.mrb[0].mxu0
  %v3512 = vadd.f32 %v3410, %v3511
  %v3513 = vpop.f32.mrb[0].mxu0
  %3514 = vmatprep.mubr.f32.mxu0 0.0
  %3515 = vmatmul.mubr.f32.gmra.mrb[0].mxu0 %v3421
  %v3516 = vpop.f32.mrb[0].mxu0
  %v3517 = vadd.f32 %v3410, %v3516
  %v3518 = vpop.f32.mrb[0].mxu0
  %3519 = vmatprep.mubr.f32.mxu0 0.0
  %3520 = vmatmul.mubr.f32.gmra.mrb[0].mxu0 %v3424
  %v3521 = vpop.f32.mrb[0].mxu0
  %v3522 = vadd.f32 %v3410, %v3521
  %v3523 = vpop.f32.mrb[0].mxu0
  %3524 = vmatprep.mubr.f32.mxu0 0.0
  %3525 = vmatmul.mubr.f32.gmra.mrb[0].mxu0 %v3427
  %v3526 = vpop.f32.mrb[0].mxu0
  %v3527 = vadd.f32 %v3410, %v3526
  %v3528 = vpop.f32.mrb[0].mxu0
  %3529 = vmatprep.mubr.f32.mxu0 0.0
  %3530 = vmatmul.mubr.f32.gmra.mrb[0].mxu0 %v3430
  %v3531 = vpop.f32.mrb[0].mxu0
  %v3532 = vadd.f32 %v3410, %v3531
  %v3533 = vpop.f32.mrb[0].mxu0
  %3534 = vmatprep.mubr.f32.mxu0 0.0
  %3535 = vmatmul.mubr.f32.gmra.mrb[0].mxu0 %v3433
  %v3536 = vpop.f32.mrb[0].mxu0
  %v3537 = vadd.f32 %v3410, %v3536
  %v3538 = vpop.f32.mrb[0].mxu0
  %3539 = vdwg.mxu0
  %v3540 = vld [vmem:[%s4] sm:$0xff]
  %v3541 = vld [vmem:[%s4 + $0x8] sm:$0xff]
  %v3542 = vld [vmem:[%s4 + $0x10] sm:$0xff]
  %v3543 = vld [vmem:[%s4 + $0x18] sm:$0xff]
  %v3544 = vld [vmem:[%s4 + $0x20] sm:$0xff]
  %v3545 = vld [vmem:[%s4 + $0x28] sm:$0xff]
  %v3546 = vld [vmem:[%s4 + $0x30] sm:$0xff]
  %v3547 = vld [vmem:[%s4 + $0x38] sm:$0xff]
  %v3548 = vld [vmem:[%s4 + $0x40] sm:$0xff]
  %v3549 = vld [vmem:[%s4 + $0x48] sm:$0xff]
  %v3550 = vld [vmem:[%s4 + $0x50] sm:$0xff]
  %v3551 = vld [vmem:[%s4 + $0x58] sm:$0xff]
  %v3552 = vld [vmem:[%s4 + $0x60] sm:$0xff]
  %v3553 = vld [vmem:[%s4 + $0x68] sm:$0xff]
  %v3554 = vld [vmem:[%s4 + $0x70] sm:$0xff]
  %v3555 = vlaneseq
  %v3556 = vshrl.u32 %v3555, 7
  %v3557 = vsub.s32 1, %v3556
  %v3558 = vrot.slane %v3554, %v3557
  %v3559 = vlaneseq
  %v3560 = vshrl.u32 %v3559, 7
  %v3561 = vsub.s32 0, %v3560
  %v3562 = vrot.slane %v3552, %v3561
  %v3563 = vlaneseq
  %v3564 = vshrl.u32 %v3563, 7
  %v3565 = vsub.s32 0, %v3564
  %v3566 = vrot.slane %v3553, %v3565
  %v3567 = vlaneseq
  %v3568 = vshrl.u32 %v3567, 7
  %v3569 = vsub.s32 0, %v3568
  %v3570 = vrot.slane %v3554, %v3569
  %v3572 = vsel %vm319, %v3502, 0
  %v3575 = vsel %vm319, %v3507, 0
  %v3578 = vsel %vm319, %v3512, 0
  %v3581 = vsel %vm319, %v3517, 0
  %v3584 = vsel %vm319, %v3522, 0
  %v3587 = vsel %vm319, %v3527, 0
  %v3590 = vsel %vm319, %v3532, 0
  %v3593 = vsel %vm319, %v3537, 0
  %3595 = vmatprep.subr.mxu0 %v3541
  %3596 = vmatpush1.msra.mxu0 %v3540
  %3597 = vmatprep.subr.mxu0 %v3544
  %3598 = vmatpush1.msra.mxu0 %v3543
  %3599 = vmatprep.subr.mxu0 0.0
  %3600 = vmatpush1.msra.mxu0 0.0
  %3601 = vmatprep.subr.mxu0 0.0
  %3602 = vmatpush1.msra.mxu0 0.0
  %3603 = vmatprep.subr.mxu0 0.0
  %3604 = vmatpush1.msra.mxu0 0.0
  %3605 = vmatprep.subr.mxu0 0.0
  %3606 = vmatpush1.msra.mxu0 0.0
  %3607 = vmatprep.subr.mxu0 0.0
  %3608 = vmatpush1.msra.mxu0 0.0
  %3609 = vmatprep.subr.mxu0 0.0
  %3610 = vmatpush1.msra.mxu0 0.0
  %3611 = vmatprep.subr.mxu0 0.0
  %3612 = vmatpush1.msra.mxu0 0.0
  %3613 = vmatprep.subr.mxu0 0.0
  %3614 = vmatpush1.msra.mxu0 0.0
  %3615 = vmatprep.subr.mxu0 0.0
  %3616 = vmatpush1.msra.mxu0 0.0
  %3617 = vmatprep.subr.mxu0 0.0
  %3618 = vmatpush1.msra.mxu0 0.0
  %3619 = vmatprep.subr.mxu0 0.0
  %3620 = vmatpush1.msra.mxu0 0.0
  %3621 = vmatprep.subr.mxu0 0.0
  %3622 = vmatpush1.msra.mxu0 0.0
  %3623 = vmatprep.subr.mxu0 0.0
  %3624 = vmatpush1.msra.mxu0 0.0
  %3625 = vmatprep.subr.mxu0 0.0
  %3626 = vmatpush1.msra.mxu0 0.0
  %3627 = vmatprep.subr.mxu0 0.0
  %3628 = vmatpush1.msra.mxu0 0.0
  %3629 = vmatprep.subr.mxu0 0.0
  %3630 = vmatpush1.msra.mxu0 0.0
  %3631 = vmatprep.subr.mxu0 0.0
  %3632 = vmatpush1.msra.mxu0 0.0
  %3633 = vmatprep.subr.mxu0 0.0
  %3634 = vmatpush1.msra.mxu0 0.0
  %3635 = vmatprep.subr.mxu0 0.0
  %3636 = vmatpush1.msra.mxu0 0.0
  %3637 = vmatprep.subr.mxu0 0.0
  %3638 = vmatpush1.msra.mxu0 0.0
  %3639 = vmatprep.subr.mxu0 0.0
  %3640 = vmatpush1.msra.mxu0 0.0
  %3641 = vmatprep.subr.mxu0 0.0
  %3642 = vmatpush1.msra.mxu0 0.0
  %3643 = vmatprep.subr.mxu0 0.0
  %3644 = vmatpush1.msra.mxu0 0.0
  %3645 = vmatprep.subr.mxu0 0.0
  %3646 = vmatpush1.msra.mxu0 0.0
  %3647 = vmatprep.subr.mxu0 0.0
  %3648 = vmatpush1.msra.mxu0 0.0
  %3649 = vmatprep.subr.mxu0 0.0
  %3650 = vmatpush1.msra.mxu0 0.0
  %3651 = vmatprep.subr.mxu0 0.0
  %3652 = vmatpush1.msra.mxu0 0.0
  %3653 = vmatprep.subr.mxu0 0.0
  %3654 = vmatpush1.msra.mxu0 0.0
  %3655 = vmatprep.subr.mxu0 0.0
  %3656 = vmatpush1.msra.mxu0 0.0
  %3657 = vmatprep.subr.mxu0 0.0
  %3658 = vmatpush1.msra.mxu0 0.0
  %3659 = vmatprep.mubr.f32.mxu0 0.0
  %3660 = vmatmul.mubr.f32.gmra.mrb[0].mxu0 %v3572
  %v3661 = vpop.f32.mrb[0].mxu0
  %v3662 = vadd.f32 %v3562, %v3661
  %v3663 = vpop.f32.mrb[0].mxu0
  %v3664 = vadd.f32 %v3566, %v3663
  %3665 = vmatprep.mubr.f32.mxu0 0.0
  %3666 = vmatmul.mubr.f32.gmra.mrb[0].mxu0 %v3575
  %v3667 = vpop.f32.mrb[0].mxu0
  %v3668 = vadd.f32 %v3562, %v3667
  %v3669 = vpop.f32.mrb[0].mxu0
  %v3670 = vadd.f32 %v3566, %v3669
  %3671 = vmatprep.mubr.f32.mxu0 0.0
  %3672 = vmatmul.mubr.f32.gmra.mrb[0].mxu0 %v3578
  %v3673 = vpop.f32.mrb[0].mxu0
  %v3674 = vadd.f32 %v3562, %v3673
  %v3675 = vpop.f32.mrb[0].mxu0
  %v3676 = vadd.f32 %v3566, %v3675
  %3677 = vmatprep.mubr.f32.mxu0 0.0
  %3678 = vmatmul.mubr.f32.gmra.mrb[0].mxu0 %v3581
  %v3679 = vpop.f32.mrb[0].mxu0
  %v3680 = vadd.f32 %v3562, %v3679
  %v3681 = vpop.f32.mrb[0].mxu0
  %v3682 = vadd.f32 %v3566, %v3681
  %3683 = vmatprep.mubr.f32.mxu0 0.0
  %3684 = vmatmul.mubr.f32.gmra.mrb[0].mxu0 %v3584
  %v3685 = vpop.f32.mrb[0].mxu0
  %v3686 = vadd.f32 %v3562, %v3685
  %v3687 = vpop.f32.mrb[0].mxu0
  %v3688 = vadd.f32 %v3566, %v3687
  %3689 = vmatprep.mubr.f32.mxu0 0.0
  %3690 = vmatmul.mubr.f32.gmra.mrb[0].mxu0 %v3587
  %v3691 = vpop.f32.mrb[0].mxu0
  %v3692 = vadd.f32 %v3562, %v3691
  %v3693 = vpop.f32.mrb[0].mxu0
  %v3694 = vadd.f32 %v3566, %v3693
  %3695 = vmatprep.mubr.f32.mxu0 0.0
  %3696 = vmatmul.mubr.f32.gmra.mrb[0].mxu0 %v3590
  %v3697 = vpop.f32.mrb[0].mxu0
  %v3698 = vadd.f32 %v3562, %v3697
  %v3699 = vpop.f32.mrb[0].mxu0
  %v3700 = vadd.f32 %v3566, %v3699
  %3701 = vmatprep.mubr.f32.mxu0 0.0
  %3702 = vmatmul.mubr.f32.gmra.mrb[0].mxu0 %v3593
  %v3703 = vpop.f32.mrb[0].mxu0
  %v3704 = vadd.f32 %v3562, %v3703
  %v3705 = vpop.f32.mrb[0].mxu0
  %v3706 = vadd.f32 %v3566, %v3705
  %3707 = vdwg.mxu0
  %3708 = vmatprep.subr.mxu0 0.0
  %3709 = vmatpush1.msra.mxu0 %v3542
  %3710 = vmatprep.subr.mxu0 0.0
  %3711 = vmatpush1.msra.mxu0 %v3545
  %3712 = vmatprep.subr.mxu0 0.0
  %3713 = vmatpush1.msra.mxu0 0.0
  %3714 = vmatprep.subr.mxu0 0.0
  %3715 = vmatpush1.msra.mxu0 0.0
  %3716 = vmatprep.subr.mxu0 0.0
  %3717 = vmatpush1.msra.mxu0 0.0
  %3718 = vmatprep.subr.mxu0 0.0
  %3719 = vmatpush1.msra.mxu0 0.0
  %3720 = vmatprep.subr.mxu0 0.0
  %3721 = vmatpush1.msra.mxu0 0.0
  %3722 = vmatprep.subr.mxu0 0.0
  %3723 = vmatpush1.msra.mxu0 0.0
  %3724 = vmatprep.subr.mxu0 0.0
  %3725 = vmatpush1.msra.mxu0 0.0
  %3726 = vmatprep.subr.mxu0 0.0
  %3727 = vmatpush1.msra.mxu0 0.0
  %3728 = vmatprep.subr.mxu0 0.0
  %3729 = vmatpush1.msra.mxu0 0.0
  %3730 = vmatprep.subr.mxu0 0.0
  %3731 = vmatpush1.msra.mxu0 0.0
  %3732 = vmatprep.subr.mxu0 0.0
  %3733 = vmatpush1.msra.mxu0 0.0
  %3734 = vmatprep.subr.mxu0 0.0
  %3735 = vmatpush1.msra.mxu0 0.0
  %3736 = vmatprep.subr.mxu0 0.0
  %3737 = vmatpush1.msra.mxu0 0.0
  %3738 = vmatprep.subr.mxu0 0.0
  %3739 = vmatpush1.msra.mxu0 0.0
  %3740 = vmatprep.subr.mxu0 0.0
  %3741 = vmatpush1.msra.mxu0 0.0
  %3742 = vmatprep.subr.mxu0 0.0
  %3743 = vmatpush1.msra.mxu0 0.0
  %3744 = vmatprep.subr.mxu0 0.0
  %3745 = vmatpush1.msra.mxu0 0.0
  %3746 = vmatprep.subr.mxu0 0.0
  %3747 = vmatpush1.msra.mxu0 0.0
  %3748 = vmatprep.subr.mxu0 0.0
  %3749 = vmatpush1.msra.mxu0 0.0
  %3750 = vmatprep.subr.mxu0 0.0
  %3751 = vmatpush1.msra.mxu0 0.0
  %3752 = vmatprep.subr.mxu0 0.0
  %3753 = vmatpush1.msra.mxu0 0.0
  %3754 = vmatprep.subr.mxu0 0.0
  %3755 = vmatpush1.msra.mxu0 0.0
  %3756 = vmatprep.subr.mxu0 0.0
  %3757 = vmatpush1.msra.mxu0 0.0
  %3758 = vmatprep.subr.mxu0 0.0
  %3759 = vmatpush1.msra.mxu0 0.0
  %3760 = vmatprep.subr.mxu0 0.0
  %3761 = vmatpush1.msra.mxu0 0.0
  %3762 = vmatprep.subr.mxu0 0.0
  %3763 = vmatpush1.msra.mxu0 0.0
  %3764 = vmatprep.subr.mxu0 0.0
  %3765 = vmatpush1.msra.mxu0 0.0
  %3766 = vmatprep.subr.mxu0 0.0
  %3767 = vmatpush1.msra.mxu0 0.0
  %3768 = vmatprep.subr.mxu0 0.0
  %3769 = vmatpush1.msra.mxu0 0.0
  %3770 = vmatprep.subr.mxu0 0.0
  %3771 = vmatpush1.msra.mxu0 0.0
  %3772 = vmatprep.mubr.f32.mxu0 0.0
  %3773 = vmatmul.mubr.f32.gmra.mrb[0].mxu0 %v3572
  %v3774 = vpop.f32.mrb[0].mxu0
  %v3775 = vadd.f32 %v3570, %v3774
  %v3776 = vpop.f32.mrb[0].mxu0
  %3777 = vmatprep.mubr.f32.mxu0 0.0
  %3778 = vmatmul.mubr.f32.gmra.mrb[0].mxu0 %v3575
  %v3779 = vpop.f32.mrb[0].mxu0
  %v3780 = vadd.f32 %v3570, %v3779
  %v3781 = vpop.f32.mrb[0].mxu0
  %3782 = vmatprep.mubr.f32.mxu0 0.0
  %3783 = vmatmul.mubr.f32.gmra.mrb[0].mxu0 %v3578
  %v3784 = vpop.f32.mrb[0].mxu0
  %v3785 = vadd.f32 %v3570, %v3784
  %v3786 = vpop.f32.mrb[0].mxu0
  %3787 = vmatprep.mubr.f32.mxu0 0.0
  %3788 = vmatmul.mubr.f32.gmra.mrb[0].mxu0 %v3581
  %v3789 = vpop.f32.mrb[0].mxu0
  %v3790 = vadd.f32 %v3570, %v3789
  %v3791 = vpop.f32.mrb[0].mxu0
  %3792 = vmatprep.mubr.f32.mxu0 0.0
  %3793 = vmatmul.mubr.f32.gmra.mrb[0].mxu0 %v3584
  %v3794 = vpop.f32.mrb[0].mxu0
  %v3795 = vadd.f32 %v3570, %v3794
  %v3796 = vpop.f32.mrb[0].mxu0
  %3797 = vmatprep.mubr.f32.mxu0 0.0
  %3798 = vmatmul.mubr.f32.gmra.mrb[0].mxu0 %v3587
  %v3799 = vpop.f32.mrb[0].mxu0
  %v3800 = vadd.f32 %v3570, %v3799
  %v3801 = vpop.f32.mrb[0].mxu0
  %3802 = vmatprep.mubr.f32.mxu0 0.0
  %3803 = vmatmul.mubr.f32.gmra.mrb[0].mxu0 %v3590
  %v3804 = vpop.f32.mrb[0].mxu0
  %v3805 = vadd.f32 %v3570, %v3804
  %v3806 = vpop.f32.mrb[0].mxu0
  %3807 = vmatprep.mubr.f32.mxu0 0.0
  %3808 = vmatmul.mubr.f32.gmra.mrb[0].mxu0 %v3593
  %v3809 = vpop.f32.mrb[0].mxu0
  %v3810 = vadd.f32 %v3570, %v3809
  %v3811 = vpop.f32.mrb[0].mxu0
  %3812 = vdwg.mxu0
  %v3813 = vxor.u32 %v3662, 2147483648
  %v3814 = vmul.f32 %v3813, 1.442695
  %v3815 = vpow.pop %v3814
  %v3816 = vadd.f32 %v3815, 1.0
  %v3817 = vrcp.pop %v3816
  %v3818 = vmul.f32 1.0, %v3817
  %v3819 = vxor.u32 %v3664, 2147483648
  %v3820 = vmul.f32 %v3819, 1.442695
  %v3821 = vpow.pop %v3820
  %v3822 = vadd.f32 %v3821, 1.0
  %v3823 = vrcp.pop %v3822
  %v3824 = vmul.f32 1.0, %v3823
  %v3825 = vmul.f32 %v3818, %v3558
  %v3826 = vadd.f32 %v3775, %v3825
  %v3827 = vtanh.pop %v3826
  %v3828 = vmul.f32 %v3824, %v3827
  %v3829 = vsub.f32 %v3827, %v3828
  %v3831 = vsel %vm319, %v3829, 0
  %3833 = vmatprep.subr.mxu0 %v3547
  %3834 = vmatpush1.msra.mxu0 %v3546
  %3835 = vmatprep.subr.mxu0 %v3550
  %3836 = vmatpush1.msra.mxu0 %v3549
  %3837 = vmatprep.subr.mxu0 0.0
  %3838 = vmatpush1.msra.mxu0 0.0
  %3839 = vmatprep.subr.mxu0 0.0
  %3840 = vmatpush1.msra.mxu0 0.0
  %3841 = vmatprep.subr.mxu0 0.0
  %3842 = vmatpush1.msra.mxu0 0.0
  %3843 = vmatprep.subr.mxu0 0.0
  %3844 = vmatpush1.msra.mxu0 0.0
  %3845 = vmatprep.subr.mxu0 0.0
  %3846 = vmatpush1.msra.mxu0 0.0
  %3847 = vmatprep.subr.mxu0 0.0
  %3848 = vmatpush1.msra.mxu0 0.0
  %3849 = vmatprep.subr.mxu0 0.0
  %3850 = vmatpush1.msra.mxu0 0.0
  %3851 = vmatprep.subr.mxu0 0.0
  %3852 = vmatpush1.msra.mxu0 0.0
  %3853 = vmatprep.subr.mxu0 0.0
  %3854 = vmatpush1.msra.mxu0 0.0
  %3855 = vmatprep.subr.mxu0 0.0
  %3856 = vmatpush1.msra.mxu0 0.0
  %3857 = vmatprep.subr.mxu0 0.0
  %3858 = vmatpush1.msra.mxu0 0.0
  %3859 = vmatprep.subr.mxu0 0.0
  %3860 = vmatpush1.msra.mxu0 0.0
  %3861 = vmatprep.subr.mxu0 0.0
  %3862 = vmatpush1.msra.mxu0 0.0
  %3863 = vmatprep.subr.mxu0 0.0
  %3864 = vmatpush1.msra.mxu0 0.0
  %3865 = vmatprep.subr.mxu0 0.0
  %3866 = vmatpush1.msra.mxu0 0.0
  %3867 = vmatprep.subr.mxu0 0.0
  %3868 = vmatpush1.msra.mxu0 0.0
  %3869 = vmatprep.subr.mxu0 0.0
  %3870 = vmatpush1.msra.mxu0 0.0
  %3871 = vmatprep.subr.mxu0 0.0
  %3872 = vmatpush1.msra.mxu0 0.0
  %3873 = vmatprep.subr.mxu0 0.0
  %3874 = vmatpush1.msra.mxu0 0.0
  %3875 = vmatprep.subr.mxu0 0.0
  %3876 = vmatpush1.msra.mxu0 0.0
  %3877 = vmatprep.subr.mxu0 0.0
  %3878 = vmatpush1.msra.mxu0 0.0
  %3879 = vmatprep.subr.mxu0 0.0
  %3880 = vmatpush1.msra.mxu0 0.0
  %3881 = vmatprep.subr.mxu0 0.0
  %3882 = vmatpush1.msra.mxu0 0.0
  %3883 = vmatprep.subr.mxu0 0.0
  %3884 = vmatpush1.msra.mxu0 0.0
  %3885 = vmatprep.subr.mxu0 0.0
  %3886 = vmatpush1.msra.mxu0 0.0
  %3887 = vmatprep.subr.mxu0 0.0
  %3888 = vmatpush1.msra.mxu0 0.0
  %3889 = vmatprep.subr.mxu0 0.0
  %3890 = vmatpush1.msra.mxu0 0.0
  %3891 = vmatprep.subr.mxu0 0.0
  %3892 = vmatpush1.msra.mxu0 0.0
  %3893 = vmatprep.subr.mxu0 0.0
  %3894 = vmatpush1.msra.mxu0 0.0
  %3895 = vmatprep.subr.mxu0 0.0
  %3896 = vmatpush1.msra.mxu0 0.0
  %3897 = vmatprep.mubr.f32.mxu0 0.0
  %3898 = vmatmul.mubr.f32.gmra.mrb[0].mxu0 %v3831
  %v3899 = vpop.f32.mrb[0].mxu0
  %v3900 = vadd.f32 0.0, %v3899
  %v3901 = vpop.f32.mrb[0].mxu0
  %v3902 = vadd.f32 0.0, %v3901
  %3903 = vdwg.mxu0
  %3904 = vmatprep.subr.mxu0 0.0
  %3905 = vmatpush1.msra.mxu0 %v3548
  %3906 = vmatprep.subr.mxu0 0.0
  %3907 = vmatpush1.msra.mxu0 %v3551
  %3908 = vmatprep.subr.mxu0 0.0
  %3909 = vmatpush1.msra.mxu0 0.0
  %3910 = vmatprep.subr.mxu0 0.0
  %3911 = vmatpush1.msra.mxu0 0.0
  %3912 = vmatprep.subr.mxu0 0.0
  %3913 = vmatpush1.msra.mxu0 0.0
  %3914 = vmatprep.subr.mxu0 0.0
  %3915 = vmatpush1.msra.mxu0 0.0
  %3916 = vmatprep.subr.mxu0 0.0
  %3917 = vmatpush1.msra.mxu0 0.0
  %3918 = vmatprep.subr.mxu0 0.0
  %3919 = vmatpush1.msra.mxu0 0.0
  %3920 = vmatprep.subr.mxu0 0.0
  %3921 = vmatpush1.msra.mxu0 0.0
  %3922 = vmatprep.subr.mxu0 0.0
  %3923 = vmatpush1.msra.mxu0 0.0
  %3924 = vmatprep.subr.mxu0 0.0
  %3925 = vmatpush1.msra.mxu0 0.0
  %3926 = vmatprep.subr.mxu0 0.0
  %3927 = vmatpush1.msra.mxu0 0.0
  %3928 = vmatprep.subr.mxu0 0.0
  %3929 = vmatpush1.msra.mxu0 0.0
  %3930 = vmatprep.subr.mxu0 0.0
  %3931 = vmatpush1.msra.mxu0 0.0
  %3932 = vmatprep.subr.mxu0 0.0
  %3933 = vmatpush1.msra.mxu0 0.0
  %3934 = vmatprep.subr.mxu0 0.0
  %3935 = vmatpush1.msra.mxu0 0.0
  %3936 = vmatprep.subr.mxu0 0.0
  %3937 = vmatpush1.msra.mxu0 0.0
  %3938 = vmatprep.subr.mxu0 0.0
  %3939 = vmatpush1.msra.mxu0 0.0
  %3940 = vmatprep.subr.mxu0 0.0
  %3941 = vmatpush1.msra.mxu0 0.0
  %3942 = vmatprep.subr.mxu0 0.0
  %3943 = vmatpush1.msra.mxu0 0.0
  %3944 = vmatprep.subr.mxu0 0.0
  %3945 = vmatpush1.msra.mxu0 0.0
  %3946 = vmatprep.subr.mxu0 0.0
  %3947 = vmatpush1.msra.mxu0 0.0
  %3948 = vmatprep.subr.mxu0 0.0
  %3949 = vmatpush1.msra.mxu0 0.0
  %3950 = vmatprep.subr.mxu0 0.0
  %3951 = vmatpush1.msra.mxu0 0.0
  %3952 = vmatprep.subr.mxu0 0.0
  %3953 = vmatpush1.msra.mxu0 0.0
  %3954 = vmatprep.subr.mxu0 0.0
  %3955 = vmatpush1.msra.mxu0 0.0
  %3956 = vmatprep.subr.mxu0 0.0
  %3957 = vmatpush1.msra.mxu0 0.0
  %3958 = vmatprep.subr.mxu0 0.0
  %3959 = vmatpush1.msra.mxu0 0.0
  %3960 = vmatprep.subr.mxu0 0.0
  %3961 = vmatpush1.msra.mxu0 0.0
  %3962 = vmatprep.subr.mxu0 0.0
  %3963 = vmatpush1.msra.mxu0 0.0
  %3964 = vmatprep.subr.mxu0 0.0
  %3965 = vmatpush1.msra.mxu0 0.0
  %3966 = vmatprep.subr.mxu0 0.0
  %3967 = vmatpush1.msra.mxu0 0.0
  %3968 = vmatprep.mubr.f32.mxu0 0.0
  %3969 = vmatmul.mubr.f32.gmra.mrb[0].mxu0 %v3831
  %v3970 = vpop.f32.mrb[0].mxu0
  %v3971 = vadd.f32 0.0, %v3970
  %v3972 = vpop.f32.mrb[0].mxu0
  %3973 = vdwg.mxu0
  %v3974 = vadd.f32 %v3668, %v3900
  %v3975 = vxor.u32 %v3974, 2147483648
  %v3976 = vmul.f32 %v3975, 1.442695
  %v3977 = vpow.pop %v3976
  %v3978 = vadd.f32 %v3977, 1.0
  %v3979 = vrcp.pop %v3978
  %v3980 = vmul.f32 1.0, %v3979
  %v3981 = vadd.f32 %v3670, %v3902
  %v3982 = vxor.u32 %v3981, 2147483648
  %v3983 = vmul.f32 %v3982, 1.442695
  %v3984 = vpow.pop %v3983
  %v3985 = vadd.f32 %v3984, 1.0
  %v3986 = vrcp.pop %v3985
  %v3987 = vmul.f32 1.0, %v3986
  %v3988 = vadd.f32 %v3971, %v3558
  %v3989 = vmul.f32 %v3980, %v3988
  %v3990 = vadd.f32 %v3780, %v3989
  %v3991 = vtanh.pop %v3990
  %v3992 = vsub.f32 %v3829, %v3991
  %v3993 = vmul.f32 %v3987, %v3992
  %v3994 = vadd.f32 %v3993, %v3991
  %v3996 = vsel %vm319, %v3994, 0
  %3998 = vmatprep.subr.mxu0 %v3547
  %3999 = vmatpush1.msra.mxu0 %v3546
  %4000 = vmatprep.subr.mxu0 %v3550
  %4001 = vmatpush1.msra.mxu0 %v3549
  %4002 = vmatprep.subr.mxu0 0.0
  %4003 = vmatpush1.msra.mxu0 0.0
  %4004 = vmatprep.subr.mxu0 0.0
  %4005 = vmatpush1.msra.mxu0 0.0
  %4006 = vmatprep.subr.mxu0 0.0
  %4007 = vmatpush1.msra.mxu0 0.0
  %4008 = vmatprep.subr.mxu0 0.0
  %4009 = vmatpush1.msra.mxu0 0.0
  %4010 = vmatprep.subr.mxu0 0.0
  %4011 = vmatpush1.msra.mxu0 0.0
  %4012 = vmatprep.subr.mxu0 0.0
  %4013 = vmatpush1.msra.mxu0 0.0
  %4014 = vmatprep.subr.mxu0 0.0
  %4015 = vmatpush1.msra.mxu0 0.0
  %4016 = vmatprep.subr.mxu0 0.0
  %4017 = vmatpush1.msra.mxu0 0.0
  %4018 = vmatprep.subr.mxu0 0.0
  %4019 = vmatpush1.msra.mxu0 0.0
  %4020 = vmatprep.subr.mxu0 0.0
  %4021 = vmatpush1.msra.mxu0 0.0
  %4022 = vmatprep.subr.mxu0 0.0
  %4023 = vmatpush1.msra.mxu0 0.0
  %4024 = vmatprep.subr.mxu0 0.0
  %4025 = vmatpush1.msra.mxu0 0.0
  %4026 = vmatprep.subr.mxu0 0.0
  %4027 = vmatpush1.msra.mxu0 0.0
  %4028 = vmatprep.subr.mxu0 0.0
  %4029 = vmatpush1.msra.mxu0 0.0
  %4030 = vmatprep.subr.mxu0 0.0
  %4031 = vmatpush1.msra.mxu0 0.0
  %4032 = vmatprep.subr.mxu0 0.0
  %4033 = vmatpush1.msra.mxu0 0.0
  %4034 = vmatprep.subr.mxu0 0.0
  %4035 = vmatpush1.msra.mxu0 0.0
  %4036 = vmatprep.subr.mxu0 0.0
  %4037 = vmatpush1.msra.mxu0 0.0
  %4038 = vmatprep.subr.mxu0 0.0
  %4039 = vmatpush1.msra.mxu0 0.0
  %4040 = vmatprep.subr.mxu0 0.0
  %4041 = vmatpush1.msra.mxu0 0.0
  %4042 = vmatprep.subr.mxu0 0.0
  %4043 = vmatpush1.msra.mxu0 0.0
  %4044 = vmatprep.subr.mxu0 0.0
  %4045 = vmatpush1.msra.mxu0 0.0
  %4046 = vmatprep.subr.mxu0 0.0
  %4047 = vmatpush1.msra.mxu0 0.0
  %4048 = vmatprep.subr.mxu0 0.0
  %4049 = vmatpush1.msra.mxu0 0.0
  %4050 = vmatprep.subr.mxu0 0.0
  %4051 = vmatpush1.msra.mxu0 0.0
  %4052 = vmatprep.subr.mxu0 0.0
  %4053 = vmatpush1.msra.mxu0 0.0
  %4054 = vmatprep.subr.mxu0 0.0
  %4055 = vmatpush1.msra.mxu0 0.0
  %4056 = vmatprep.subr.mxu0 0.0
  %4057 = vmatpush1.msra.mxu0 0.0
  %4058 = vmatprep.subr.mxu0 0.0
  %4059 = vmatpush1.msra.mxu0 0.0
  %4060 = vmatprep.subr.mxu0 0.0
  %4061 = vmatpush1.msra.mxu0 0.0
  %4062 = vmatprep.mubr.f32.mxu0 0.0
  %4063 = vmatmul.mubr.f32.gmra.mrb[0].mxu0 %v3996
  %v4064 = vpop.f32.mrb[0].mxu0
  %v4065 = vadd.f32 0.0, %v4064
  %v4066 = vpop.f32.mrb[0].mxu0
  %v4067 = vadd.f32 0.0, %v4066
  %4068 = vdwg.mxu0
  %4069 = vmatprep.subr.mxu0 0.0
  %4070 = vmatpush1.msra.mxu0 %v3548
  %4071 = vmatprep.subr.mxu0 0.0
  %4072 = vmatpush1.msra.mxu0 %v3551
  %4073 = vmatprep.subr.mxu0 0.0
  %4074 = vmatpush1.msra.mxu0 0.0
  %4075 = vmatprep.subr.mxu0 0.0
  %4076 = vmatpush1.msra.mxu0 0.0
  %4077 = vmatprep.subr.mxu0 0.0
  %4078 = vmatpush1.msra.mxu0 0.0
  %4079 = vmatprep.subr.mxu0 0.0
  %4080 = vmatpush1.msra.mxu0 0.0
  %4081 = vmatprep.subr.mxu0 0.0
  %4082 = vmatpush1.msra.mxu0 0.0
  %4083 = vmatprep.subr.mxu0 0.0
  %4084 = vmatpush1.msra.mxu0 0.0
  %4085 = vmatprep.subr.mxu0 0.0
  %4086 = vmatpush1.msra.mxu0 0.0
  %4087 = vmatprep.subr.mxu0 0.0
  %4088 = vmatpush1.msra.mxu0 0.0
  %4089 = vmatprep.subr.mxu0 0.0
  %4090 = vmatpush1.msra.mxu0 0.0
  %4091 = vmatprep.subr.mxu0 0.0
  %4092 = vmatpush1.msra.mxu0 0.0
  %4093 = vmatprep.subr.mxu0 0.0
  %4094 = vmatpush1.msra.mxu0 0.0
  %4095 = vmatprep.subr.mxu0 0.0
  %4096 = vmatpush1.msra.mxu0 0.0
  %4097 = vmatprep.subr.mxu0 0.0
  %4098 = vmatpush1.msra.mxu0 0.0
  %4099 = vmatprep.subr.mxu0 0.0
  %4100 = vmatpush1.msra.mxu0 0.0
  %4101 = vmatprep.subr.mxu0 0.0
  %4102 = vmatpush1.msra.mxu0 0.0
  %4103 = vmatprep.subr.mxu0 0.0
  %4104 = vmatpush1.msra.mxu0 0.0
  %4105 = vmatprep.subr.mxu0 0.0
  %4106 = vmatpush1.msra.mxu0 0.0
  %4107 = vmatprep.subr.mxu0 0.0
  %4108 = vmatpush1.msra.mxu0 0.0
  %4109 = vmatprep.subr.mxu0 0.0
  %4110 = vmatpush1.msra.mxu0 0.0
  %4111 = vmatprep.subr.mxu0 0.0
  %4112 = vmatpush1.msra.mxu0 0.0
  %4113 = vmatprep.subr.mxu0 0.0
  %4114 = vmatpush1.msra.mxu0 0.0
  %4115 = vmatprep.subr.mxu0 0.0
  %4116 = vmatpush1.msra.mxu0 0.0
  %4117 = vmatprep.subr.mxu0 0.0
  %4118 = vmatpush1.msra.mxu0 0.0
  %4119 = vmatprep.subr.mxu0 0.0
  %4120 = vmatpush1.msra.mxu0 0.0
  %4121 = vmatprep.subr.mxu0 0.0
  %4122 = vmatpush1.msra.mxu0 0.0
  %4123 = vmatprep.subr.mxu0 0.0
  %4124 = vmatpush1.msra.mxu0 0.0
  %4125 = vmatprep.subr.mxu0 0.0
  %4126 = vmatpush1.msra.mxu0 0.0
  %4127 = vmatprep.subr.mxu0 0.0
  %4128 = vmatpush1.msra.mxu0 0.0
  %4129 = vmatprep.subr.mxu0 0.0
  %4130 = vmatpush1.msra.mxu0 0.0
  %4131 = vmatprep.subr.mxu0 0.0
  %4132 = vmatpush1.msra.mxu0 0.0
  %4133 = vmatprep.mubr.f32.mxu0 0.0
  %4134 = vmatmul.mubr.f32.gmra.mrb[0].mxu0 %v3996
  %v4135 = vpop.f32.mrb[0].mxu0
  %v4136 = vadd.f32 0.0, %v4135
  %v4137 = vpop.f32.mrb[0].mxu0
  %4138 = vdwg.mxu0
  %v4139 = vadd.f32 %v3674, %v4065
  %v4140 = vxor.u32 %v4139, 2147483648
  %v4141 = vmul.f32 %v4140, 1.442695
  %v4142 = vpow.pop %v4141
  %v4143 = vadd.f32 %v4142, 1.0
  %v4144 = vrcp.pop %v4143
  %v4145 = vmul.f32 1.0, %v4144
  %v4146 = vadd.f32 %v3676, %v4067
  %v4147 = vxor.u32 %v4146, 2147483648
  %v4148 = vmul.f32 %v4147, 1.442695
  %v4149 = vpow.pop %v4148
  %v4150 = vadd.f32 %v4149, 1.0
  %v4151 = vrcp.pop %v4150
  %v4152 = vmul.f32 1.0, %v4151
  %v4153 = vadd.f32 %v4136, %v3558
  %v4154 = vmul.f32 %v4145, %v4153
  %v4155 = vadd.f32 %v3785, %v4154
  %v4156 = vtanh.pop %v4155
  %v4157 = vsub.f32 %v3994, %v4156
  %v4158 = vmul.f32 %v4152, %v4157
  %v4159 = vadd.f32 %v4158, %v4156
  %v4161 = vsel %vm319, %v4159, 0
  %4163 = vmatprep.subr.mxu0 %v3547
  %4164 = vmatpush1.msra.mxu0 %v3546
  %4165 = vmatprep.subr.mxu0 %v3550
  %4166 = vmatpush1.msra.mxu0 %v3549
  %4167 = vmatprep.subr.mxu0 0.0
  %4168 = vmatpush1.msra.mxu0 0.0
  %4169 = vmatprep.subr.mxu0 0.0
  %4170 = vmatpush1.msra.mxu0 0.0
  %4171 = vmatprep.subr.mxu0 0.0
  %4172 = vmatpush1.msra.mxu0 0.0
  %4173 = vmatprep.subr.mxu0 0.0
  %4174 = vmatpush1.msra.mxu0 0.0
  %4175 = vmatprep.subr.mxu0 0.0
  %4176 = vmatpush1.msra.mxu0 0.0
  %4177 = vmatprep.subr.mxu0 0.0
  %4178 = vmatpush1.msra.mxu0 0.0
  %4179 = vmatprep.subr.mxu0 0.0
  %4180 = vmatpush1.msra.mxu0 0.0
  %4181 = vmatprep.subr.mxu0 0.0
  %4182 = vmatpush1.msra.mxu0 0.0
  %4183 = vmatprep.subr.mxu0 0.0
  %4184 = vmatpush1.msra.mxu0 0.0
  %4185 = vmatprep.subr.mxu0 0.0
  %4186 = vmatpush1.msra.mxu0 0.0
  %4187 = vmatprep.subr.mxu0 0.0
  %4188 = vmatpush1.msra.mxu0 0.0
  %4189 = vmatprep.subr.mxu0 0.0
  %4190 = vmatpush1.msra.mxu0 0.0
  %4191 = vmatprep.subr.mxu0 0.0
  %4192 = vmatpush1.msra.mxu0 0.0
  %4193 = vmatprep.subr.mxu0 0.0
  %4194 = vmatpush1.msra.mxu0 0.0
  %4195 = vmatprep.subr.mxu0 0.0
  %4196 = vmatpush1.msra.mxu0 0.0
  %4197 = vmatprep.subr.mxu0 0.0
  %4198 = vmatpush1.msra.mxu0 0.0
  %4199 = vmatprep.subr.mxu0 0.0
  %4200 = vmatpush1.msra.mxu0 0.0
  %4201 = vmatprep.subr.mxu0 0.0
  %4202 = vmatpush1.msra.mxu0 0.0
  %4203 = vmatprep.subr.mxu0 0.0
  %4204 = vmatpush1.msra.mxu0 0.0
  %4205 = vmatprep.subr.mxu0 0.0
  %4206 = vmatpush1.msra.mxu0 0.0
  %4207 = vmatprep.subr.mxu0 0.0
  %4208 = vmatpush1.msra.mxu0 0.0
  %4209 = vmatprep.subr.mxu0 0.0
  %4210 = vmatpush1.msra.mxu0 0.0
  %4211 = vmatprep.subr.mxu0 0.0
  %4212 = vmatpush1.msra.mxu0 0.0
  %4213 = vmatprep.subr.mxu0 0.0
  %4214 = vmatpush1.msra.mxu0 0.0
  %4215 = vmatprep.subr.mxu0 0.0
  %4216 = vmatpush1.msra.mxu0 0.0
  %4217 = vmatprep.subr.mxu0 0.0
  %4218 = vmatpush1.msra.mxu0 0.0
  %4219 = vmatprep.subr.mxu0 0.0
  %4220 = vmatpush1.msra.mxu0 0.0
  %4221 = vmatprep.subr.mxu0 0.0
  %4222 = vmatpush1.msra.mxu0 0.0
  %4223 = vmatprep.subr.mxu0 0.0
  %4224 = vmatpush1.msra.mxu0 0.0
  %4225 = vmatprep.subr.mxu0 0.0
  %4226 = vmatpush1.msra.mxu0 0.0
  %4227 = vmatprep.mubr.f32.mxu0 0.0
  %4228 = vmatmul.mubr.f32.gmra.mrb[0].mxu0 %v4161
  %v4229 = vpop.f32.mrb[0].mxu0
  %v4230 = vadd.f32 0.0, %v4229
  %v4231 = vpop.f32.mrb[0].mxu0
  %v4232 = vadd.f32 0.0, %v4231
  %4233 = vdwg.mxu0
  %4234 = vmatprep.subr.mxu0 0.0
  %4235 = vmatpush1.msra.mxu0 %v3548
  %4236 = vmatprep.subr.mxu0 0.0
  %4237 = vmatpush1.msra.mxu0 %v3551
  %4238 = vmatprep.subr.mxu0 0.0
  %4239 = vmatpush1.msra.mxu0 0.0
  %4240 = vmatprep.subr.mxu0 0.0
  %4241 = vmatpush1.msra.mxu0 0.0
  %4242 = vmatprep.subr.mxu0 0.0
  %4243 = vmatpush1.msra.mxu0 0.0
  %4244 = vmatprep.subr.mxu0 0.0
  %4245 = vmatpush1.msra.mxu0 0.0
  %4246 = vmatprep.subr.mxu0 0.0
  %4247 = vmatpush1.msra.mxu0 0.0
  %4248 = vmatprep.subr.mxu0 0.0
  %4249 = vmatpush1.msra.mxu0 0.0
  %4250 = vmatprep.subr.mxu0 0.0
  %4251 = vmatpush1.msra.mxu0 0.0
  %4252 = vmatprep.subr.mxu0 0.0
  %4253 = vmatpush1.msra.mxu0 0.0
  %4254 = vmatprep.subr.mxu0 0.0
  %4255 = vmatpush1.msra.mxu0 0.0
  %4256 = vmatprep.subr.mxu0 0.0
  %4257 = vmatpush1.msra.mxu0 0.0
  %4258 = vmatprep.subr.mxu0 0.0
  %4259 = vmatpush1.msra.mxu0 0.0
  %4260 = vmatprep.subr.mxu0 0.0
  %4261 = vmatpush1.msra.mxu0 0.0
  %4262 = vmatprep.subr.mxu0 0.0
  %4263 = vmatpush1.msra.mxu0 0.0
  %4264 = vmatprep.subr.mxu0 0.0
  %4265 = vmatpush1.msra.mxu0 0.0
  %4266 = vmatprep.subr.mxu0 0.0
  %4267 = vmatpush1.msra.mxu0 0.0
  %4268 = vmatprep.subr.mxu0 0.0
  %4269 = vmatpush1.msra.mxu0 0.0
  %4270 = vmatprep.subr.mxu0 0.0
  %4271 = vmatpush1.msra.mxu0 0.0
  %4272 = vmatprep.subr.mxu0 0.0
  %4273 = vmatpush1.msra.mxu0 0.0
  %4274 = vmatprep.subr.mxu0 0.0
  %4275 = vmatpush1.msra.mxu0 0.0
  %4276 = vmatprep.subr.mxu0 0.0
  %4277 = vmatpush1.msra.mxu0 0.0
  %4278 = vmatprep.subr.mxu0 0.0
  %4279 = vmatpush1.msra.mxu0 0.0
  %4280 = vmatprep.subr.mxu0 0.0
  %4281 = vmatpush1.msra.mxu0 0.0
  %4282 = vmatprep.subr.mxu0 0.0
  %4283 = vmatpush1.msra.mxu0 0.0
  %4284 = vmatprep.subr.mxu0 0.0
  %4285 = vmatpush1.msra.mxu0 0.0
  %4286 = vmatprep.subr.mxu0 0.0
  %4287 = vmatpush1.msra.mxu0 0.0
  %4288 = vmatprep.subr.mxu0 0.0
  %4289 = vmatpush1.msra.mxu0 0.0
  %4290 = vmatprep.subr.mxu0 0.0
  %4291 = vmatpush1.msra.mxu0 0.0
  %4292 = vmatprep.subr.mxu0 0.0
  %4293 = vmatpush1.msra.mxu0 0.0
  %4294 = vmatprep.subr.mxu0 0.0
  %4295 = vmatpush1.msra.mxu0 0.0
  %4296 = vmatprep.subr.mxu0 0.0
  %4297 = vmatpush1.msra.mxu0 0.0
  %4298 = vmatprep.mubr.f32.mxu0 0.0
  %4299 = vmatmul.mubr.f32.gmra.mrb[0].mxu0 %v4161
  %v4300 = vpop.f32.mrb[0].mxu0
  %v4301 = vadd.f32 0.0, %v4300
  %v4302 = vpop.f32.mrb[0].mxu0
  %4303 = vdwg.mxu0
  %v4304 = vadd.f32 %v3680, %v4230
  %v4305 = vxor.u32 %v4304, 2147483648
  %v4306 = vmul.f32 %v4305, 1.442695
  %v4307 = vpow.pop %v4306
  %v4308 = vadd.f32 %v4307, 1.0
  %v4309 = vrcp.pop %v4308
  %v4310 = vmul.f32 1.0, %v4309
  %v4311 = vadd.f32 %v3682, %v4232
  %v4312 = vxor.u32 %v4311, 2147483648
  %v4313 = vmul.f32 %v4312, 1.442695
  %v4314 = vpow.pop %v4313
  %v4315 = vadd.f32 %v4314, 1.0
  %v4316 = vrcp.pop %v4315
  %v4317 = vmul.f32 1.0, %v4316
  %v4318 = vadd.f32 %v4301, %v3558
  %v4319 = vmul.f32 %v4310, %v4318
  %v4320 = vadd.f32 %v3790, %v4319
  %v4321 = vtanh.pop %v4320
  %v4322 = vsub.f32 %v4159, %v4321
  %v4323 = vmul.f32 %v4317, %v4322
  %v4324 = vadd.f32 %v4323, %v4321
  %v4326 = vsel %vm319, %v4324, 0
  %4328 = vmatprep.subr.mxu0 %v3547
  %4329 = vmatpush1.msra.mxu0 %v3546
  %4330 = vmatprep.subr.mxu0 %v3550
  %4331 = vmatpush1.msra.mxu0 %v3549
  %4332 = vmatprep.subr.mxu0 0.0
  %4333 = vmatpush1.msra.mxu0 0.0
  %4334 = vmatprep.subr.mxu0 0.0
  %4335 = vmatpush1.msra.mxu0 0.0
  %4336 = vmatprep.subr.mxu0 0.0
  %4337 = vmatpush1.msra.mxu0 0.0
  %4338 = vmatprep.subr.mxu0 0.0
  %4339 = vmatpush1.msra.mxu0 0.0
  %4340 = vmatprep.subr.mxu0 0.0
  %4341 = vmatpush1.msra.mxu0 0.0
  %4342 = vmatprep.subr.mxu0 0.0
  %4343 = vmatpush1.msra.mxu0 0.0
  %4344 = vmatprep.subr.mxu0 0.0
  %4345 = vmatpush1.msra.mxu0 0.0
  %4346 = vmatprep.subr.mxu0 0.0
  %4347 = vmatpush1.msra.mxu0 0.0
  %4348 = vmatprep.subr.mxu0 0.0
  %4349 = vmatpush1.msra.mxu0 0.0
  %4350 = vmatprep.subr.mxu0 0.0
  %4351 = vmatpush1.msra.mxu0 0.0
  %4352 = vmatprep.subr.mxu0 0.0
  %4353 = vmatpush1.msra.mxu0 0.0
  %4354 = vmatprep.subr.mxu0 0.0
  %4355 = vmatpush1.msra.mxu0 0.0
  %4356 = vmatprep.subr.mxu0 0.0
  %4357 = vmatpush1.msra.mxu0 0.0
  %4358 = vmatprep.subr.mxu0 0.0
  %4359 = vmatpush1.msra.mxu0 0.0
  %4360 = vmatprep.subr.mxu0 0.0
  %4361 = vmatpush1.msra.mxu0 0.0
  %4362 = vmatprep.subr.mxu0 0.0
  %4363 = vmatpush1.msra.mxu0 0.0
  %4364 = vmatprep.subr.mxu0 0.0
  %4365 = vmatpush1.msra.mxu0 0.0
  %4366 = vmatprep.subr.mxu0 0.0
  %4367 = vmatpush1.msra.mxu0 0.0
  %4368 = vmatprep.subr.mxu0 0.0
  %4369 = vmatpush1.msra.mxu0 0.0
  %4370 = vmatprep.subr.mxu0 0.0
  %4371 = vmatpush1.msra.mxu0 0.0
  %4372 = vmatprep.subr.mxu0 0.0
  %4373 = vmatpush1.msra.mxu0 0.0
  %4374 = vmatprep.subr.mxu0 0.0
  %4375 = vmatpush1.msra.mxu0 0.0
  %4376 = vmatprep.subr.mxu0 0.0
  %4377 = vmatpush1.msra.mxu0 0.0
  %4378 = vmatprep.subr.mxu0 0.0
  %4379 = vmatpush1.msra.mxu0 0.0
  %4380 = vmatprep.subr.mxu0 0.0
  %4381 = vmatpush1.msra.mxu0 0.0
  %4382 = vmatprep.subr.mxu0 0.0
  %4383 = vmatpush1.msra.mxu0 0.0
  %4384 = vmatprep.subr.mxu0 0.0
  %4385 = vmatpush1.msra.mxu0 0.0
  %4386 = vmatprep.subr.mxu0 0.0
  %4387 = vmatpush1.msra.mxu0 0.0
  %4388 = vmatprep.subr.mxu0 0.0
  %4389 = vmatpush1.msra.mxu0 0.0
  %4390 = vmatprep.subr.mxu0 0.0
  %4391 = vmatpush1.msra.mxu0 0.0
  %4392 = vmatprep.mubr.f32.mxu0 0.0
  %4393 = vmatmul.mubr.f32.gmra.mrb[0].mxu0 %v4326
  %v4394 = vpop.f32.mrb[0].mxu0
  %v4395 = vadd.f32 0.0, %v4394
  %v4396 = vpop.f32.mrb[0].mxu0
  %v4397 = vadd.f32 0.0, %v4396
  %4398 = vdwg.mxu0
  %4399 = vmatprep.subr.mxu0 0.0
  %4400 = vmatpush1.msra.mxu0 %v3548
  %4401 = vmatprep.subr.mxu0 0.0
  %4402 = vmatpush1.msra.mxu0 %v3551
  %4403 = vmatprep.subr.mxu0 0.0
  %4404 = vmatpush1.msra.mxu0 0.0
  %4405 = vmatprep.subr.mxu0 0.0
  %4406 = vmatpush1.msra.mxu0 0.0
  %4407 = vmatprep.subr.mxu0 0.0
  %4408 = vmatpush1.msra.mxu0 0.0
  %4409 = vmatprep.subr.mxu0 0.0
  %4410 = vmatpush1.msra.mxu0 0.0
  %4411 = vmatprep.subr.mxu0 0.0
  %4412 = vmatpush1.msra.mxu0 0.0
  %4413 = vmatprep.subr.mxu0 0.0
  %4414 = vmatpush1.msra.mxu0 0.0
  %4415 = vmatprep.subr.mxu0 0.0
  %4416 = vmatpush1.msra.mxu0 0.0
  %4417 = vmatprep.subr.mxu0 0.0
  %4418 = vmatpush1.msra.mxu0 0.0
  %4419 = vmatprep.subr.mxu0 0.0
  %4420 = vmatpush1.msra.mxu0 0.0
  %4421 = vmatprep.subr.mxu0 0.0
  %4422 = vmatpush1.msra.mxu0 0.0
  %4423 = vmatprep.subr.mxu0 0.0
  %4424 = vmatpush1.msra.mxu0 0.0
  %4425 = vmatprep.subr.mxu0 0.0
  %4426 = vmatpush1.msra.mxu0 0.0
  %4427 = vmatprep.subr.mxu0 0.0
  %4428 = vmatpush1.msra.mxu0 0.0
  %4429 = vmatprep.subr.mxu0 0.0
  %4430 = vmatpush1.msra.mxu0 0.0
  %4431 = vmatprep.subr.mxu0 0.0
  %4432 = vmatpush1.msra.mxu0 0.0
  %4433 = vmatprep.subr.mxu0 0.0
  %4434 = vmatpush1.msra.mxu0 0.0
  %4435 = vmatprep.subr.mxu0 0.0
  %4436 = vmatpush1.msra.mxu0 0.0
  %4437 = vmatprep.subr.mxu0 0.0
  %4438 = vmatpush1.msra.mxu0 0.0
  %4439 = vmatprep.subr.mxu0 0.0
  %4440 = vmatpush1.msra.mxu0 0.0
  %4441 = vmatprep.subr.mxu0 0.0
  %4442 = vmatpush1.msra.mxu0 0.0
  %4443 = vmatprep.subr.mxu0 0.0
  %4444 = vmatpush1.msra.mxu0 0.0
  %4445 = vmatprep.subr.mxu0 0.0
  %4446 = vmatpush1.msra.mxu0 0.0
  %4447 = vmatprep.subr.mxu0 0.0
  %4448 = vmatpush1.msra.mxu0 0.0
  %4449 = vmatprep.subr.mxu0 0.0
  %4450 = vmatpush1.msra.mxu0 0.0
  %4451 = vmatprep.subr.mxu0 0.0
  %4452 = vmatpush1.msra.mxu0 0.0
  %4453 = vmatprep.subr.mxu0 0.0
  %4454 = vmatpush1.msra.mxu0 0.0
  %4455 = vmatprep.subr.mxu0 0.0
  %4456 = vmatpush1.msra.mxu0 0.0
  %4457 = vmatprep.subr.mxu0 0.0
  %4458 = vmatpush1.msra.mxu0 0.0
  %4459 = vmatprep.subr.mxu0 0.0
  %4460 = vmatpush1.msra.mxu0 0.0
  %4461 = vmatprep.subr.mxu0 0.0
  %4462 = vmatpush1.msra.mxu0 0.0
  %4463 = vmatprep.mubr.f32.mxu0 0.0
  %4464 = vmatmul.mubr.f32.gmra.mrb[0].mxu0 %v4326
  %v4465 = vpop.f32.mrb[0].mxu0
  %v4466 = vadd.f32 0.0, %v4465
  %v4467 = vpop.f32.mrb[0].mxu0
  %4468 = vdwg.mxu0
  %v4469 = vadd.f32 %v3686, %v4395
  %v4470 = vxor.u32 %v4469, 2147483648
  %v4471 = vmul.f32 %v4470, 1.442695
  %v4472 = vpow.pop %v4471
  %v4473 = vadd.f32 %v4472, 1.0
  %v4474 = vrcp.pop %v4473
  %v4475 = vmul.f32 1.0, %v4474
  %v4476 = vadd.f32 %v3688, %v4397
  %v4477 = vxor.u32 %v4476, 2147483648
  %v4478 = vmul.f32 %v4477, 1.442695
  %v4479 = vpow.pop %v4478
  %v4480 = vadd.f32 %v4479, 1.0
  %v4481 = vrcp.pop %v4480
  %v4482 = vmul.f32 1.0, %v4481
  %v4483 = vadd.f32 %v4466, %v3558
  %v4484 = vmul.f32 %v4475, %v4483
  %v4485 = vadd.f32 %v3795, %v4484
  %v4486 = vtanh.pop %v4485
  %v4487 = vsub.f32 %v4324, %v4486
  %v4488 = vmul.f32 %v4482, %v4487
  %v4489 = vadd.f32 %v4488, %v4486
  %v4491 = vsel %vm319, %v4489, 0
  %4493 = vmatprep.subr.mxu0 %v3547
  %4494 = vmatpush1.msra.mxu0 %v3546
  %4495 = vmatprep.subr.mxu0 %v3550
  %4496 = vmatpush1.msra.mxu0 %v3549
  %4497 = vmatprep.subr.mxu0 0.0
  %4498 = vmatpush1.msra.mxu0 0.0
  %4499 = vmatprep.subr.mxu0 0.0
  %4500 = vmatpush1.msra.mxu0 0.0
  %4501 = vmatprep.subr.mxu0 0.0
  %4502 = vmatpush1.msra.mxu0 0.0
  %4503 = vmatprep.subr.mxu0 0.0
  %4504 = vmatpush1.msra.mxu0 0.0
  %4505 = vmatprep.subr.mxu0 0.0
  %4506 = vmatpush1.msra.mxu0 0.0
  %4507 = vmatprep.subr.mxu0 0.0
  %4508 = vmatpush1.msra.mxu0 0.0
  %4509 = vmatprep.subr.mxu0 0.0
  %4510 = vmatpush1.msra.mxu0 0.0
  %4511 = vmatprep.subr.mxu0 0.0
  %4512 = vmatpush1.msra.mxu0 0.0
  %4513 = vmatprep.subr.mxu0 0.0
  %4514 = vmatpush1.msra.mxu0 0.0
  %4515 = vmatprep.subr.mxu0 0.0
  %4516 = vmatpush1.msra.mxu0 0.0
  %4517 = vmatprep.subr.mxu0 0.0
  %4518 = vmatpush1.msra.mxu0 0.0
  %4519 = vmatprep.subr.mxu0 0.0
  %4520 = vmatpush1.msra.mxu0 0.0
  %4521 = vmatprep.subr.mxu0 0.0
  %4522 = vmatpush1.msra.mxu0 0.0
  %4523 = vmatprep.subr.mxu0 0.0
  %4524 = vmatpush1.msra.mxu0 0.0
  %4525 = vmatprep.subr.mxu0 0.0
  %4526 = vmatpush1.msra.mxu0 0.0
  %4527 = vmatprep.subr.mxu0 0.0
  %4528 = vmatpush1.msra.mxu0 0.0
  %4529 = vmatprep.subr.mxu0 0.0
  %4530 = vmatpush1.msra.mxu0 0.0
  %4531 = vmatprep.subr.mxu0 0.0
  %4532 = vmatpush1.msra.mxu0 0.0
  %4533 = vmatprep.subr.mxu0 0.0
  %4534 = vmatpush1.msra.mxu0 0.0
  %4535 = vmatprep.subr.mxu0 0.0
  %4536 = vmatpush1.msra.mxu0 0.0
  %4537 = vmatprep.subr.mxu0 0.0
  %4538 = vmatpush1.msra.mxu0 0.0
  %4539 = vmatprep.subr.mxu0 0.0
  %4540 = vmatpush1.msra.mxu0 0.0
  %4541 = vmatprep.subr.mxu0 0.0
  %4542 = vmatpush1.msra.mxu0 0.0
  %4543 = vmatprep.subr.mxu0 0.0
  %4544 = vmatpush1.msra.mxu0 0.0
  %4545 = vmatprep.subr.mxu0 0.0
  %4546 = vmatpush1.msra.mxu0 0.0
  %4547 = vmatprep.subr.mxu0 0.0
  %4548 = vmatpush1.msra.mxu0 0.0
  %4549 = vmatprep.subr.mxu0 0.0
  %4550 = vmatpush1.msra.mxu0 0.0
  %4551 = vmatprep.subr.mxu0 0.0
  %4552 = vmatpush1.msra.mxu0 0.0
  %4553 = vmatprep.subr.mxu0 0.0
  %4554 = vmatpush1.msra.mxu0 0.0
  %4555 = vmatprep.subr.mxu0 0.0
  %4556 = vmatpush1.msra.mxu0 0.0
  %4557 = vmatprep.mubr.f32.mxu0 0.0
  %4558 = vmatmul.mubr.f32.gmra.mrb[0].mxu0 %v4491
  %v4559 = vpop.f32.mrb[0].mxu0
  %v4560 = vadd.f32 0.0, %v4559
  %v4561 = vpop.f32.mrb[0].mxu0
  %v4562 = vadd.f32 0.0, %v4561
  %4563 = vdwg.mxu0
  %4564 = vmatprep.subr.mxu0 0.0
  %4565 = vmatpush1.msra.mxu0 %v3548
  %4566 = vmatprep.subr.mxu0 0.0
  %4567 = vmatpush1.msra.mxu0 %v3551
  %4568 = vmatprep.subr.mxu0 0.0
  %4569 = vmatpush1.msra.mxu0 0.0
  %4570 = vmatprep.subr.mxu0 0.0
  %4571 = vmatpush1.msra.mxu0 0.0
  %4572 = vmatprep.subr.mxu0 0.0
  %4573 = vmatpush1.msra.mxu0 0.0
  %4574 = vmatprep.subr.mxu0 0.0
  %4575 = vmatpush1.msra.mxu0 0.0
  %4576 = vmatprep.subr.mxu0 0.0
  %4577 = vmatpush1.msra.mxu0 0.0
  %4578 = vmatprep.subr.mxu0 0.0
  %4579 = vmatpush1.msra.mxu0 0.0
  %4580 = vmatprep.subr.mxu0 0.0
  %4581 = vmatpush1.msra.mxu0 0.0
  %4582 = vmatprep.subr.mxu0 0.0
  %4583 = vmatpush1.msra.mxu0 0.0
  %4584 = vmatprep.subr.mxu0 0.0
  %4585 = vmatpush1.msra.mxu0 0.0
  %4586 = vmatprep.subr.mxu0 0.0
  %4587 = vmatpush1.msra.mxu0 0.0
  %4588 = vmatprep.subr.mxu0 0.0
  %4589 = vmatpush1.msra.mxu0 0.0
  %4590 = vmatprep.subr.mxu0 0.0
  %4591 = vmatpush1.msra.mxu0 0.0
  %4592 = vmatprep.subr.mxu0 0.0
  %4593 = vmatpush1.msra.mxu0 0.0
  %4594 = vmatprep.subr.mxu0 0.0
  %4595 = vmatpush1.msra.mxu0 0.0
  %4596 = vmatprep.subr.mxu0 0.0
  %4597 = vmatpush1.msra.mxu0 0.0
  %4598 = vmatprep.subr.mxu0 0.0
  %4599 = vmatpush1.msra.mxu0 0.0
  %4600 = vmatprep.subr.mxu0 0.0
  %4601 = vmatpush1.msra.mxu0 0.0
  %4602 = vmatprep.subr.mxu0 0.0
  %4603 = vmatpush1.msra.mxu0 0.0
  %4604 = vmatprep.subr.mxu0 0.0
  %4605 = vmatpush1.msra.mxu0 0.0
  %4606 = vmatprep.subr.mxu0 0.0
  %4607 = vmatpush1.msra.mxu0 0.0
  %4608 = vmatprep.subr.mxu0 0.0
  %4609 = vmatpush1.msra.mxu0 0.0
  %4610 = vmatprep.subr.mxu0 0.0
  %4611 = vmatpush1.msra.mxu0 0.0
  %4612 = vmatprep.subr.mxu0 0.0
  %4613 = vmatpush1.msra.mxu0 0.0
  %4614 = vmatprep.subr.mxu0 0.0
  %4615 = vmatpush1.msra.mxu0 0.0
  %4616 = vmatprep.subr.mxu0 0.0
  %4617 = vmatpush1.msra.mxu0 0.0
  %4618 = vmatprep.subr.mxu0 0.0
  %4619 = vmatpush1.msra.mxu0 0.0
  %4620 = vmatprep.subr.mxu0 0.0
  %4621 = vmatpush1.msra.mxu0 0.0
  %4622 = vmatprep.subr.mxu0 0.0
  %4623 = vmatpush1.msra.mxu0 0.0
  %4624 = vmatprep.subr.mxu0 0.0
  %4625 = vmatpush1.msra.mxu0 0.0
  %4626 = vmatprep.subr.mxu0 0.0
  %4627 = vmatpush1.msra.mxu0 0.0
  %4628 = vmatprep.mubr.f32.mxu0 0.0
  %4629 = vmatmul.mubr.f32.gmra.mrb[0].mxu0 %v4491
  %v4630 = vpop.f32.mrb[0].mxu0
  %v4631 = vadd.f32 0.0, %v4630
  %v4632 = vpop.f32.mrb[0].mxu0
  %4633 = vdwg.mxu0
  %v4634 = vadd.f32 %v3692, %v4560
  %v4635 = vxor.u32 %v4634, 2147483648
  %v4636 = vmul.f32 %v4635, 1.442695
  %v4637 = vpow.pop %v4636
  %v4638 = vadd.f32 %v4637, 1.0
  %v4639 = vrcp.pop %v4638
  %v4640 = vmul.f32 1.0, %v4639
  %v4641 = vadd.f32 %v3694, %v4562
  %v4642 = vxor.u32 %v4641, 2147483648
  %v4643 = vmul.f32 %v4642, 1.442695
  %v4644 = vpow.pop %v4643
  %v4645 = vadd.f32 %v4644, 1.0
  %v4646 = vrcp.pop %v4645
  %v4647 = vmul.f32 1.0, %v4646
  %v4648 = vadd.f32 %v4631, %v3558
  %v4649 = vmul.f32 %v4640, %v4648
  %v4650 = vadd.f32 %v3800, %v4649
  %v4651 = vtanh.pop %v4650
  %v4652 = vsub.f32 %v4489, %v4651
  %v4653 = vmul.f32 %v4647, %v4652
  %v4654 = vadd.f32 %v4653, %v4651
  %v4656 = vsel %vm319, %v4654, 0
  %4658 = vmatprep.subr.mxu0 %v3547
  %4659 = vmatpush1.msra.mxu0 %v3546
  %4660 = vmatprep.subr.mxu0 %v3550
  %4661 = vmatpush1.msra.mxu0 %v3549
  %4662 = vmatprep.subr.mxu0 0.0
  %4663 = vmatpush1.msra.mxu0 0.0
  %4664 = vmatprep.subr.mxu0 0.0
  %4665 = vmatpush1.msra.mxu0 0.0
  %4666 = vmatprep.subr.mxu0 0.0
  %4667 = vmatpush1.msra.mxu0 0.0
  %4668 = vmatprep.subr.mxu0 0.0
  %4669 = vmatpush1.msra.mxu0 0.0
  %4670 = vmatprep.subr.mxu0 0.0
  %4671 = vmatpush1.msra.mxu0 0.0
  %4672 = vmatprep.subr.mxu0 0.0
  %4673 = vmatpush1.msra.mxu0 0.0
  %4674 = vmatprep.subr.mxu0 0.0
  %4675 = vmatpush1.msra.mxu0 0.0
  %4676 = vmatprep.subr.mxu0 0.0
  %4677 = vmatpush1.msra.mxu0 0.0
  %4678 = vmatprep.subr.mxu0 0.0
  %4679 = vmatpush1.msra.mxu0 0.0
  %4680 = vmatprep.subr.mxu0 0.0
  %4681 = vmatpush1.msra.mxu0 0.0
  %4682 = vmatprep.subr.mxu0 0.0
  %4683 = vmatpush1.msra.mxu0 0.0
  %4684 = vmatprep.subr.mxu0 0.0
  %4685 = vmatpush1.msra.mxu0 0.0
  %4686 = vmatprep.subr.mxu0 0.0
  %4687 = vmatpush1.msra.mxu0 0.0
  %4688 = vmatprep.subr.mxu0 0.0
  %4689 = vmatpush1.msra.mxu0 0.0
  %4690 = vmatprep.subr.mxu0 0.0
  %4691 = vmatpush1.msra.mxu0 0.0
  %4692 = vmatprep.subr.mxu0 0.0
  %4693 = vmatpush1.msra.mxu0 0.0
  %4694 = vmatprep.subr.mxu0 0.0
  %4695 = vmatpush1.msra.mxu0 0.0
  %4696 = vmatprep.subr.mxu0 0.0
  %4697 = vmatpush1.msra.mxu0 0.0
  %4698 = vmatprep.subr.mxu0 0.0
  %4699 = vmatpush1.msra.mxu0 0.0
  %4700 = vmatprep.subr.mxu0 0.0
  %4701 = vmatpush1.msra.mxu0 0.0
  %4702 = vmatprep.subr.mxu0 0.0
  %4703 = vmatpush1.msra.mxu0 0.0
  %4704 = vmatprep.subr.mxu0 0.0
  %4705 = vmatpush1.msra.mxu0 0.0
  %4706 = vmatprep.subr.mxu0 0.0
  %4707 = vmatpush1.msra.mxu0 0.0
  %4708 = vmatprep.subr.mxu0 0.0
  %4709 = vmatpush1.msra.mxu0 0.0
  %4710 = vmatprep.subr.mxu0 0.0
  %4711 = vmatpush1.msra.mxu0 0.0
  %4712 = vmatprep.subr.mxu0 0.0
  %4713 = vmatpush1.msra.mxu0 0.0
  %4714 = vmatprep.subr.mxu0 0.0
  %4715 = vmatpush1.msra.mxu0 0.0
  %4716 = vmatprep.subr.mxu0 0.0
  %4717 = vmatpush1.msra.mxu0 0.0
  %4718 = vmatprep.subr.mxu0 0.0
  %4719 = vmatpush1.msra.mxu0 0.0
  %4720 = vmatprep.subr.mxu0 0.0
  %4721 = vmatpush1.msra.mxu0 0.0
  %4722 = vmatprep.mubr.f32.mxu0 0.0
  %4723 = vmatmul.mubr.f32.gmra.mrb[0].mxu0 %v4656
  %v4724 = vpop.f32.mrb[0].mxu0
  %v4725 = vadd.f32 0.0, %v4724
  %v4726 = vpop.f32.mrb[0].mxu0
  %v4727 = vadd.f32 0.0, %v4726
  %4728 = vdwg.mxu0
  %4729 = vmatprep.subr.mxu0 0.0
  %4730 = vmatpush1.msra.mxu0 %v3548
  %4731 = vmatprep.subr.mxu0 0.0
  %4732 = vmatpush1.msra.mxu0 %v3551
  %4733 = vmatprep.subr.mxu0 0.0
  %4734 = vmatpush1.msra.mxu0 0.0
  %4735 = vmatprep.subr.mxu0 0.0
  %4736 = vmatpush1.msra.mxu0 0.0
  %4737 = vmatprep.subr.mxu0 0.0
  %4738 = vmatpush1.msra.mxu0 0.0
  %4739 = vmatprep.subr.mxu0 0.0
  %4740 = vmatpush1.msra.mxu0 0.0
  %4741 = vmatprep.subr.mxu0 0.0
  %4742 = vmatpush1.msra.mxu0 0.0
  %4743 = vmatprep.subr.mxu0 0.0
  %4744 = vmatpush1.msra.mxu0 0.0
  %4745 = vmatprep.subr.mxu0 0.0
  %4746 = vmatpush1.msra.mxu0 0.0
  %4747 = vmatprep.subr.mxu0 0.0
  %4748 = vmatpush1.msra.mxu0 0.0
  %4749 = vmatprep.subr.mxu0 0.0
  %4750 = vmatpush1.msra.mxu0 0.0
  %4751 = vmatprep.subr.mxu0 0.0
  %4752 = vmatpush1.msra.mxu0 0.0
  %4753 = vmatprep.subr.mxu0 0.0
  %4754 = vmatpush1.msra.mxu0 0.0
  %4755 = vmatprep.subr.mxu0 0.0
  %4756 = vmatpush1.msra.mxu0 0.0
  %4757 = vmatprep.subr.mxu0 0.0
  %4758 = vmatpush1.msra.mxu0 0.0
  %4759 = vmatprep.subr.mxu0 0.0
  %4760 = vmatpush1.msra.mxu0 0.0
  %4761 = vmatprep.subr.mxu0 0.0
  %4762 = vmatpush1.msra.mxu0 0.0
  %4763 = vmatprep.subr.mxu0 0.0
  %4764 = vmatpush1.msra.mxu0 0.0
  %4765 = vmatprep.subr.mxu0 0.0
  %4766 = vmatpush1.msra.mxu0 0.0
  %4767 = vmatprep.subr.mxu0 0.0
  %4768 = vmatpush1.msra.mxu0 0.0
  %4769 = vmatprep.subr.mxu0 0.0
  %4770 = vmatpush1.msra.mxu0 0.0
  %4771 = vmatprep.subr.mxu0 0.0
  %4772 = vmatpush1.msra.mxu0 0.0
  %4773 = vmatprep.subr.mxu0 0.0
  %4774 = vmatpush1.msra.mxu0 0.0
  %4775 = vmatprep.subr.mxu0 0.0
  %4776 = vmatpush1.msra.mxu0 0.0
  %4777 = vmatprep.subr.mxu0 0.0
  %4778 = vmatpush1.msra.mxu0 0.0
  %4779 = vmatprep.subr.mxu0 0.0
  %4780 = vmatpush1.msra.mxu0 0.0
  %4781 = vmatprep.subr.mxu0 0.0
  %4782 = vmatpush1.msra.mxu0 0.0
  %4783 = vmatprep.subr.mxu0 0.0
  %4784 = vmatpush1.msra.mxu0 0.0
  %4785 = vmatprep.subr.mxu0 0.0
  %4786 = vmatpush1.msra.mxu0 0.0
  %4787 = vmatprep.subr.mxu0 0.0
  %4788 = vmatpush1.msra.mxu0 0.0
  %4789 = vmatprep.subr.mxu0 0.0
  %4790 = vmatpush1.msra.mxu0 0.0
  %4791 = vmatprep.subr.mxu0 0.0
  %4792 = vmatpush1.msra.mxu0 0.0
  %4793 = vmatprep.mubr.f32.mxu0 0.0
  %4794 = vmatmul.mubr.f32.gmra.mrb[0].mxu0 %v4656
  %v4795 = vpop.f32.mrb[0].mxu0
  %v4796 = vadd.f32 0.0, %v4795
  %v4797 = vpop.f32.mrb[0].mxu0
  %4798 = vdwg.mxu0
  %v4799 = vadd.f32 %v3698, %v4725
  %v4800 = vxor.u32 %v4799, 2147483648
  %v4801 = vmul.f32 %v4800, 1.442695
  %v4802 = vpow.pop %v4801
  %v4803 = vadd.f32 %v4802, 1.0
  %v4804 = vrcp.pop %v4803
  %v4805 = vmul.f32 1.0, %v4804
  %v4806 = vadd.f32 %v3700, %v4727
  %v4807 = vxor.u32 %v4806, 2147483648
  %v4808 = vmul.f32 %v4807, 1.442695
  %v4809 = vpow.pop %v4808
  %v4810 = vadd.f32 %v4809, 1.0
  %v4811 = vrcp.pop %v4810
  %v4812 = vmul.f32 1.0, %v4811
  %v4813 = vadd.f32 %v4796, %v3558
  %v4814 = vmul.f32 %v4805, %v4813
  %v4815 = vadd.f32 %v3805, %v4814
  %v4816 = vtanh.pop %v4815
  %v4817 = vsub.f32 %v4654, %v4816
  %v4818 = vmul.f32 %v4812, %v4817
  %v4819 = vadd.f32 %v4818, %v4816
  %v4821 = vsel %vm319, %v4819, 0
  %4823 = vmatprep.subr.mxu0 %v3547
  %4824 = vmatpush1.msra.mxu0 %v3546
  %4825 = vmatprep.subr.mxu0 %v3550
  %4826 = vmatpush1.msra.mxu0 %v3549
  %4827 = vmatprep.subr.mxu0 0.0
  %4828 = vmatpush1.msra.mxu0 0.0
  %4829 = vmatprep.subr.mxu0 0.0
  %4830 = vmatpush1.msra.mxu0 0.0
  %4831 = vmatprep.subr.mxu0 0.0
  %4832 = vmatpush1.msra.mxu0 0.0
  %4833 = vmatprep.subr.mxu0 0.0
  %4834 = vmatpush1.msra.mxu0 0.0
  %4835 = vmatprep.subr.mxu0 0.0
  %4836 = vmatpush1.msra.mxu0 0.0
  %4837 = vmatprep.subr.mxu0 0.0
  %4838 = vmatpush1.msra.mxu0 0.0
  %4839 = vmatprep.subr.mxu0 0.0
  %4840 = vmatpush1.msra.mxu0 0.0
  %4841 = vmatprep.subr.mxu0 0.0
  %4842 = vmatpush1.msra.mxu0 0.0
  %4843 = vmatprep.subr.mxu0 0.0
  %4844 = vmatpush1.msra.mxu0 0.0
  %4845 = vmatprep.subr.mxu0 0.0
  %4846 = vmatpush1.msra.mxu0 0.0
  %4847 = vmatprep.subr.mxu0 0.0
  %4848 = vmatpush1.msra.mxu0 0.0
  %4849 = vmatprep.subr.mxu0 0.0
  %4850 = vmatpush1.msra.mxu0 0.0
  %4851 = vmatprep.subr.mxu0 0.0
  %4852 = vmatpush1.msra.mxu0 0.0
  %4853 = vmatprep.subr.mxu0 0.0
  %4854 = vmatpush1.msra.mxu0 0.0
  %4855 = vmatprep.subr.mxu0 0.0
  %4856 = vmatpush1.msra.mxu0 0.0
  %4857 = vmatprep.subr.mxu0 0.0
  %4858 = vmatpush1.msra.mxu0 0.0
  %4859 = vmatprep.subr.mxu0 0.0
  %4860 = vmatpush1.msra.mxu0 0.0
  %4861 = vmatprep.subr.mxu0 0.0
  %4862 = vmatpush1.msra.mxu0 0.0
  %4863 = vmatprep.subr.mxu0 0.0
  %4864 = vmatpush1.msra.mxu0 0.0
  %4865 = vmatprep.subr.mxu0 0.0
  %4866 = vmatpush1.msra.mxu0 0.0
  %4867 = vmatprep.subr.mxu0 0.0
  %4868 = vmatpush1.msra.mxu0 0.0
  %4869 = vmatprep.subr.mxu0 0.0
  %4870 = vmatpush1.msra.mxu0 0.0
  %4871 = vmatprep.subr.mxu0 0.0
  %4872 = vmatpush1.msra.mxu0 0.0
  %4873 = vmatprep.subr.mxu0 0.0
  %4874 = vmatpush1.msra.mxu0 0.0
  %4875 = vmatprep.subr.mxu0 0.0
  %4876 = vmatpush1.msra.mxu0 0.0
  %4877 = vmatprep.subr.mxu0 0.0
  %4878 = vmatpush1.msra.mxu0 0.0
  %4879 = vmatprep.subr.mxu0 0.0
  %4880 = vmatpush1.msra.mxu0 0.0
  %4881 = vmatprep.subr.mxu0 0.0
  %4882 = vmatpush1.msra.mxu0 0.0
  %4883 = vmatprep.subr.mxu0 0.0
  %4884 = vmatpush1.msra.mxu0 0.0
  %4885 = vmatprep.subr.mxu0 0.0
  %4886 = vmatpush1.msra.mxu0 0.0
  %4887 = vmatprep.mubr.f32.mxu0 0.0
  %4888 = vmatmul.mubr.f32.gmra.mrb[0].mxu0 %v4821
  %v4889 = vpop.f32.mrb[0].mxu0
  %v4890 = vadd.f32 0.0, %v4889
  %v4891 = vpop.f32.mrb[0].mxu0
  %v4892 = vadd.f32 0.0, %v4891
  %4893 = vdwg.mxu0
  %4894 = vmatprep.subr.mxu0 0.0
  %4895 = vmatpush1.msra.mxu0 %v3548
  %4896 = vmatprep.subr.mxu0 0.0
  %4897 = vmatpush1.msra.mxu0 %v3551
  %4898 = vmatprep.subr.mxu0 0.0
  %4899 = vmatpush1.msra.mxu0 0.0
  %4900 = vmatprep.subr.mxu0 0.0
  %4901 = vmatpush1.msra.mxu0 0.0
  %4902 = vmatprep.subr.mxu0 0.0
  %4903 = vmatpush1.msra.mxu0 0.0
  %4904 = vmatprep.subr.mxu0 0.0
  %4905 = vmatpush1.msra.mxu0 0.0
  %4906 = vmatprep.subr.mxu0 0.0
  %4907 = vmatpush1.msra.mxu0 0.0
  %4908 = vmatprep.subr.mxu0 0.0
  %4909 = vmatpush1.msra.mxu0 0.0
  %4910 = vmatprep.subr.mxu0 0.0
  %4911 = vmatpush1.msra.mxu0 0.0
  %4912 = vmatprep.subr.mxu0 0.0
  %4913 = vmatpush1.msra.mxu0 0.0
  %4914 = vmatprep.subr.mxu0 0.0
  %4915 = vmatpush1.msra.mxu0 0.0
  %4916 = vmatprep.subr.mxu0 0.0
  %4917 = vmatpush1.msra.mxu0 0.0
  %4918 = vmatprep.subr.mxu0 0.0
  %4919 = vmatpush1.msra.mxu0 0.0
  %4920 = vmatprep.subr.mxu0 0.0
  %4921 = vmatpush1.msra.mxu0 0.0
  %4922 = vmatprep.subr.mxu0 0.0
  %4923 = vmatpush1.msra.mxu0 0.0
  %4924 = vmatprep.subr.mxu0 0.0
  %4925 = vmatpush1.msra.mxu0 0.0
  %4926 = vmatprep.subr.mxu0 0.0
  %4927 = vmatpush1.msra.mxu0 0.0
  %4928 = vmatprep.subr.mxu0 0.0
  %4929 = vmatpush1.msra.mxu0 0.0
  %4930 = vmatprep.subr.mxu0 0.0
  %4931 = vmatpush1.msra.mxu0 0.0
  %4932 = vmatprep.subr.mxu0 0.0
  %4933 = vmatpush1.msra.mxu0 0.0
  %4934 = vmatprep.subr.mxu0 0.0
  %4935 = vmatpush1.msra.mxu0 0.0
  %4936 = vmatprep.subr.mxu0 0.0
  %4937 = vmatpush1.msra.mxu0 0.0
  %4938 = vmatprep.subr.mxu0 0.0
  %4939 = vmatpush1.msra.mxu0 0.0
  %4940 = vmatprep.subr.mxu0 0.0
  %4941 = vmatpush1.msra.mxu0 0.0
  %4942 = vmatprep.subr.mxu0 0.0
  %4943 = vmatpush1.msra.mxu0 0.0
  %4944 = vmatprep.subr.mxu0 0.0
  %4945 = vmatpush1.msra.mxu0 0.0
  %4946 = vmatprep.subr.mxu0 0.0
  %4947 = vmatpush1.msra.mxu0 0.0
  %4948 = vmatprep.subr.mxu0 0.0
  %4949 = vmatpush1.msra.mxu0 0.0
  %4950 = vmatprep.subr.mxu0 0.0
  %4951 = vmatpush1.msra.mxu0 0.0
  %4952 = vmatprep.subr.mxu0 0.0
  %4953 = vmatpush1.msra.mxu0 0.0
  %4954 = vmatprep.subr.mxu0 0.0
  %4955 = vmatpush1.msra.mxu0 0.0
  %4956 = vmatprep.subr.mxu0 0.0
  %4957 = vmatpush1.msra.mxu0 0.0
  %4958 = vmatprep.mubr.f32.mxu0 0.0
  %4959 = vmatmul.mubr.f32.gmra.mrb[0].mxu0 %v4821
  %v4960 = vpop.f32.mrb[0].mxu0
  %v4961 = vadd.f32 0.0, %v4960
  %v4962 = vpop.f32.mrb[0].mxu0
  %4963 = vdwg.mxu0
  %v4964 = vadd.f32 %v3704, %v4890
  %v4965 = vxor.u32 %v4964, 2147483648
  %v4966 = vmul.f32 %v4965, 1.442695
  %v4967 = vpow.pop %v4966
  %v4968 = vadd.f32 %v4967, 1.0
  %v4969 = vrcp.pop %v4968
  %v4970 = vmul.f32 1.0, %v4969
  %v4971 = vadd.f32 %v3706, %v4892
  %v4972 = vxor.u32 %v4971, 2147483648
  %v4973 = vmul.f32 %v4972, 1.442695
  %v4974 = vpow.pop %v4973
  %v4975 = vadd.f32 %v4974, 1.0
  %v4976 = vrcp.pop %v4975
  %v4977 = vmul.f32 1.0, %v4976
  %v4978 = vadd.f32 %v4961, %v3558
  %v4979 = vmul.f32 %v4970, %v4978
  %v4980 = vadd.f32 %v3810, %v4979
  %v4981 = vtanh.pop %v4980
  %v4982 = vsub.f32 %v4819, %v4981
  %v4983 = vmul.f32 %v4977, %v4982
  %v4984 = vadd.f32 %v4983, %v4981
  %v4985 = vlaneseq
  %v4986 = vshrl.u32 %v4985, 7
  %v4987 = vsub.s32 3, %v4986
  %v4988 = vrot.slane %v2893, %v4987
  %v4990 = vsel %vm319, %v4984, 0
  %4992 = vmatprep.subr.mxu0 0.0
  %4993 = vmatpush1.msra.mxu0 %v2903
  %4994 = vmatprep.subr.mxu0 0.0
  %4995 = vmatpush1.msra.mxu0 %v2904
  %4996 = vmatprep.subr.mxu0 0.0
  %4997 = vmatpush1.msra.mxu0 0.0
  %4998 = vmatprep.subr.mxu0 0.0
  %4999 = vmatpush1.msra.mxu0 0.0
  %5000 = vmatprep.subr.mxu0 0.0
  %5001 = vmatpush1.msra.mxu0 0.0
  %5002 = vmatprep.subr.mxu0 0.0
  %5003 = vmatpush1.msra.mxu0 0.0
  %5004 = vmatprep.subr.mxu0 0.0
  %5005 = vmatpush1.msra.mxu0 0.0
  %5006 = vmatprep.subr.mxu0 0.0
  %5007 = vmatpush1.msra.mxu0 0.0
  %5008 = vmatprep.subr.mxu0 0.0
  %5009 = vmatpush1.msra.mxu0 0.0
  %5010 = vmatprep.subr.mxu0 0.0
  %5011 = vmatpush1.msra.mxu0 0.0
  %5012 = vmatprep.subr.mxu0 0.0
  %5013 = vmatpush1.msra.mxu0 0.0
  %5014 = vmatprep.subr.mxu0 0.0
  %5015 = vmatpush1.msra.mxu0 0.0
  %5016 = vmatprep.subr.mxu0 0.0
  %5017 = vmatpush1.msra.mxu0 0.0
  %5018 = vmatprep.subr.mxu0 0.0
  %5019 = vmatpush1.msra.mxu0 0.0
  %5020 = vmatprep.subr.mxu0 0.0
  %5021 = vmatpush1.msra.mxu0 0.0
  %5022 = vmatprep.subr.mxu0 0.0
  %5023 = vmatpush1.msra.mxu0 0.0
  %5024 = vmatprep.subr.mxu0 0.0
  %5025 = vmatpush1.msra.mxu0 0.0
  %5026 = vmatprep.subr.mxu0 0.0
  %5027 = vmatpush1.msra.mxu0 0.0
  %5028 = vmatprep.subr.mxu0 0.0
  %5029 = vmatpush1.msra.mxu0 0.0
  %5030 = vmatprep.subr.mxu0 0.0
  %5031 = vmatpush1.msra.mxu0 0.0
  %5032 = vmatprep.subr.mxu0 0.0
  %5033 = vmatpush1.msra.mxu0 0.0
  %5034 = vmatprep.subr.mxu0 0.0
  %5035 = vmatpush1.msra.mxu0 0.0
  %5036 = vmatprep.subr.mxu0 0.0
  %5037 = vmatpush1.msra.mxu0 0.0
  %5038 = vmatprep.subr.mxu0 0.0
  %5039 = vmatpush1.msra.mxu0 0.0
  %5040 = vmatprep.subr.mxu0 0.0
  %5041 = vmatpush1.msra.mxu0 0.0
  %5042 = vmatprep.subr.mxu0 0.0
  %5043 = vmatpush1.msra.mxu0 0.0
  %5044 = vmatprep.subr.mxu0 0.0
  %5045 = vmatpush1.msra.mxu0 0.0
  %5046 = vmatprep.subr.mxu0 0.0
  %5047 = vmatpush1.msra.mxu0 0.0
  %5048 = vmatprep.subr.mxu0 0.0
  %5049 = vmatpush1.msra.mxu0 0.0
  %5050 = vmatprep.subr.mxu0 0.0
  %5051 = vmatpush1.msra.mxu0 0.0
  %5052 = vmatprep.subr.mxu0 0.0
  %5053 = vmatpush1.msra.mxu0 0.0
  %5054 = vmatprep.subr.mxu0 0.0
  %5055 = vmatpush1.msra.mxu0 0.0
  %5056 = vmatprep.mubr.f32.mxu0 0.0
  %5057 = vmatmul.mubr.f32.gmra.mrb[0].mxu0 %v3831
  %v5058 = vpop.f32.mrb[0].mxu0
  %v5059 = vadd.f32 %v4988, %v5058
  %v5060 = vpop.f32.mrb[0].mxu0
  %5061 = vmatprep.mubr.f32.mxu0 0.0
  %5062 = vmatmul.mubr.f32.gmra.mrb[0].mxu0 %v3996
  %v5063 = vpop.f32.mrb[0].mxu0
  %v5064 = vadd.f32 %v4988, %v5063
  %v5065 = vpop.f32.mrb[0].mxu0
  %5066 = vmatprep.mubr.f32.mxu0 0.0
  %5067 = vmatmul.mubr.f32.gmra.mrb[0].mxu0 %v4161
  %v5068 = vpop.f32.mrb[0].mxu0
  %v5069 = vadd.f32 %v4988, %v5068
  %v5070 = vpop.f32.mrb[0].mxu0
  %5071 = vmatprep.mubr.f32.mxu0 0.0
  %5072 = vmatmul.mubr.f32.gmra.mrb[0].mxu0 %v4326
  %v5073 = vpop.f32.mrb[0].mxu0
  %v5074 = vadd.f32 %v4988, %v5073
  %v5075 = vpop.f32.mrb[0].mxu0
  %5076 = vmatprep.mubr.f32.mxu0 0.0
  %5077 = vmatmul.mubr.f32.gmra.mrb[0].mxu0 %v4491
  %v5078 = vpop.f32.mrb[0].mxu0
  %v5079 = vadd.f32 %v4988, %v5078
  %v5080 = vpop.f32.mrb[0].mxu0
  %5081 = vmatprep.mubr.f32.mxu0 0.0
  %5082 = vmatmul.mubr.f32.gmra.mrb[0].mxu0 %v4656
  %v5083 = vpop.f32.mrb[0].mxu0
  %v5084 = vadd.f32 %v4988, %v5083
  %v5085 = vpop.f32.mrb[0].mxu0
  %5086 = vmatprep.mubr.f32.mxu0 0.0
  %5087 = vmatmul.mubr.f32.gmra.mrb[0].mxu0 %v4821
  %v5088 = vpop.f32.mrb[0].mxu0
  %v5089 = vadd.f32 %v4988, %v5088
  %v5090 = vpop.f32.mrb[0].mxu0
  %5091 = vmatprep.mubr.f32.mxu0 0.0
  %5092 = vmatmul.mubr.f32.gmra.mrb[0].mxu0 %v4990
  %v5093 = vpop.f32.mrb[0].mxu0
  %v5094 = vadd.f32 %v4988, %v5093
  %v5095 = vpop.f32.mrb[0].mxu0
  %5096 = vdwg.mxu0
  %v5097 = vmax.f32 %v5059, 0.0
  %v5098 = vmax.f32 %v5064, 0.0
  %v5099 = vmax.f32 %v5069, 0.0
  %v5100 = vmax.f32 %v5074, 0.0
  %v5101 = vmax.f32 %v5079, 0.0
  %v5102 = vmax.f32 %v5084, 0.0
  %v5103 = vmax.f32 %v5089, 0.0
  %v5104 = vmax.f32 %v5094, 0.0
  %v5105 = vlaneseq
  %v5106 = vshrl.u32 %v5105, 7
  %v5107 = vsub.s32 4, %v5106
  %v5108 = vrot.slane %v2893, %v5107
  %vm5109 = vcmask 261120
  %v5111 = vsel %vm5109, %v5097, 0
  %v5114 = vsel %vm5109, %v5098, 0
  %v5117 = vsel %vm5109, %v5099, 0
  %v5120 = vsel %vm5109, %v5100, 0
  %v5123 = vsel %vm5109, %v5101, 0
  %v5126 = vsel %vm5109, %v5102, 0
  %v5129 = vsel %vm5109, %v5103, 0
  %v5132 = vsel %vm5109, %v5104, 0
  %5134 = vmatprep.subr.mxu0 0.0
  %5135 = vmatpush1.msra.mxu0 %v2905
  %5136 = vmatprep.subr.mxu0 0.0
  %5137 = vmatpush1.msra.mxu0 %v2906
  %5138 = vmatprep.subr.mxu0 0.0
  %5139 = vmatpush1.msra.mxu0 %v2907
  %5140 = vmatprep.subr.mxu0 0.0
  %5141 = vmatpush1.msra.mxu0 %v2908
  %5142 = vmatprep.subr.mxu0 0.0
  %5143 = vmatpush1.msra.mxu0 0.0
  %5144 = vmatprep.subr.mxu0 0.0
  %5145 = vmatpush1.msra.mxu0 0.0
  %5146 = vmatprep.subr.mxu0 0.0
  %5147 = vmatpush1.msra.mxu0 0.0
  %5148 = vmatprep.subr.mxu0 0.0
  %5149 = vmatpush1.msra.mxu0 0.0
  %5150 = vmatprep.subr.mxu0 0.0
  %5151 = vmatpush1.msra.mxu0 0.0
  %5152 = vmatprep.subr.mxu0 0.0
  %5153 = vmatpush1.msra.mxu0 0.0
  %5154 = vmatprep.subr.mxu0 0.0
  %5155 = vmatpush1.msra.mxu0 0.0
  %5156 = vmatprep.subr.mxu0 0.0
  %5157 = vmatpush1.msra.mxu0 0.0
  %5158 = vmatprep.subr.mxu0 0.0
  %5159 = vmatpush1.msra.mxu0 0.0
  %5160 = vmatprep.subr.mxu0 0.0
  %5161 = vmatpush1.msra.mxu0 0.0
  %5162 = vmatprep.subr.mxu0 0.0
  %5163 = vmatpush1.msra.mxu0 0.0
  %5164 = vmatprep.subr.mxu0 0.0
  %5165 = vmatpush1.msra.mxu0 0.0
  %5166 = vmatprep.subr.mxu0 0.0
  %5167 = vmatpush1.msra.mxu0 0.0
  %5168 = vmatprep.subr.mxu0 0.0
  %5169 = vmatpush1.msra.mxu0 0.0
  %5170 = vmatprep.subr.mxu0 0.0
  %5171 = vmatpush1.msra.mxu0 0.0
  %5172 = vmatprep.subr.mxu0 0.0
  %5173 = vmatpush1.msra.mxu0 0.0
  %5174 = vmatprep.subr.mxu0 0.0
  %5175 = vmatpush1.msra.mxu0 0.0
  %5176 = vmatprep.subr.mxu0 0.0
  %5177 = vmatpush1.msra.mxu0 0.0
  %5178 = vmatprep.subr.mxu0 0.0
  %5179 = vmatpush1.msra.mxu0 0.0
  %5180 = vmatprep.subr.mxu0 0.0
  %5181 = vmatpush1.msra.mxu0 0.0
  %5182 = vmatprep.subr.mxu0 0.0
  %5183 = vmatpush1.msra.mxu0 0.0
  %5184 = vmatprep.subr.mxu0 0.0
  %5185 = vmatpush1.msra.mxu0 0.0
  %5186 = vmatprep.subr.mxu0 0.0
  %5187 = vmatpush1.msra.mxu0 0.0
  %5188 = vmatprep.subr.mxu0 0.0
  %5189 = vmatpush1.msra.mxu0 0.0
  %5190 = vmatprep.subr.mxu0 0.0
  %5191 = vmatpush1.msra.mxu0 0.0
  %5192 = vmatprep.subr.mxu0 0.0
  %5193 = vmatpush1.msra.mxu0 0.0
  %5194 = vmatprep.subr.mxu0 0.0
  %5195 = vmatpush1.msra.mxu0 0.0
  %5196 = vmatprep.subr.mxu0 0.0
  %5197 = vmatpush1.msra.mxu0 0.0
  %5198 = vmatprep.mubr.f32.mxu0 0.0
  %5199 = vmatmul.mubr.f32.gmra.mrb[0].mxu0 %v5111
  %v5200 = vpop.f32.mrb[0].mxu0
  %v5201 = vadd.f32 %v5108, %v5200
  %v5202 = vpop.f32.mrb[0].mxu0
  %5203 = vmatprep.mubr.f32.mxu0 0.0
  %5204 = vmatmul.mubr.f32.gmra.mrb[0].mxu0 %v5114
  %v5205 = vpop.f32.mrb[0].mxu0
  %v5206 = vadd.f32 %v5108, %v5205
  %v5207 = vpop.f32.mrb[0].mxu0
  %5208 = vmatprep.mubr.f32.mxu0 0.0
  %5209 = vmatmul.mubr.f32.gmra.mrb[0].mxu0 %v5117
  %v5210 = vpop.f32.mrb[0].mxu0
  %v5211 = vadd.f32 %v5108, %v5210
  %v5212 = vpop.f32.mrb[0].mxu0
  %5213 = vmatprep.mubr.f32.mxu0 0.0
  %5214 = vmatmul.mubr.f32.gmra.mrb[0].mxu0 %v5120
  %v5215 = vpop.f32.mrb[0].mxu0
  %v5216 = vadd.f32 %v5108, %v5215
  %v5217 = vpop.f32.mrb[0].mxu0
  %5218 = vmatprep.mubr.f32.mxu0 0.0
  %5219 = vmatmul.mubr.f32.gmra.mrb[0].mxu0 %v5123
  %v5220 = vpop.f32.mrb[0].mxu0
  %v5221 = vadd.f32 %v5108, %v5220
  %v5222 = vpop.f32.mrb[0].mxu0
  %5223 = vmatprep.mubr.f32.mxu0 0.0
  %5224 = vmatmul.mubr.f32.gmra.mrb[0].mxu0 %v5126
  %v5225 = vpop.f32.mrb[0].mxu0
  %v5226 = vadd.f32 %v5108, %v5225
  %v5227 = vpop.f32.mrb[0].mxu0
  %5228 = vmatprep.mubr.f32.mxu0 0.0
  %5229 = vmatmul.mubr.f32.gmra.mrb[0].mxu0 %v5129
  %v5230 = vpop.f32.mrb[0].mxu0
  %v5231 = vadd.f32 %v5108, %v5230
  %v5232 = vpop.f32.mrb[0].mxu0
  %5233 = vmatprep.mubr.f32.mxu0 0.0
  %5234 = vmatmul.mubr.f32.gmra.mrb[0].mxu0 %v5132
  %v5235 = vpop.f32.mrb[0].mxu0
  %v5236 = vadd.f32 %v5108, %v5235
  %v5237 = vpop.f32.mrb[0].mxu0
  %5238 = vdwg.mxu0
  %5247 = vrot.lane.b32.xlu0 %v3351, 8
  %v5248 = vpop.permute.xlu0 %5247
  %5249 = vrot.lane.b32.xlu0 %v3352, 8
  %v5250 = vpop.permute.xlu0 %5249
  %5251 = vrot.lane.b32.xlu0 %v3353, 8
  %v5252 = vpop.permute.xlu0 %5251
  %5253 = vrot.lane.b32.xlu0 %v3354, 8
  %v5254 = vpop.permute.xlu0 %5253
  %5255 = vrot.lane.b32.xlu0 %v3355, 8
  %v5256 = vpop.permute.xlu0 %5255
  %5257 = vrot.lane.b32.xlu0 %v3356, 8
  %v5258 = vpop.permute.xlu0 %5257
  %5259 = vrot.lane.b32.xlu0 %v3357, 8
  %v5260 = vpop.permute.xlu0 %5259
  %5261 = vrot.lane.b32.xlu0 %v3358, 8
  %v5262 = vpop.permute.xlu0 %5261
  %5279 = vrot.lane.b32.xlu0 %v5201, 16
  %v5280 = vpop.permute.xlu0 %5279
  %5281 = vrot.lane.b32.xlu0 %v5206, 16
  %v5282 = vpop.permute.xlu0 %5281
  %5283 = vrot.lane.b32.xlu0 %v5211, 16
  %v5284 = vpop.permute.xlu0 %5283
  %5285 = vrot.lane.b32.xlu0 %v5216, 16
  %v5286 = vpop.permute.xlu0 %5285
  %5287 = vrot.lane.b32.xlu0 %v5221, 16
  %v5288 = vpop.permute.xlu0 %5287
  %5289 = vrot.lane.b32.xlu0 %v5226, 16
  %v5290 = vpop.permute.xlu0 %5289
  %5291 = vrot.lane.b32.xlu0 %v5231, 16
  %v5292 = vpop.permute.xlu0 %5291
  %5293 = vrot.lane.b32.xlu0 %v5236, 16
  %v5294 = vpop.permute.xlu0 %5293
  %v5303 = vsel %vm59, %v3129, %v5248
  %v5304 = vsel %vm59, %v3130, %v5250
  %v5305 = vsel %vm59, %v3131, %v5252
  %v5306 = vsel %vm59, %v3132, %v5254
  %v5307 = vsel %vm59, %v3133, %v5256
  %v5308 = vsel %vm59, %v3134, %v5258
  %v5309 = vsel %vm59, %v3135, %v5260
  %v5310 = vsel %vm59, %v3136, %v5262
  %v5311 = vsel %vm319, %v5303, %v5280
  %v5312 = vsel %vm319, %v5304, %v5282
  %v5313 = vsel %vm319, %v5305, %v5284
  %v5314 = vsel %vm319, %v5306, %v5286
  %v5315 = vsel %vm319, %v5307, %v5288
  %v5316 = vsel %vm319, %v5308, %v5290
  %v5317 = vsel %vm319, %v5309, %v5292
  %v5318 = vsel %vm319, %v5310, %v5294
  %vm5319 = vcmask 195584
  %5320 = vst.msk [vmem:[%s6] sm:$0xff] %vm5319, %v5311
  %5321 = vst.msk [vmem:[%s6 + $0x8] sm:$0xff] %vm5319, %v5312
  %5322 = vst.msk [vmem:[%s6 + $0x10] sm:$0xff] %vm5319, %v5313
  %5323 = vst.msk [vmem:[%s6 + $0x18] sm:$0xff] %vm5319, %v5314
  %5324 = vst.msk [vmem:[%s6 + $0x20] sm:$0xff] %vm5319, %v5315
  %5325 = vst.msk [vmem:[%s6 + $0x28] sm:$0xff] %vm5319, %v5316
  %5326 = vst.msk [vmem:[%s6 + $0x30] sm:$0xff] %vm5319, %v5317
  %5327 = vst.msk [vmem:[%s6 + $0x38] sm:$0xff] %vm5319, %v5318
  // Predicated region
  $region26: #{vcd_forward.1} parent=0 // pred_check
    _
  $region27: #{vcd_forward.1} parent=0 // pred_check_branch
    %5329 = sbr.rel (0) target = $region29
  $region28: #{vcd_forward.1} parent=0 // pred_region
    _
  $region29: #{vcd_forward.1} parent=0 // pred_fallthru
    _
  // Predicated region
  $region30: #{vcd_forward.1} parent=0 // pred_check
    _
  $region31: #{vcd_forward.1} parent=0 // pred_check_branch
    %5331 = sbr.rel (0) target = $region33
  $region32: #{vcd_forward.1} parent=0 // pred_region
    _
  $region33: #{vcd_forward.1} parent=0 // pred_fallthru
    _

</llo_original>
